<compile_context>
chip_gen: v7x
topology: tpu7x:2x2x1
jax: 0.10.0
libtpu: 0.0.40
codegen_flags: <defaults>
</compile_context>

<pallas_src>
import jax
import jax.numpy as jnp
from jax.experimental import pallas as pl
from jax.experimental.pallas import tpu as pltpu

LEAKY_SLOPE = 0.01
BN_EPS = 1e-5
DT_ACT = jnp.bfloat16                 # inter-layer / matmul operand dtype

# conv geometries: (kh, kw, dilation, padding) -- all stride 1, 'same' output
GEOM_1x1 = (1, 1, 1, 0)
GEOM_3x3 = (3, 3, 1, 1)
GEOM_3x3_D2 = (3, 3, 2, 2)
GEOM_2x2_D2 = (2, 2, 2, 1)

TILE_ROWS_MAX = 64                    # production target for 64 x 2048 range images

_VMEM_LIMIT_CACHE = [None]


def _vmem_limit_bytes():
    """Scoped-VMEM request: 75% of physical VMEM, 48 MiB safe fallback."""
    if _VMEM_LIMIT_CACHE[0] is None:
        limit = 48 * 1024 * 1024
        try:
            cap = int(getattr(pltpu.get_tpu_info(), "vmem_capacity_bytes", 0) or 0)
            if cap > 0:
                limit = int(min(0.75 * cap, 100 * 1024 * 1024))
        except Exception:
            pass
        _VMEM_LIMIT_CACHE[0] = limit
    return _VMEM_LIMIT_CACHE[0]


def _lane_round(c):
    return ((int(c) + 127) // 128) * 128


def _est_vmem_bytes(th, H, W, cins, cout, pad, kh, kw, has_residual, has_extra, cout2):
    """Rough per-step VMEM footprint: double-buffered pipeline blocks + temps."""
    halo = 2 * pad
    tiled = th < H
    b = 0
    for c in cins:
        b += 2 * th * W * _lane_round(c) * 2                      # main window x2
        if tiled and pad:
            b += 2 * 2 * pad * W * _lane_round(c) * 2             # top+bottom halos x2
        b += (th + halo) * (W + 2 * pad) * _lane_round(c) * 2     # padded window temp
    b += 2 * th * W * _lane_round(cout) * 2                       # output x2
    if has_residual:
        b += 2 * th * W * _lane_round(cout) * 2
    if has_extra:
        b += 2 * th * W * _lane_round(cout2) * 2
    b += th * W * _lane_round(cout) * 4                           # f32 accumulator
    cin_tot = sum(cins)
    if kh * kw > 1:
        slab_k = kw * cin_tot if cin_tot >= 128 else kh * kw * cin_tot
        b += th * W * _lane_round(slab_k) * 2                     # largest live slab
        b += th * W * _lane_round(cin_tot) * 2                    # one tap-slice temp
    return b


def _pick_tile_h(H, est_fn, budget, target=TILE_ROWS_MAX):
    """Largest row tile (multiple of 8, or full H) that fits the VMEM budget."""
    cands = sorted({d for d in range(1, H + 1)
                    if H % d == 0 and (d % 8 == 0 or d == H)}, reverse=True)
    for d in cands:
        if d <= target and est_fn(d) <= budget:
            return d
    return cands[-1]


# ---------------------------------------------------------------------------
# Fused conv kernel:
#   conv (accumulating MXU matmuls) + bias + LeakyReLU + folded BN (+ residual)
#   [+ optional sibling 1x1 conv over the same inputs as a second output]
# ---------------------------------------------------------------------------
def _make_conv_kernel(kh, kw, dil, pad, tile_h, W, cins, cout,
                      halo_mode, has_residual, has_extra):
    n_ops = len(cins)
    per_op = 3 if halo_mode else 1          # (main [, top halo, bottom halo])
    n_x = n_ops * per_op
    cin_tot = sum(cins)
    wo = W
    m = tile_h * wo
    taps = [(i * dil, j * dil) for i in range(kh) for j in range(kw)]

    def kernel(*refs):
        idx = n_x
        w_ref = refs[idx]; idx += 1
        p_ref = refs[idx]; idx += 1
        if has_extra:
            w2_ref = refs[idx]; idx += 1
            p2_ref = refs[idx]; idx += 1
        if has_residual:
            r_ref = refs[idx]; idx += 1
        o_ref = refs[idx]; idx += 1
        o2_ref = refs[idx] if has_extra else None

        if halo_mode:
            t = pl.program_id(1)
            nt = pl.num_programs(1)

        # --- assemble per-operand 'same'-padded windows entirely in VMEM ----
        mains, wins = [], []
        for i in range(n_ops):
            c = cins[i]
            main = refs[per_op * i][0]                       # (tile_h, W, c)
            if halo_mode:
                top = refs[per_op * i + 1][0]                # (pad, W, c)
                bot = refs[per_op * i + 2][0]                # (pad, W, c)
                # zero-mask the out-of-range halos of the first / last row tile
                tmask = jnp.where(t == 0, 0.0, 1.0).astype(main.dtype)
                bmask = jnp.where(t == nt - 1, 0.0, 1.0).astype(main.dtype)
                win = jnp.concatenate([top * tmask, main, bot * bmask], axis=0)
            elif pad:
                zr = jnp.zeros((pad, W, c), main.dtype)
                win = jnp.concatenate([zr, main, zr], axis=0)
            else:
                win = main
            if pad:
                zc = jnp.zeros((win.shape[0], pad, c), win.dtype)
                win = jnp.concatenate([zc, win, zc], axis=1)
            mains.append(main)
            wins.append(win)

        # --- conv as accumulating MXU matmuls (no full im2col slab) ----------
        acc = jnp.zeros((m, cout), jnp.float32)
        if kh * kw == 1:
            # 1x1 conv: one matmul per operand, no concat at all.
            coff = 0
            for win, c in zip(wins, cins):
                acc = acc + jnp.dot(win.reshape(m, c), w_ref[pl.ds(coff, c), :],
                                    preferred_element_type=jnp.float32)
                coff += c
        elif cin_tot >= 128:
            # wide channels: one accumulating matmul per row tap, K = kw*cin_tot
            kslc = kw * cin_tot
            for ki in range(kh):
                di = ki * dil
                cols = []
                for kj in range(kw):
                    dj = kj * dil
                    for win, c in zip(wins, cins):
                        cols.append(win[di:di + tile_h, dj:dj + wo, :].reshape(m, c))
                xm = cols[0] if len(cols) == 1 else jnp.concatenate(cols, axis=-1)
                acc = acc + jnp.dot(xm, w_ref[pl.ds(ki * kslc, kslc), :],
                                    preferred_element_type=jnp.float32)
        else:
            # narrow channels (HBM-bound anyway): single matmul, K = taps*cin_tot
            cols = []
            for (di, dj) in taps:
                for win, c in zip(wins, cins):
                    cols.append(win[di:di + tile_h, dj:dj + wo, :].reshape(m, c))
            xm = cols[0] if len(cols) == 1 else jnp.concatenate(cols, axis=-1)
            acc = jnp.dot(xm, w_ref[...], preferred_element_type=jnp.float32)

        # --- fused epilogue: bias + LeakyReLU + folded BN (+ residual) -------
        pv = p_ref[...]                                   # (3, cout) f32
        y = acc + pv[0:1]                                 # conv bias
        y = jnp.maximum(y, LEAKY_SLOPE * y)               # LeakyReLU (0<slope<1)
        y = y * pv[1:2] + pv[2:3]                         # folded BatchNorm (eval)
        y = y.reshape(tile_h, wo, cout)
        if has_residual:
            y = y + r_ref[0].astype(jnp.float32)          # fused residual add
        o_ref[0] = y.astype(o_ref.dtype)

        # --- optional fused sibling 1x1 conv (shortcut branch of ResBlock) ---
        if has_extra:
            cout2 = o2_ref.shape[-1]
            acc2 = jnp.zeros((m, cout2), jnp.float32)
            coff = 0
            for mn, c in zip(mains, cins):
                acc2 = acc2 + jnp.dot(mn.reshape(m, c), w2_ref[pl.ds(coff, c), :],
                                      preferred_element_type=jnp.float32)
                coff += c
            pv2 = p2_ref[...]
            y2 = acc2 + pv2[0:1]
            y2 = jnp.maximum(y2, LEAKY_SLOPE * y2)
            y2 = y2 * pv2[1:2] + pv2[2:3]
            o2_ref[0] = y2.reshape(tile_h, wo, cout2).astype(o2_ref.dtype)

    return kernel


def fused_conv(xs, wt, p3, geom, residual=None, extra_1x1=None, tile_h=None):
    """Conv2d (stride 1, 'same') over the channel-concat of `xs`, fused with
    bias + LeakyReLU + BatchNorm affine (+ optional residual add).  Optionally
    also emits a fused 1x1 conv over the same inputs as a second output
    (`extra_1x1 = {"wt": (cin_tot, cout2) bf16, "p3": (3, cout2) f32}`).

    xs:   NHWC array or list of NHWC arrays (same N, H, W).
    wt:   (kh*kw*sum(Cin), Cout) bf16, rows ordered (kh, kw, concat-Cin).
    p3:   (3, Cout) f32 rows = [bias, bn_scale, bn_shift].
    """
    if not isinstance(xs, (list, tuple)):
        xs = [xs]
    kh, kw, dil, pad = geom
    N, H, W = (int(s) for s in xs[0].shape[:3])
    cins = [int(x.shape[-1]) for x in xs]
    cin_tot = sum(cins)
    K, cout = int(wt.shape[0]), int(wt.shape[1])
    assert K == kh * kw * cin_tot
    assert dil * (kh - 1) == 2 * pad and dil * (kw - 1) == 2 * pad  # 'same', stride 1

    has_residual = residual is not None
    has_extra = extra_1x1 is not None
    cout2 = int(extra_1x1["wt"].shape[1]) if has_extra else 0

    if tile_h is None:
        budget = int(0.6 * _vmem_limit_bytes())
        tile_h = _pick_tile_h(
            H, lambda th: _est_vmem_bytes(th, H, W, cins, cout, pad, kh, kw,
                                          has_residual, has_extra, cout2),
            budget)
    assert H % tile_h == 0
    tiled = tile_h < H
    halo_mode = tiled and pad > 0
    if halo_mode:
        assert tile_h % pad == 0
    grid = (N, H // tile_h)

    inputs, in_specs = [], []
    for x, c in zip(xs, cins):
        xa = x.astype(DT_ACT)
        inputs.append(xa)
        in_specs.append(pl.BlockSpec((1, tile_h, W, c), lambda n, t: (n, t, 0, 0)))
        if halo_mode:
            mult = tile_h // pad
            last = H // pad - 1
            # top halo: last `pad` rows of the previous tile (zero-masked at t==0)
            inputs.append(xa)
            in_specs.append(pl.BlockSpec(
                (1, pad, W, c),
                lambda n, t, m=mult: (n, jnp.maximum(t * m - 1, 0), 0, 0)))
            # bottom halo: first `pad` rows of the next tile (zero-masked at t==HT-1)
            inputs.append(xa)
            in_specs.append(pl.BlockSpec(
                (1, pad, W, c),
                lambda n, t, m=mult, lb=last: (n, jnp.minimum((t + 1) * m, lb), 0, 0)))

    inputs.append(wt.astype(DT_ACT))
    in_specs.append(pl.BlockSpec((K, cout), lambda n, t: (0, 0)))
    inputs.append(p3.astype(jnp.float32))
    in_specs.append(pl.BlockSpec((3, cout), lambda n, t: (0, 0)))
    if has_extra:
        inputs.append(extra_1x1["wt"].astype(DT_ACT))
        in_specs.append(pl.BlockSpec((cin_tot, cout2), lambda n, t: (0, 0)))
        inputs.append(extra_1x1["p3"].astype(jnp.float32))
        in_specs.append(pl.BlockSpec((3, cout2), lambda n, t: (0, 0)))
    if has_residual:
        inputs.append(residual.astype(DT_ACT))
        in_specs.append(pl.BlockSpec((1, tile_h, W, cout), lambda n, t: (n, t, 0, 0)))

    out_shape = [jax.ShapeDtypeStruct((N, H, W, cout), DT_ACT)]
    out_specs = [pl.BlockSpec((1, tile_h, W, cout), lambda n, t: (n, t, 0, 0))]
    if has_extra:
        out_shape.append(jax.ShapeDtypeStruct((N, H, W, cout2), DT_ACT))
        out_specs.append(pl.BlockSpec((1, tile_h, W, cout2), lambda n, t: (n, t, 0, 0)))

    kernel = _make_conv_kernel(kh, kw, dil, pad, tile_h, W, cins, cout,
                               halo_mode, has_residual, has_extra)
    fn = pl.pallas_call(
        kernel,
        out_shape=tuple(out_shape) if has_extra else out_shape[0],
        grid=grid,
        in_specs=in_specs,
        out_specs=tuple(out_specs) if has_extra else out_specs[0],
        compiler_params=pltpu.CompilerParams(
            dimension_semantics=("parallel", "parallel"),
            vmem_limit_bytes=_vmem_limit_bytes()),
    )
    return fn(*inputs)


def conv_bn(xs, f, geom, residual=None, extra_1x1=None, tile_h=None):
    return fused_conv(xs, f["wt"], f["p3"], geom, residual=residual,
                      extra_1x1=extra_1x1, tile_h=tile_h)


# ---------------------------------------------------------------------------
# Plain-JAX glue (pooling / pixel shuffle / layout)
# ---------------------------------------------------------------------------
def avg_pool_3x3_s2(x):
    # AvgPool2d(kernel=3, stride=2, padding=1, count_include_pad=True), NHWC
    s = jax.lax.reduce_window(
        x.astype(jnp.float32), 0.0, jax.lax.add,
        window_dimensions=(1, 3, 3, 1),
        window_strides=(1, 2, 2, 1),
        padding=((0, 0), (1, 1), (1, 1), (0, 0)))
    return (s / 9.0).astype(x.dtype)


def pixel_shuffle_nhwc(x, r=2):
    # matches torch.nn.PixelShuffle channel ordering: cin = c*r*r + i*r + j
    N, H, W, C = x.shape
    c = C // (r * r)
    x = x.reshape(N, H, W, c, r, r)
    x = jnp.transpose(x, (0, 1, 4, 2, 5, 3))
    return x.reshape(N, H * r, W * r, c)


# ---------------------------------------------------------------------------
# Blocks (eval semantics: Dropout2d = identity)
# ---------------------------------------------------------------------------
def res_context_block(p, x):
    shortcut = conv_bn(x, p["conv1"], GEOM_1x1)                        # act only
    resA1 = conv_bn(shortcut, p["conv2"], GEOM_3x3)
    return conv_bn(resA1, p["conv3"], GEOM_3x3_D2, residual=shortcut)  # + shortcut fused


def res_block(p, x, pooling=True):
    # conv2 (3x3 + bn1) and the 1x1 shortcut conv read the same x -> one kernel
    resA1, shortcut = conv_bn(x, p["conv2"], GEOM_3x3, extra_1x1=p["conv1"])
    resA2 = conv_bn(resA1, p["conv3"], GEOM_3x3_D2)
    resA3 = conv_bn(resA2, p["conv4"], GEOM_2x2_D2)
    # concat + conv5 + act + bn4 + residual add, all fused (no HBM concat)
    resA = conv_bn([resA1, resA2, resA3], p["conv5"], GEOM_1x1, residual=shortcut)
    if pooling:
        return avg_pool_3x3_s2(resA), resA
    return resA


def up_block(p, x, skip):
    upA = pixel_shuffle_nhwc(x, 2)
    # concat(upA, skip) fused into conv1 (no HBM concat)
    upE1 = conv_bn([upA, skip], p["conv1"], GEOM_3x3)
    upE2 = conv_bn(upE1, p["conv2"], GEOM_3x3_D2)
    upE3 = conv_bn(upE2, p["conv3"], GEOM_2x2_D2)
    return conv_bn([upE1, upE2, upE3], p["conv4"], GEOM_1x1)


# ---------------------------------------------------------------------------
# Deterministic raw parameter initialization (synthetic, PyTorch layout)
# ---------------------------------------------------------------------------
def _conv_p(key, cin, cout, kh, kw):
    k1, k2 = jax.random.split(key)
    fan = cin * kh * kw
    w = jax.random.normal(k1, (cout, cin, kh, kw), jnp.float32) / (fan ** 0.5)
    b = 0.01 * jax.random.normal(k2, (cout,), jnp.float32)
    return {"w": w, "b": b}


def _bn_p(key, c):
    k1, k2, k3, k4 = jax.random.split(key, 4)
    return {
        "gamma": 1.0 + 0.1 * jax.random.normal(k1, (c,), jnp.float32),
        "beta": 0.1 * jax.random.normal(k2, (c,), jnp.float32),
        "mean": 0.1 * jax.random.normal(k3, (c,), jnp.float32),
        "var": 1.0 + 0.1 * jax.random.uniform(k4, (c,), jnp.float32),
    }


def init_res_context(key, cin, cout):
    ks = jax.random.split(key, 5)
    return {"conv1": _conv_p(ks[0], cin, cout, 1, 1),
            "conv2": _conv_p(ks[1], cout, cout, 3, 3), "bn1": _bn_p(ks[2], cout),
            "conv3": _conv_p(ks[3], cout, cout, 3, 3), "bn2": _bn_p(ks[4], cout)}


def init_res_block(key, cin, cout):
    ks = jax.random.split(key, 9)
    return {"conv1": _conv_p(ks[0], cin, cout, 1, 1),
            "conv2": _conv_p(ks[1], cin, cout, 3, 3), "bn1": _bn_p(ks[2], cout),
            "conv3": _conv_p(ks[3], cout, cout, 3, 3), "bn2": _bn_p(ks[4], cout),
            "conv4": _conv_p(ks[5], cout, cout, 2, 2), "bn3": _bn_p(ks[6], cout),
            "conv5": _conv_p(ks[7], cout * 3, cout, 1, 1), "bn4": _bn_p(ks[8], cout)}


def init_up_block(key, cin, cout, skip):
    ks = jax.random.split(key, 8)
    return {"conv1": _conv_p(ks[0], cin // 4 + skip, cout, 3, 3), "bn1": _bn_p(ks[1], cout),
            "conv2": _conv_p(ks[2], cout, cout, 3, 3), "bn2": _bn_p(ks[3], cout),
            "conv3": _conv_p(ks[4], cout, cout, 2, 2), "bn3": _bn_p(ks[5], cout),
            "conv4": _conv_p(ks[6], cout * 3, cout, 1, 1), "bn4": _bn_p(ks[7], cout)}


def init_backbone(key, input_channels, cs):
    ks = jax.random.split(key, 12)
    return {
        "downCntx": init_res_context(ks[0], input_channels, cs[0]),
        "downCntx2": init_res_context(ks[1], cs[0], cs[0]),
        "downCntx3": init_res_context(ks[2], cs[0], cs[0]),
        "resBlock1": init_res_block(ks[3], cs[0], cs[1]),
        "resBlock2": init_res_block(ks[4], cs[1], cs[2]),
        "resBlock3": init_res_block(ks[5], cs[2], cs[3]),
        "resBlock4": init_res_block(ks[6], cs[3], cs[4]),
        "resBlock5": init_res_block(ks[7], cs[4], cs[4]),
        "upBlock1": init_up_block(ks[8], cs[4], cs[2], cs[4]),
        "upBlock2": init_up_block(ks[9], cs[2], cs[2], cs[3]),
        "upBlock3": init_up_block(ks[10], cs[2], cs[1], cs[2]),
        "upBlock4": init_up_block(ks[11], cs[1], cs[0], cs[1]),
    }


# ---------------------------------------------------------------------------
# One-time parameter folding (weight repack to (K, Cout) bf16 + BN -> affine)
# ---------------------------------------------------------------------------
def fold_conv_bn(conv_p, bn_p=None):
    w = conv_p["w"]
    cout, cin, kh, kw = (int(s) for s in w.shape)
    wt = jnp.transpose(w, (2, 3, 1, 0)).reshape(kh * kw * cin, cout).astype(DT_ACT)
    bias = conv_p["b"].astype(jnp.float32)
    if bn_p is None:
        scale = jnp.ones((cout,), jnp.float32)
        shift = jnp.zeros((cout,), jnp.float32)
    else:
        scale = bn_p["gamma"] * jax.lax.rsqrt(bn_p["var"] + BN_EPS)
        shift = bn_p["beta"] - bn_p["mean"] * scale
    return {"wt": wt, "p3": jnp.stack([bias, scale, shift], axis=0)}


def fold_res_context(p):
    return {"conv1": fold_conv_bn(p["conv1"]),
            "conv2": fold_conv_bn(p["conv2"], p["bn1"]),
            "conv3": fold_conv_bn(p["conv3"], p["bn2"])}


def fold_res_block(p):
    return {"conv1": fold_conv_bn(p["conv1"]),
            "conv2": fold_conv_bn(p["conv2"], p["bn1"]),
            "conv3": fold_conv_bn(p["conv3"], p["bn2"]),
            "conv4": fold_conv_bn(p["conv4"], p["bn3"]),
            "conv5": fold_conv_bn(p["conv5"], p["bn4"])}


def fold_up_block(p):
    return {"conv1": fold_conv_bn(p["conv1"], p["bn1"]),
            "conv2": fold_conv_bn(p["conv2"], p["bn2"]),
            "conv3": fold_conv_bn(p["conv3"], p["bn3"]),
            "conv4": fold_conv_bn(p["conv4"], p["bn4"])}


def fold_backbone(p):
    out = {}
    for k in ("downCntx", "downCntx2", "downCntx3"):
        out[k] = fold_res_context(p[k])
    for k in ("resBlock1", "resBlock2", "resBlock3", "resBlock4", "resBlock5"):
        out[k] = fold_res_block(p[k])
    for k in ("upBlock1", "upBlock2", "upBlock3", "upBlock4"):
        out[k] = fold_up_block(p[k])
    return out


# ---------------------------------------------------------------------------
# Full backbone forward (matches SalsaNextBackbone.forward -> 'spatial_features_2d')
# ---------------------------------------------------------------------------
def salsanext_backbone_forward(params, x_nchw):
    x = jnp.transpose(x_nchw, (0, 2, 3, 1)).astype(DT_ACT)    # NCHW -> NHWC
    d = res_context_block(params["downCntx"], x)
    d = res_context_block(params["downCntx2"], d)
    d = res_context_block(params["downCntx3"], d)
    down0c, down0b = res_block(params["resBlock1"], d, pooling=True)
    down1c, down1b = res_block(params["resBlock2"], down0c, pooling=True)
    down2c, down2b = res_block(params["resBlock3"], down1c, pooling=True)
    down3c, down3b = res_block(params["resBlock4"], down2c, pooling=True)
    down5c = res_block(params["resBlock5"], down3c, pooling=False)
    up4e = up_block(params["upBlock1"], down5c, down3b)
    up3e = up_block(params["upBlock2"], up4e, down2b)
    up2e = up_block(params["upBlock3"], up3e, down1b)
    up1e = up_block(params["upBlock4"], up2e, down0b)
    # NHWC -> NCHW ('spatial_features_2d'), back to f32 like the torch module
    return jnp.transpose(up1e, (0, 3, 1, 2)).astype(jnp.float32)


# ---------------------------------------------------------------------------
# Numerical self-check of the fused conv kernel vs lax reference
# ---------------------------------------------------------------------------
def _pack_w(w):
    cout, cin, kh, kw = (int(s) for s in w.shape)
    return jnp.transpose(w, (2, 3, 1, 0)).reshape(kh * kw * cin, cout).astype(DT_ACT)


def _ref_conv(xs, w, p3, geom, residual=None):
    if not isinstance(xs, (list, tuple)):
        xs = [xs]
    kh, kw, dil, pad = geom
    x = jnp.concatenate([a.astype(DT_ACT).astype(jnp.float32) for a in xs], axis=-1)
    wf = jnp.transpose(w, (2, 3, 1, 0)).astype(DT_ACT).astype(jnp.float32)  # HWIO
    y = jax.lax.conv_general_dilated(
        x, wf, window_strides=(1, 1), padding=((pad, pad), (pad, pad)),
        rhs_dilation=(dil, dil), dimension_numbers=("NHWC", "HWIO", "NHWC"),
        precision=jax.lax.Precision.HIGHEST)
    y = y + p3[0]
    y = jnp.where(y >= 0, y, LEAKY_SLOPE * y)
    y = y * p3[1] + p3[2]
    if residual is not None:
        y = y + residual.astype(DT_ACT).astype(jnp.float32)
    return y


def _close(a, b, tol=5e-2):
    return bool(jnp.allclose(a.astype(jnp.float32), b, atol=tol, rtol=tol))


def _self_check():
    ks = jax.random.split(jax.random.PRNGKey(42), 12)

    # (1) tiled halo path (forced tile_h=8), 2-operand concat, residual,
    #     fused sibling 1x1 output, 3x3 dilation-2 geometry.
    a = jax.random.normal(ks[0], (2, 16, 16, 32), jnp.float32)
    b = jax.random.normal(ks[1], (2, 16, 16, 64), jnp.float32)
    w = 0.05 * jax.random.normal(ks[2], (64, 96, 3, 3), jnp.float32)
    p3 = 0.5 * jax.random.normal(ks[3], (3, 64), jnp.float32)
    r = jax.random.normal(ks[4], (2, 16, 16, 64), jnp.float32)
    w1 = 0.1 * jax.random.normal(ks[5], (48, 96, 1, 1), jnp.float32)
    p31 = 0.5 * jax.random.normal(ks[6], (3, 48), jnp.float32)
    got, got1 = fused_conv([a, b], _pack_w(w), p3, GEOM_3x3_D2, residual=r,
                           extra_1x1={"wt": _pack_w(w1), "p3": p31}, tile_h=8)
    assert _close(got, _ref_conv([a, b], w, p3, GEOM_3x3_D2, residual=r))
    assert _close(got1, _ref_conv([a, b], w1, p31, GEOM_1x1))

    # (2) wide-channel per-row-tap (split-K) path, tiled halos with pad=1.
    c = jax.random.normal(ks[7], (1, 16, 16, 128), jnp.float32)
    w2 = 0.05 * jax.random.normal(ks[8], (64, 128, 3, 3), jnp.float32)
    p32 = 0.5 * jax.random.normal(ks[9], (3, 64), jnp.float32)
    got2 = fused_conv(c, _pack_w(w2), p32, GEOM_3x3, tile_h=8)
    assert _close(got2, _ref_conv(c, w2, p32, GEOM_3x3))

    # (3) non-tiled odd spatial, 2x2 dilated conv (in-kernel H and W padding).
    d = jax.random.normal(ks[10], (1, 5, 7, 32), jnp.float32)
    w3 = 0.1 * jax.random.normal(ks[11], (32, 32, 2, 2), jnp.float32)
    p33 = 0.5 * jax.random.normal(ks[0], (3, 32), jnp.float32)
    got3 = fused_conv(d, _pack_w(w3), p33, GEOM_2x2_D2)
    assert _close(got3, _ref_conv(d, w3, p33, GEOM_2x2_D2))


if __name__ == "__main__":
    _self_check()

    key = jax.random.PRNGKey(0)
    kp, kx = jax.random.split(key)

    # Default SalsaNext channel config; small spatial so the 4 pooling stages
    # still work (the tiled/halo path is exercised by the self-check above).
    CS = [32, 64, 128, 256, 256]
    IN_CH = 4
    N, H, W = 2, 16, 16

    raw = init_backbone(kp, IN_CH, CS)
    params = fold_backbone(raw)          # weight repack + BN fold, once
    x = jax.random.normal(kx, (N, IN_CH, H, W), jnp.float32)   # NCHW like PyTorch

    fwd = jax.jit(salsanext_backbone_forward)
    out = jax.block_until_ready(fwd(params, x))

    assert out.shape == (N, CS[0], H, W), out.shape
    assert bool(jnp.all(jnp.isfinite(out)))
    print("KERNEL_OK")
</pallas_src>

<mosaic_0001>
module attributes {stable_mosaic.version = 11 : i64} {
  func.func @kernel(%arg0: i32, %arg1: i32, %arg2: memref<1x8x16x32xbf16, #tpu.memory_space<vmem>>, %arg3: memref<1x2x16x32xbf16, #tpu.memory_space<vmem>>, %arg4: memref<1x2x16x32xbf16, #tpu.memory_space<vmem>>, %arg5: memref<1x8x16x64xbf16, #tpu.memory_space<vmem>>, %arg6: memref<1x2x16x64xbf16, #tpu.memory_space<vmem>>, %arg7: memref<1x2x16x64xbf16, #tpu.memory_space<vmem>>, %arg8: memref<864x64xbf16, #tpu.memory_space<vmem>>, %arg9: memref<3x64xf32, #tpu.memory_space<vmem>>, %arg10: memref<96x48xbf16, #tpu.memory_space<vmem>>, %arg11: memref<3x48xf32, #tpu.memory_space<vmem>>, %arg12: memref<1x8x16x64xbf16, #tpu.memory_space<vmem>>, %arg13: memref<1x8x16x64xbf16, #tpu.memory_space<vmem>>, %arg14: memref<1x8x16x48xbf16, #tpu.memory_space<vmem>>) attributes {dimension_semantics = [#tpu.dimension_semantics<parallel>, #tpu.dimension_semantics<parallel>], iteration_bounds = array<i64: 2, 2>, scalar_prefetch = 0 : i64, scratch_operands = 0 : i64, tpu.core_type = #tpu.core_type<tc>, window_params = [{transform_indices = @transform_0, window_bounds = array<i64: 1, 8, 16, 32>}, {transform_indices = @transform_1, window_bounds = array<i64: 1, 2, 16, 32>}, {transform_indices = @transform_2, window_bounds = array<i64: 1, 2, 16, 32>}, {transform_indices = @transform_3, window_bounds = array<i64: 1, 8, 16, 64>}, {transform_indices = @transform_4, window_bounds = array<i64: 1, 2, 16, 64>}, {transform_indices = @transform_5, window_bounds = array<i64: 1, 2, 16, 64>}, {pipeline_mode = #tpu.pipeline_mode<synchronous>, transform_indices = @transform_6, window_bounds = array<i64: 864, 64>}, {pipeline_mode = #tpu.pipeline_mode<synchronous>, transform_indices = @transform_7, window_bounds = array<i64: 3, 64>}, {pipeline_mode = #tpu.pipeline_mode<synchronous>, transform_indices = @transform_8, window_bounds = array<i64: 96, 48>}, {pipeline_mode = #tpu.pipeline_mode<synchronous>, transform_indices = @transform_9, window_bounds = array<i64: 3, 48>}, {transform_indices = @transform_10, window_bounds = array<i64: 1, 8, 16, 64>}, {transform_indices = @transform_11, window_bounds = array<i64: 1, 8, 16, 64>}, {transform_indices = @transform_12, window_bounds = array<i64: 1, 8, 16, 48>}]} {
    %c0 = arith.constant 0 : index
    %c0_0 = arith.constant 0 : index
    %c0_1 = arith.constant 0 : index
    %c0_2 = arith.constant 0 : index
    %0 = vector.load %arg2[%c0, %c0_0, %c0_1, %c0_2] : memref<1x8x16x32xbf16, #tpu.memory_space<vmem>>, vector<1x8x16x32xbf16>
    %1 = vector.shape_cast %0 : vector<1x8x16x32xbf16> to vector<8x16x32xbf16>
    %c0_3 = arith.constant 0 : index
    %c0_4 = arith.constant 0 : index
    %c0_5 = arith.constant 0 : index
    %c0_6 = arith.constant 0 : index
    %2 = vector.load %arg3[%c0_3, %c0_4, %c0_5, %c0_6] : memref<1x2x16x32xbf16, #tpu.memory_space<vmem>>, vector<1x2x16x32xbf16>
    %3 = vector.shape_cast %2 : vector<1x2x16x32xbf16> to vector<2x16x32xbf16>
    %c0_7 = arith.constant 0 : index
    %c0_8 = arith.constant 0 : index
    %c0_9 = arith.constant 0 : index
    %c0_10 = arith.constant 0 : index
    %4 = vector.load %arg4[%c0_7, %c0_8, %c0_9, %c0_10] : memref<1x2x16x32xbf16, #tpu.memory_space<vmem>>, vector<1x2x16x32xbf16>
    %5 = vector.shape_cast %4 : vector<1x2x16x32xbf16> to vector<2x16x32xbf16>
    %c0_i32 = arith.constant 0 : i32
    %6 = arith.cmpi eq, %arg1, %c0_i32 : i32
    %cst = arith.constant 0.000000e+00 : f32
    %cst_11 = arith.constant 1.000000e+00 : f32
    %7 = arith.select %6, %cst, %cst_11 : f32
    %8 = arith.truncf %7 : f32 to bf16
    %c1_i32 = arith.constant 1 : i32
    %9 = arith.cmpi eq, %arg1, %c1_i32 : i32
    %cst_12 = arith.constant 0.000000e+00 : f32
    %cst_13 = arith.constant 1.000000e+00 : f32
    %10 = arith.select %9, %cst_12, %cst_13 : f32
    %11 = arith.truncf %10 : f32 to bf16
    %12 = vector.broadcast %8 : bf16 to vector<2x16x32xbf16>
    %13 = arith.mulf %3, %12 : vector<2x16x32xbf16>
    %14 = vector.broadcast %11 : bf16 to vector<2x16x32xbf16>
    %15 = arith.mulf %5, %14 : vector<2x16x32xbf16>
    %16 = tpu.concatenate %13, %1, %15 in 0 : vector<2x16x32xbf16>, vector<8x16x32xbf16>, vector<2x16x32xbf16> -> vector<12x16x32xbf16>
    %cst_14 = arith.constant 0.000000e+00 : bf16
    %17 = vector.broadcast %cst_14 : bf16 to vector<12x2x32xbf16>
    %18 = tpu.concatenate %17, %16, %17 in 1 : vector<12x2x32xbf16>, vector<12x16x32xbf16>, vector<12x2x32xbf16> -> vector<12x20x32xbf16>
    %c0_15 = arith.constant 0 : index
    %c0_16 = arith.constant 0 : index
    %c0_17 = arith.constant 0 : index
    %c0_18 = arith.constant 0 : index
    %19 = vector.load %arg5[%c0_15, %c0_16, %c0_17, %c0_18] : memref<1x8x16x64xbf16, #tpu.memory_space<vmem>>, vector<1x8x16x64xbf16>
    %20 = vector.shape_cast %19 : vector<1x8x16x64xbf16> to vector<8x16x64xbf16>
    %c0_19 = arith.constant 0 : index
    %c0_20 = arith.constant 0 : index
    %c0_21 = arith.constant 0 : index
    %c0_22 = arith.constant 0 : index
    %21 = vector.load %arg6[%c0_19, %c0_20, %c0_21, %c0_22] : memref<1x2x16x64xbf16, #tpu.memory_space<vmem>>, vector<1x2x16x64xbf16>
    %22 = vector.shape_cast %21 : vector<1x2x16x64xbf16> to vector<2x16x64xbf16>
    %c0_23 = arith.constant 0 : index
    %c0_24 = arith.constant 0 : index
    %c0_25 = arith.constant 0 : index
    %c0_26 = arith.constant 0 : index
    %23 = vector.load %arg7[%c0_23, %c0_24, %c0_25, %c0_26] : memref<1x2x16x64xbf16, #tpu.memory_space<vmem>>, vector<1x2x16x64xbf16>
    %24 = vector.shape_cast %23 : vector<1x2x16x64xbf16> to vector<2x16x64xbf16>
    %c0_i32_27 = arith.constant 0 : i32
    %25 = arith.cmpi eq, %arg1, %c0_i32_27 : i32
    %cst_28 = arith.constant 0.000000e+00 : f32
    %cst_29 = arith.constant 1.000000e+00 : f32
    %26 = arith.select %25, %cst_28, %cst_29 : f32
    %27 = arith.truncf %26 : f32 to bf16
    %c1_i32_30 = arith.constant 1 : i32
    %28 = arith.cmpi eq, %arg1, %c1_i32_30 : i32
    %cst_31 = arith.constant 0.000000e+00 : f32
    %cst_32 = arith.constant 1.000000e+00 : f32
    %29 = arith.select %28, %cst_31, %cst_32 : f32
    %30 = arith.truncf %29 : f32 to bf16
    %31 = vector.broadcast %27 : bf16 to vector<2x16x64xbf16>
    %32 = arith.mulf %22, %31 : vector<2x16x64xbf16>
    %33 = vector.broadcast %30 : bf16 to vector<2x16x64xbf16>
    %34 = arith.mulf %24, %33 : vector<2x16x64xbf16>
    %35 = tpu.concatenate %32, %20, %34 in 0 : vector<2x16x64xbf16>, vector<8x16x64xbf16>, vector<2x16x64xbf16> -> vector<12x16x64xbf16>
    %cst_33 = arith.constant 0.000000e+00 : bf16
    %36 = vector.broadcast %cst_33 : bf16 to vector<12x2x64xbf16>
    %37 = tpu.concatenate %36, %35, %36 in 1 : vector<12x2x64xbf16>, vector<12x16x64xbf16>, vector<12x2x64xbf16> -> vector<12x20x64xbf16>
    %38 = vector.extract_strided_slice %18 {offsets = [0, 0, 0], sizes = [8, 16, 32], strides = [1, 1, 1]} : vector<12x20x32xbf16> to vector<8x16x32xbf16>
    %39 = vector.shape_cast %38 : vector<8x16x32xbf16> to vector<128x32xbf16>
    %40 = vector.extract_strided_slice %37 {offsets = [0, 0, 0], sizes = [8, 16, 64], strides = [1, 1, 1]} : vector<12x20x64xbf16> to vector<8x16x64xbf16>
    %41 = vector.shape_cast %40 : vector<8x16x64xbf16> to vector<128x64xbf16>
    %42 = vector.extract_strided_slice %18 {offsets = [0, 2, 0], sizes = [8, 16, 32], strides = [1, 1, 1]} : vector<12x20x32xbf16> to vector<8x16x32xbf16>
    %43 = vector.shape_cast %42 : vector<8x16x32xbf16> to vector<128x32xbf16>
    %44 = vector.extract_strided_slice %37 {offsets = [0, 2, 0], sizes = [8, 16, 64], strides = [1, 1, 1]} : vector<12x20x64xbf16> to vector<8x16x64xbf16>
    %45 = vector.shape_cast %44 : vector<8x16x64xbf16> to vector<128x64xbf16>
    %46 = vector.extract_strided_slice %18 {offsets = [0, 4, 0], sizes = [8, 16, 32], strides = [1, 1, 1]} : vector<12x20x32xbf16> to vector<8x16x32xbf16>
    %47 = vector.shape_cast %46 : vector<8x16x32xbf16> to vector<128x32xbf16>
    %48 = vector.extract_strided_slice %37 {offsets = [0, 4, 0], sizes = [8, 16, 64], strides = [1, 1, 1]} : vector<12x20x64xbf16> to vector<8x16x64xbf16>
    %49 = vector.shape_cast %48 : vector<8x16x64xbf16> to vector<128x64xbf16>
    %50 = vector.extract_strided_slice %18 {offsets = [2, 0, 0], sizes = [8, 16, 32], strides = [1, 1, 1]} : vector<12x20x32xbf16> to vector<8x16x32xbf16>
    %51 = vector.shape_cast %50 : vector<8x16x32xbf16> to vector<128x32xbf16>
    %52 = vector.extract_strided_slice %37 {offsets = [2, 0, 0], sizes = [8, 16, 64], strides = [1, 1, 1]} : vector<12x20x64xbf16> to vector<8x16x64xbf16>
    %53 = vector.shape_cast %52 : vector<8x16x64xbf16> to vector<128x64xbf16>
    %54 = vector.extract_strided_slice %18 {offsets = [2, 2, 0], sizes = [8, 16, 32], strides = [1, 1, 1]} : vector<12x20x32xbf16> to vector<8x16x32xbf16>
    %55 = vector.shape_cast %54 : vector<8x16x32xbf16> to vector<128x32xbf16>
    %56 = vector.extract_strided_slice %37 {offsets = [2, 2, 0], sizes = [8, 16, 64], strides = [1, 1, 1]} : vector<12x20x64xbf16> to vector<8x16x64xbf16>
    %57 = vector.shape_cast %56 : vector<8x16x64xbf16> to vector<128x64xbf16>
    %58 = vector.extract_strided_slice %18 {offsets = [2, 4, 0], sizes = [8, 16, 32], strides = [1, 1, 1]} : vector<12x20x32xbf16> to vector<8x16x32xbf16>
    %59 = vector.shape_cast %58 : vector<8x16x32xbf16> to vector<128x32xbf16>
    %60 = vector.extract_strided_slice %37 {offsets = [2, 4, 0], sizes = [8, 16, 64], strides = [1, 1, 1]} : vector<12x20x64xbf16> to vector<8x16x64xbf16>
    %61 = vector.shape_cast %60 : vector<8x16x64xbf16> to vector<128x64xbf16>
    %62 = vector.extract_strided_slice %18 {offsets = [4, 0, 0], sizes = [8, 16, 32], strides = [1, 1, 1]} : vector<12x20x32xbf16> to vector<8x16x32xbf16>
    %63 = vector.shape_cast %62 : vector<8x16x32xbf16> to vector<128x32xbf16>
    %64 = vector.extract_strided_slice %37 {offsets = [4, 0, 0], sizes = [8, 16, 64], strides = [1, 1, 1]} : vector<12x20x64xbf16> to vector<8x16x64xbf16>
    %65 = vector.shape_cast %64 : vector<8x16x64xbf16> to vector<128x64xbf16>
    %66 = vector.extract_strided_slice %18 {offsets = [4, 2, 0], sizes = [8, 16, 32], strides = [1, 1, 1]} : vector<12x20x32xbf16> to vector<8x16x32xbf16>
    %67 = vector.shape_cast %66 : vector<8x16x32xbf16> to vector<128x32xbf16>
    %68 = vector.extract_strided_slice %37 {offsets = [4, 2, 0], sizes = [8, 16, 64], strides = [1, 1, 1]} : vector<12x20x64xbf16> to vector<8x16x64xbf16>
    %69 = vector.shape_cast %68 : vector<8x16x64xbf16> to vector<128x64xbf16>
    %70 = vector.extract_strided_slice %18 {offsets = [4, 4, 0], sizes = [8, 16, 32], strides = [1, 1, 1]} : vector<12x20x32xbf16> to vector<8x16x32xbf16>
    %71 = vector.shape_cast %70 : vector<8x16x32xbf16> to vector<128x32xbf16>
    %72 = vector.extract_strided_slice %37 {offsets = [4, 4, 0], sizes = [8, 16, 64], strides = [1, 1, 1]} : vector<12x20x64xbf16> to vector<8x16x64xbf16>
    %73 = vector.shape_cast %72 : vector<8x16x64xbf16> to vector<128x64xbf16>
    %74 = tpu.concatenate %39, %41, %43, %45, %47, %49, %51, %53, %55, %57, %59, %61, %63, %65, %67, %69 in 1 : vector<128x32xbf16>, vector<128x64xbf16>, vector<128x32xbf16>, vector<128x64xbf16>, vector<128x32xbf16>, vector<128x64xbf16>, vector<128x32xbf16>, vector<128x64xbf16>, vector<128x32xbf16>, vector<128x64xbf16>, vector<128x32xbf16>, vector<128x64xbf16>, vector<128x32xbf16>, vector<128x64xbf16>, vector<128x32xbf16>, vector<128x64xbf16> -> vector<128x768xbf16>
    %75 = tpu.concatenate %71, %73 in 1 : vector<128x32xbf16>, vector<128x64xbf16> -> vector<128x96xbf16>
    %76 = tpu.concatenate %74, %75 in 1 : vector<128x768xbf16>, vector<128x96xbf16> -> vector<128x864xbf16>
    %c0_34 = arith.constant 0 : index
    %c0_35 = arith.constant 0 : index
    %77 = vector.load %arg8[%c0_34, %c0_35] : memref<864x64xbf16, #tpu.memory_space<vmem>>, vector<864x64xbf16>
    %cst_36 = arith.constant dense<0.000000e+00> : vector<128x64xf32>
    %78 = tpu.matmul %76, %77, %cst_36 {dimension_numbers = #tpu.dot_dimension_numbers<[1], [0], [0], [1], [0, 0, 1, 1], [], []>} : vector<128x864xbf16>, vector<864x64xbf16>, vector<128x64xf32> -> vector<128x64xf32>
    %c0_37 = arith.constant 0 : index
    %c0_38 = arith.constant 0 : index
    %79 = vector.load %arg9[%c0_37, %c0_38] : memref<3x64xf32, #tpu.memory_space<vmem>>, vector<3x64xf32>
    %80 = vector.extract_strided_slice %79 {offsets = [0, 0], sizes = [1, 64], strides = [1, 1]} : vector<3x64xf32> to vector<1x64xf32>
    %81 = vector.broadcast %80 : vector<1x64xf32> to vector<128x64xf32>
    %82 = arith.addf %78, %81 : vector<128x64xf32>
    %cst_39 = arith.constant 0.00999999977 : f32
    %83 = vector.broadcast %cst_39 : f32 to vector<128x64xf32>
    %84 = arith.mulf %83, %82 : vector<128x64xf32>
    %85 = arith.maximumf %82, %84 : vector<128x64xf32>
    %86 = vector.extract_strided_slice %79 {offsets = [1, 0], sizes = [1, 64], strides = [1, 1]} : vector<3x64xf32> to vector<1x64xf32>
    %87 = vector.broadcast %86 : vector<1x64xf32> to vector<128x64xf32>
    %88 = arith.mulf %85, %87 : vector<128x64xf32>
    %89 = vector.extract_strided_slice %79 {offsets = [2, 0], sizes = [1, 64], strides = [1, 1]} : vector<3x64xf32> to vector<1x64xf32>
    %90 = vector.broadcast %89 : vector<1x64xf32> to vector<128x64xf32>
    %91 = arith.addf %88, %90 : vector<128x64xf32>
    %92 = vector.shape_cast %91 : vector<128x64xf32> to vector<8x16x64xf32>
    %c0_40 = arith.constant 0 : index
    %c0_41 = arith.constant 0 : index
    %c0_42 = arith.constant 0 : index
    %c0_43 = arith.constant 0 : index
    %93 = vector.load %arg12[%c0_40, %c0_41, %c0_42, %c0_43] : memref<1x8x16x64xbf16, #tpu.memory_space<vmem>>, vector<1x8x16x64xbf16>
    %94 = vector.shape_cast %93 : vector<1x8x16x64xbf16> to vector<8x16x64xbf16>
    %95 = arith.extf %94 : vector<8x16x64xbf16> to vector<8x16x64xf32>
    %96 = arith.addf %92, %95 : vector<8x16x64xf32>
    %97 = arith.truncf %96 : vector<8x16x64xf32> to vector<8x16x64xbf16>
    %c0_44 = arith.constant 0 : index
    %c0_45 = arith.constant 0 : index
    %c0_46 = arith.constant 0 : index
    %c0_47 = arith.constant 0 : index
    %98 = vector.load %arg13[%c0_44, %c0_45, %c0_46, %c0_47] : memref<1x8x16x64xbf16, #tpu.memory_space<vmem>>, vector<1x8x16x64xbf16>
    %99 = vector.shape_cast %98 : vector<1x8x16x64xbf16> to vector<8x16x64xbf16>
    %100 = vector.shape_cast %97 : vector<8x16x64xbf16> to vector<1x8x16x64xbf16>
    tpu.vector_store %arg13[%c0_44, %c0_45, %c0_46, %c0_47], %100 {strides = array<i32>} : memref<1x8x16x64xbf16, #tpu.memory_space<vmem>>, vector<1x8x16x64xbf16>,
    %cst_48 = arith.constant 0.000000e+00 : f32
    %101 = vector.broadcast %cst_48 : f32 to vector<128x48xf32>
    %102 = vector.shape_cast %1 : vector<8x16x32xbf16> to vector<128x32xbf16>
    %c0_49 = arith.constant 0 : index
    %c0_50 = arith.constant 0 : index
    %103 = vector.load %arg10[%c0_49, %c0_50] : memref<96x48xbf16, #tpu.memory_space<vmem>>, vector<32x48xbf16>
    %cst_51 = arith.constant dense<0.000000e+00> : vector<128x48xf32>
    %104 = tpu.matmul %102, %103, %cst_51 {dimension_numbers = #tpu.dot_dimension_numbers<[1], [0], [0], [1], [0, 0, 1, 1], [], []>} : vector<128x32xbf16>, vector<32x48xbf16>, vector<128x48xf32> -> vector<128x48xf32>
    %105 = arith.addf %101, %104 : vector<128x48xf32>
    %106 = vector.shape_cast %20 : vector<8x16x64xbf16> to vector<128x64xbf16>
    %c32 = arith.constant 32 : index
    %c0_52 = arith.constant 0 : index
    %107 = vector.load %arg10[%c32, %c0_52] : memref<96x48xbf16, #tpu.memory_space<vmem>>, vector<64x48xbf16>
    %cst_53 = arith.constant dense<0.000000e+00> : vector<128x48xf32>
    %108 = tpu.matmul %106, %107, %cst_53 {dimension_numbers = #tpu.dot_dimension_numbers<[1], [0], [0], [1], [0, 0, 1, 1], [], []>} : vector<128x64xbf16>, vector<64x48xbf16>, vector<128x48xf32> -> vector<128x48xf32>
    %109 = arith.addf %105, %108 : vector<128x48xf32>
    %c0_54 = arith.constant 0 : index
    %c0_55 = arith.constant 0 : index
    %110 = vector.load %arg11[%c0_54, %c0_55] : memref<3x48xf32, #tpu.memory_space<vmem>>, vector<3x48xf32>
    %111 = vector.extract_strided_slice %110 {offsets = [0, 0], sizes = [1, 48], strides = [1, 1]} : vector<3x48xf32> to vector<1x48xf32>
    %112 = vector.broadcast %111 : vector<1x48xf32> to vector<128x48xf32>
    %113 = arith.addf %109, %112 : vector<128x48xf32>
    %cst_56 = arith.constant 0.00999999977 : f32
    %114 = vector.broadcast %cst_56 : f32 to vector<128x48xf32>
    %115 = arith.mulf %114, %113 : vector<128x48xf32>
    %116 = arith.maximumf %113, %115 : vector<128x48xf32>
    %117 = vector.extract_strided_slice %110 {offsets = [1, 0], sizes = [1, 48], strides = [1, 1]} : vector<3x48xf32> to vector<1x48xf32>
    %118 = vector.broadcast %117 : vector<1x48xf32> to vector<128x48xf32>
    %119 = arith.mulf %116, %118 : vector<128x48xf32>
    %120 = vector.extract_strided_slice %110 {offsets = [2, 0], sizes = [1, 48], strides = [1, 1]} : vector<3x48xf32> to vector<1x48xf32>
    %121 = vector.broadcast %120 : vector<1x48xf32> to vector<128x48xf32>
    %122 = arith.addf %119, %121 : vector<128x48xf32>
    %123 = vector.shape_cast %122 : vector<128x48xf32> to vector<8x16x48xf32>
    %124 = arith.truncf %123 : vector<8x16x48xf32> to vector<8x16x48xbf16>
    %c0_57 = arith.constant 0 : index
    %c0_58 = arith.constant 0 : index
    %c0_59 = arith.constant 0 : index
    %c0_60 = arith.constant 0 : index
    %125 = vector.load %arg14[%c0_57, %c0_58, %c0_59, %c0_60] : memref<1x8x16x48xbf16, #tpu.memory_space<vmem>>, vector<1x8x16x48xbf16>
    %126 = vector.shape_cast %125 : vector<1x8x16x48xbf16> to vector<8x16x48xbf16>
    %127 = vector.shape_cast %124 : vector<8x16x48xbf16> to vector<1x8x16x48xbf16>
    tpu.vector_store %arg14[%c0_57, %c0_58, %c0_59, %c0_60], %127 {strides = array<i32>} : memref<1x8x16x48xbf16, #tpu.memory_space<vmem>>, vector<1x8x16x48xbf16>,
    return
  }
  func.func @transform_0(%arg0: i32, %arg1: i32) -> (i32, i32, i32, i32) {
    %c0_i32 = arith.constant 0 : i32
    %c0_i32_0 = arith.constant 0 : i32
    %c0_i32_1 = arith.constant 0 : i32
    return %arg0, %arg1, %c0_i32, %c0_i32_0 : i32, i32, i32, i32
  }
  func.func @transform_1(%arg0: i32, %arg1: i32) -> (i32, i32, i32, i32) {
    %c4_i32 = arith.constant 4 : i32
    %0 = arith.muli %arg1, %c4_i32 : i32
    %c1_i32 = arith.constant 1 : i32
    %1 = arith.subi %0, %c1_i32 : i32
    %c0_i32 = arith.constant 0 : i32
    %2 = arith.maxsi %1, %c0_i32 : i32
    %c0_i32_0 = arith.constant 0 : i32
    %c0_i32_1 = arith.constant 0 : i32
    %c0_i32_2 = arith.constant 0 : i32
    return %arg0, %2, %c0_i32_0, %c0_i32_1 : i32, i32, i32, i32
  }
  func.func @transform_2(%arg0: i32, %arg1: i32) -> (i32, i32, i32, i32) {
    %c1_i32 = arith.constant 1 : i32
    %0 = arith.addi %arg1, %c1_i32 : i32
    %c4_i32 = arith.constant 4 : i32
    %1 = arith.muli %0, %c4_i32 : i32
    %c7_i32 = arith.constant 7 : i32
    %2 = arith.minsi %1, %c7_i32 : i32
    %c0_i32 = arith.constant 0 : i32
    %c0_i32_0 = arith.constant 0 : i32
    %c0_i32_1 = arith.constant 0 : i32
    return %arg0, %2, %c0_i32, %c0_i32_0 : i32, i32, i32, i32
  }
  func.func @transform_3(%arg0: i32, %arg1: i32) -> (i32, i32, i32, i32) {
    %c0_i32 = arith.constant 0 : i32
    %c0_i32_0 = arith.constant 0 : i32
    %c0_i32_1 = arith.constant 0 : i32
    return %arg0, %arg1, %c0_i32, %c0_i32_0 : i32, i32, i32, i32
  }
  func.func @transform_4(%arg0: i32, %arg1: i32) -> (i32, i32, i32, i32) {
    %c4_i32 = arith.constant 4 : i32
    %0 = arith.muli %arg1, %c4_i32 : i32
    %c1_i32 = arith.constant 1 : i32
    %1 = arith.subi %0, %c1_i32 : i32
    %c0_i32 = arith.constant 0 : i32
    %2 = arith.maxsi %1, %c0_i32 : i32
    %c0_i32_0 = arith.constant 0 : i32
    %c0_i32_1 = arith.constant 0 : i32
    %c0_i32_2 = arith.constant 0 : i32
    return %arg0, %2, %c0_i32_0, %c0_i32_1 : i32, i32, i32, i32
  }
  func.func @transform_5(%arg0: i32, %arg1: i32) -> (i32, i32, i32, i32) {
    %c1_i32 = arith.constant 1 : i32
    %0 = arith.addi %arg1, %c1_i32 : i32
    %c4_i32 = arith.constant 4 : i32
    %1 = arith.muli %0, %c4_i32 : i32
    %c7_i32 = arith.constant 7 : i32
    %2 = arith.minsi %1, %c7_i32 : i32
    %c0_i32 = arith.constant 0 : i32
    %c0_i32_0 = arith.constant 0 : i32
    %c0_i32_1 = arith.constant 0 : i32
    return %arg0, %2, %c0_i32, %c0_i32_0 : i32, i32, i32, i32
  }
  func.func @transform_6(%arg0: i32, %arg1: i32) -> (i32, i32) {
    %c0_i32 = arith.constant 0 : i32
    %c0_i32_0 = arith.constant 0 : i32
    %c0_i32_1 = arith.constant 0 : i32
    return %c0_i32, %c0_i32_0 : i32, i32
  }
  func.func @transform_7(%arg0: i32, %arg1: i32) -> (i32, i32) {
    %c0_i32 = arith.constant 0 : i32
    %c0_i32_0 = arith.constant 0 : i32
    %c0_i32_1 = arith.constant 0 : i32
    return %c0_i32, %c0_i32_0 : i32, i32
  }
  func.func @transform_8(%arg0: i32, %arg1: i32) -> (i32, i32) {
    %c0_i32 = arith.constant 0 : i32
    %c0_i32_0 = arith.constant 0 : i32
    %c0_i32_1 = arith.constant 0 : i32
    return %c0_i32, %c0_i32_0 : i32, i32
  }
  func.func @transform_9(%arg0: i32, %arg1: i32) -> (i32, i32) {
    %c0_i32 = arith.constant 0 : i32
    %c0_i32_0 = arith.constant 0 : i32
    %c0_i32_1 = arith.constant 0 : i32
    return %c0_i32, %c0_i32_0 : i32, i32
  }
  func.func @transform_10(%arg0: i32, %arg1: i32) -> (i32, i32, i32, i32) {
    %c0_i32 = arith.constant 0 : i32
    %c0_i32_0 = arith.constant 0 : i32
    %c0_i32_1 = arith.constant 0 : i32
    return %arg0, %arg1, %c0_i32, %c0_i32_0 : i32, i32, i32, i32
  }
  func.func @transform_11(%arg0: i32, %arg1: i32) -> (i32, i32, i32, i32) {
    %c0_i32 = arith.constant 0 : i32
    %c0_i32_0 = arith.constant 0 : i32
    %c0_i32_1 = arith.constant 0 : i32
    return %arg0, %arg1, %c0_i32, %c0_i32_0 : i32, i32, i32, i32
  }
  func.func @transform_12(%arg0: i32, %arg1: i32) -> (i32, i32, i32, i32) {
    %c0_i32 = arith.constant 0 : i32
    %c0_i32_0 = arith.constant 0 : i32
    %c0_i32_1 = arith.constant 0 : i32
    return %arg0, %arg1, %c0_i32, %c0_i32_0 : i32, i32, i32, i32
  }
}

</mosaic_0001>

<llo_original>
// kernel: tpu_custom_call.1
$region0: #{tpu_custom_call.1}
  #allocation0 [shape = 'u32[]', space=smem, size = 0x4, offset = 0x4, fixed_abs, tag = 'smem constant byte address 0x4 - core index']
  #allocation1 [shape = 'u32[144,128]{1,0:T(1,128)}', space=vmem, size = 0x12000, scoped, tag = 'internal scratch']
  %s0 = inlined_call_operand.vmem [shape: bf16[2,16,16,32], index: 0, kind: input, shape index: {}]
  %s1 = inlined_call_operand.vmem [shape: bf16[2,16,16,32], index: 1, kind: input, shape index: {}]
  %s2 = inlined_call_operand.hbm [shape: bf16[2,16,16,32], index: 2, kind: input, shape index: {}]
  %s3 = inlined_call_operand.hbm [shape: bf16[2,16,16,64], index: 3, kind: input, shape index: {}]
  %s4 = inlined_call_operand.hbm [shape: bf16[2,16,16,64], index: 4, kind: input, shape index: {}]
  %s5 = inlined_call_operand.hbm [shape: bf16[2,16,16,64], index: 5, kind: input, shape index: {}]
  %s6 = inlined_call_operand.vmem [shape: bf16[864,64], index: 6, kind: input, shape index: {}]
  %s7 = inlined_call_operand.vmem [shape: f32[3,64], index: 7, kind: input, shape index: {}]
  %s8 = inlined_call_operand.vmem [shape: bf16[96,48], index: 8, kind: input, shape index: {}]
  %s9 = inlined_call_operand.vmem [shape: f32[3,48], index: 9, kind: input, shape index: {}]
  %s10 = inlined_call_operand.hbm [shape: bf16[2,16,16,64], index: 10, kind: input, shape index: {}]
  %s11 = inlined_call_operand.hbm [shape: bf16[2,16,16,64], index: 11, kind: output, shape index: {0}]
  %s12 = inlined_call_operand.hbm [shape: bf16[2,16,16,48], index: 12, kind: output, shape index: {1}]
  %13 = xla_tuple %s11, %s12
  %s14 = sld [smem:[#allocation0]]
  $region105: #{tpu_custom_call.1} parent=0
    _
  %s16 = ssub.s32 1, %s14
  %s17 = scalar_select 0, %s16, %s14
  $region1: #{tpu_custom_call.1} parent=0
    #allocation2 [shape = 'u8[16384]{0}', space=vmem, size = 0x4000, scoped, tag = 'input window, operand 2']
    #allocation3 [shape = 's32[2]{0}', space=sflag, size = 0x8, scoped, tag = 'scoped memory for tpu_custom_call.1']
    #allocation4 [shape = 's32[2]{0}', space=sflag, size = 0x8, scoped, tag = 'scoped memory for tpu_custom_call.1']
    #allocation5 [shape = 'u8[65536]{0}', space=vmem, size = 0x10000, scoped, tag = 'input window, operand 3']
    #allocation6 [shape = 's32[2]{0}', space=sflag, size = 0x8, scoped, tag = 'scoped memory for tpu_custom_call.1']
    #allocation7 [shape = 'u8[16384]{0}', space=vmem, size = 0x4000, scoped, tag = 'input window, operand 4']
    #allocation8 [shape = 'u8[16384]{0}', space=vmem, size = 0x4000, scoped, tag = 'input window, operand 5']
    #allocation9 [shape = 's32[2]{0}', space=sflag, size = 0x8, scoped, tag = 'scoped memory for tpu_custom_call.1']
    #allocation10 [shape = 'u8[65536]{0}', space=vmem, size = 0x10000, scoped, tag = 'input window, operand 10']
    #allocation11 [shape = 'u8[65536]{0}', space=vmem, size = 0x10000, scoped, tag = 'output window, operand 0']
    #allocation12 [shape = 'u8[65536]{0}', space=vmem, size = 0x10000, scoped, tag = 'output window, operand 1']
    #allocation13 [shape = 's32[2]{0}', space=sflag, size = 0x8, scoped, tag = 'scoped memory for tpu_custom_call.1']
    %18 = vsyncpa [#allocation3], 0
    %s19 = scalar_lea.sflag [#allocation3], 1
    %20 = vsyncpa %s19, 0
    %21 = vsyncpa [#allocation6], 0
    %s22 = scalar_lea.sflag [#allocation6], 1
    %23 = vsyncpa %s22, 0
    %24 = vsyncpa [#allocation9], 0
    %s25 = scalar_lea.sflag [#allocation9], 1
    %26 = vsyncpa %s25, 0
    %27 = vsyncpa [#allocation4], 0
    %s28 = scalar_lea.sflag [#allocation4], 1
    %29 = vsyncpa %s28, 0
    %30 = vsyncpa [#allocation13], 0
    %s31 = scalar_lea.sflag [#allocation13], 1
    %32 = vsyncpa %s31, 0
    loop: start=0, step=1, limit=6
    $region2: #{tpu_custom_call.1} parent=1 // loop_pre_header
      _
    $region3: #{tpu_custom_call.1} parent=1 // loop_header
      %s34 = sphi 0, %s38
      %p35 = scmp.ge.s32.totalorder %s34, 6
      %s41 = sphi 0, %s53
      %s42 = sphi 0, %s49
      %s43 = sphi 0, %s41
      %s44 = sphi 0, %s42
      %s45 = sphi 0, %s43
      %s46 = sphi 0, %s44
      %s58 = sphi 0, %s60
      %s61 = sphi 0, %s58
      %s62 = sphi 0, %s61
      %s78 = sphi 0, %s62
      %s94 = sphi 0, %s96
      %s97 = sphi 0, %s94
      %s98 = sphi 0, %s97
      %s114 = sphi 0, %s98
      %s130 = sphi 0, %s132
      %s133 = sphi 0, %s130
      %s134 = sphi 0, %s133
      %s150 = sphi 0, %s134
      %s158 = sphi 0, %s160
      %s161 = sphi 0, %s158
      %s162 = sphi 0, %s161
      %s178 = sphi 0, %s162
      %s194 = sphi 0, %s196
      %s197 = sphi 0, %s194
      %s198 = sphi 0, %s197
      %s214 = sphi 0, %s198
      %s230 = sphi 0, %s232
      %s233 = sphi 0, %s230
      %s234 = sphi 0, %s233
      %s250 = sphi 0, %s234
      %s254 = sphi 0, %s254
      %s256 = sphi 0, %s254
      %s257 = sphi 0, %s256
      %s271 = sphi 0, %s257
      %s275 = sphi 0, %s275
      %s277 = sphi 0, %s275
      %s278 = sphi 0, %s277
      %s292 = sphi 0, %s278
      %s296 = sphi 0, %s296
      %s298 = sphi 0, %s296
      %s299 = sphi 0, %s298
      %s313 = sphi 0, %s299
      %s317 = sphi 0, %s317
      %s319 = sphi 0, %s317
      %s320 = sphi 0, %s319
      %s334 = sphi 0, %s320
      %s342 = sphi 0, %s344
      %s345 = sphi 0, %s342
      %s346 = sphi 0, %s345
      %s362 = sphi 0, %s346
      %s370 = sphi 0, %s372
      %s373 = sphi 0, %s370
      %s374 = sphi 0, %s373
      %s390 = sphi 0, %s374
      %s398 = sphi 0, %s400
      %s401 = sphi 0, %s398
      %s402 = sphi 0, %s401
      %s418 = sphi 0, %s402
    $region4: #{tpu_custom_call.1} parent=1 // loop_header_branch
      %37 = sbr.rel (%p35) target = $region8
    $region5: #{tpu_custom_call.1} parent=1 // loop_body
      %s39 = ssub.s32 %s34, 1
      %s40 = ssub.s32 %s34, 2
      %s47 = sadd.s32 1, %s42
      %p48 = scmp.ge.s32.totalorder %s47, 2
      %s49 = scalar_select %p48, 0, %s47
      %s50 = sadd.s32 1, %s41
      %s51 = scalar_select %p48, %s50, %s41
      %p52 = scmp.ge.s32.totalorder %s51, 2
      %s53 = scalar_select %p52, 0, %s51
      %s54 = ssub.s32 %s41, %s53
      %s55 = ssub.s32 %s42, %s49
      %s56 = sor.u32 %s54, %s55
      %p57 = scmp.eq.s32.totalorder %s56, 0
      %s59 = sadd.s32 %s58, 1
      %s60 = scalar_select %p57, %s58, %s59
      %p63 = pneg %p57
      %p64 = scmp.eq.s32.totalorder %s34, 3
      %p65 = por %p63, %p64
      %p66 = scmp.ne.s32.totalorder %s58, %s61
      %p67 = scmp.eq.s32.totalorder %s34, 0
      %p68 = por %p66, %p67
      %p69 = scmp.ne.s32.totalorder %s58, %s61
      %p70 = scmp.eq.s32.totalorder %s39, 3
      %p71 = por %p69, %p70
      %p72 = scmp.ne.s32.totalorder %s61, %s62
      %p73 = scmp.eq.s32.totalorder %s39, 0
      %p74 = por %p72, %p73
      %p75 = scmp.ne.s32.totalorder %s61, %s62
      %p76 = scmp.eq.s32.totalorder %s40, 3
      %p77 = por %p75, %p76
      %p79 = scmp.ne.s32.totalorder %s62, %s78
      %p80 = scmp.eq.s32.totalorder %s40, 0
      %p81 = por %p79, %p80
      %s82 = smul.u32 %s42, 4
      %s83 = ssub.s32 %s82, 1
      %p84 = scmp.gt.s32.totalorder %s83, 0
      %s85 = scalar_select %p84, %s83, 0
      %s86 = smul.u32 %s49, 4
      %s87 = ssub.s32 %s86, 1
      %p88 = scmp.gt.s32.totalorder %s87, 0
      %s89 = scalar_select %p88, %s87, 0
      %s90 = ssub.s32 %s41, %s53
      %s91 = ssub.s32 %s85, %s89
      %s92 = sor.u32 %s90, %s91
      %p93 = scmp.eq.s32.totalorder %s92, 0
      %s95 = sadd.s32 %s94, 1
      %s96 = scalar_select %p93, %s94, %s95
      %p99 = pneg %p93
      %p100 = scmp.eq.s32.totalorder %s34, 3
      %p101 = por %p99, %p100
      %p102 = scmp.ne.s32.totalorder %s94, %s97
      %p103 = scmp.eq.s32.totalorder %s34, 0
      %p104 = por %p102, %p103
      %p105 = scmp.ne.s32.totalorder %s94, %s97
      %p106 = scmp.eq.s32.totalorder %s39, 3
      %p107 = por %p105, %p106
      %p108 = scmp.ne.s32.totalorder %s97, %s98
      %p109 = scmp.eq.s32.totalorder %s39, 0
      %p110 = por %p108, %p109
      %p111 = scmp.ne.s32.totalorder %s97, %s98
      %p112 = scmp.eq.s32.totalorder %s40, 3
      %p113 = por %p111, %p112
      %p115 = scmp.ne.s32.totalorder %s98, %s114
      %p116 = scmp.eq.s32.totalorder %s40, 0
      %p117 = por %p115, %p116
      %s118 = sadd.s32 %s42, 1
      %s119 = smul.u32 %s118, 4
      %p120 = scmp.lt.s32.totalorder %s119, 7
      %s121 = scalar_select %p120, %s119, 7
      %s122 = sadd.s32 %s49, 1
      %s123 = smul.u32 %s122, 4
      %p124 = scmp.lt.s32.totalorder %s123, 7
      %s125 = scalar_select %p124, %s123, 7
      %s126 = ssub.s32 %s41, %s53
      %s127 = ssub.s32 %s121, %s125
      %s128 = sor.u32 %s126, %s127
      %p129 = scmp.eq.s32.totalorder %s128, 0
      %s131 = sadd.s32 %s130, 1
      %s132 = scalar_select %p129, %s130, %s131
      %p135 = pneg %p129
      %p136 = scmp.eq.s32.totalorder %s34, 3
      %p137 = por %p135, %p136
      %p138 = scmp.ne.s32.totalorder %s130, %s133
      %p139 = scmp.eq.s32.totalorder %s34, 0
      %p140 = por %p138, %p139
      %p141 = scmp.ne.s32.totalorder %s130, %s133
      %p142 = scmp.eq.s32.totalorder %s39, 3
      %p143 = por %p141, %p142
      %p144 = scmp.ne.s32.totalorder %s133, %s134
      %p145 = scmp.eq.s32.totalorder %s39, 0
      %p146 = por %p144, %p145
      %p147 = scmp.ne.s32.totalorder %s133, %s134
      %p148 = scmp.eq.s32.totalorder %s40, 3
      %p149 = por %p147, %p148
      %p151 = scmp.ne.s32.totalorder %s134, %s150
      %p152 = scmp.eq.s32.totalorder %s40, 0
      %p153 = por %p151, %p152
      %s154 = ssub.s32 %s41, %s53
      %s155 = ssub.s32 %s42, %s49
      %s156 = sor.u32 %s154, %s155
      %p157 = scmp.eq.s32.totalorder %s156, 0
      %s159 = sadd.s32 %s158, 1
      %s160 = scalar_select %p157, %s158, %s159
      %p163 = pneg %p157
      %p164 = scmp.eq.s32.totalorder %s34, 3
      %p165 = por %p163, %p164
      %p166 = scmp.ne.s32.totalorder %s158, %s161
      %p167 = scmp.eq.s32.totalorder %s34, 0
      %p168 = por %p166, %p167
      %p169 = scmp.ne.s32.totalorder %s158, %s161
      %p170 = scmp.eq.s32.totalorder %s39, 3
      %p171 = por %p169, %p170
      %p172 = scmp.ne.s32.totalorder %s161, %s162
      %p173 = scmp.eq.s32.totalorder %s39, 0
      %p174 = por %p172, %p173
      %p175 = scmp.ne.s32.totalorder %s161, %s162
      %p176 = scmp.eq.s32.totalorder %s40, 3
      %p177 = por %p175, %p176
      %p179 = scmp.ne.s32.totalorder %s162, %s178
      %p180 = scmp.eq.s32.totalorder %s40, 0
      %p181 = por %p179, %p180
      %s182 = smul.u32 %s42, 4
      %s183 = ssub.s32 %s182, 1
      %p184 = scmp.gt.s32.totalorder %s183, 0
      %s185 = scalar_select %p184, %s183, 0
      %s186 = smul.u32 %s49, 4
      %s187 = ssub.s32 %s186, 1
      %p188 = scmp.gt.s32.totalorder %s187, 0
      %s189 = scalar_select %p188, %s187, 0
      %s190 = ssub.s32 %s41, %s53
      %s191 = ssub.s32 %s185, %s189
      %s192 = sor.u32 %s190, %s191
      %p193 = scmp.eq.s32.totalorder %s192, 0
      %s195 = sadd.s32 %s194, 1
      %s196 = scalar_select %p193, %s194, %s195
      %p199 = pneg %p193
      %p200 = scmp.eq.s32.totalorder %s34, 3
      %p201 = por %p199, %p200
      %p202 = scmp.ne.s32.totalorder %s194, %s197
      %p203 = scmp.eq.s32.totalorder %s34, 0
      %p204 = por %p202, %p203
      %p205 = scmp.ne.s32.totalorder %s194, %s197
      %p206 = scmp.eq.s32.totalorder %s39, 3
      %p207 = por %p205, %p206
      %p208 = scmp.ne.s32.totalorder %s197, %s198
      %p209 = scmp.eq.s32.totalorder %s39, 0
      %p210 = por %p208, %p209
      %p211 = scmp.ne.s32.totalorder %s197, %s198
      %p212 = scmp.eq.s32.totalorder %s40, 3
      %p213 = por %p211, %p212
      %p215 = scmp.ne.s32.totalorder %s198, %s214
      %p216 = scmp.eq.s32.totalorder %s40, 0
      %p217 = por %p215, %p216
      %s218 = sadd.s32 %s42, 1
      %s219 = smul.u32 %s218, 4
      %p220 = scmp.lt.s32.totalorder %s219, 7
      %s221 = scalar_select %p220, %s219, 7
      %s222 = sadd.s32 %s49, 1
      %s223 = smul.u32 %s222, 4
      %p224 = scmp.lt.s32.totalorder %s223, 7
      %s225 = scalar_select %p224, %s223, 7
      %s226 = ssub.s32 %s41, %s53
      %s227 = ssub.s32 %s221, %s225
      %s228 = sor.u32 %s226, %s227
      %p229 = scmp.eq.s32.totalorder %s228, 0
      %s231 = sadd.s32 %s230, 1
      %s232 = scalar_select %p229, %s230, %s231
      %p235 = pneg %p229
      %p236 = scmp.eq.s32.totalorder %s34, 3
      %p237 = por %p235, %p236
      %p238 = scmp.ne.s32.totalorder %s230, %s233
      %p239 = scmp.eq.s32.totalorder %s34, 0
      %p240 = por %p238, %p239
      %p241 = scmp.ne.s32.totalorder %s230, %s233
      %p242 = scmp.eq.s32.totalorder %s39, 3
      %p243 = por %p241, %p242
      %p244 = scmp.ne.s32.totalorder %s233, %s234
      %p245 = scmp.eq.s32.totalorder %s39, 0
      %p246 = por %p244, %p245
      %p247 = scmp.ne.s32.totalorder %s233, %s234
      %p248 = scmp.eq.s32.totalorder %s40, 3
      %p249 = por %p247, %p248
      %p251 = scmp.ne.s32.totalorder %s234, %s250
      %p252 = scmp.eq.s32.totalorder %s40, 0
      %p253 = por %p251, %p252
      %s255 = sadd.s32 %s254, 1
      %p258 = scmp.eq.s32.totalorder %s34, 3
      %p259 = scmp.ne.s32.totalorder %s254, %s256
      %p260 = scmp.eq.s32.totalorder %s34, 0
      %p261 = por %p259, %p260
      %p262 = scmp.ne.s32.totalorder %s254, %s256
      %p263 = scmp.eq.s32.totalorder %s39, 3
      %p264 = por %p262, %p263
      %p265 = scmp.ne.s32.totalorder %s256, %s257
      %p266 = scmp.eq.s32.totalorder %s39, 0
      %p267 = por %p265, %p266
      %p268 = scmp.ne.s32.totalorder %s256, %s257
      %p269 = scmp.eq.s32.totalorder %s40, 3
      %p270 = por %p268, %p269
      %p272 = scmp.ne.s32.totalorder %s257, %s271
      %p273 = scmp.eq.s32.totalorder %s40, 0
      %p274 = por %p272, %p273
      %s276 = sadd.s32 %s275, 1
      %p279 = scmp.eq.s32.totalorder %s34, 3
      %p280 = scmp.ne.s32.totalorder %s275, %s277
      %p281 = scmp.eq.s32.totalorder %s34, 0
      %p282 = por %p280, %p281
      %p283 = scmp.ne.s32.totalorder %s275, %s277
      %p284 = scmp.eq.s32.totalorder %s39, 3
      %p285 = por %p283, %p284
      %p286 = scmp.ne.s32.totalorder %s277, %s278
      %p287 = scmp.eq.s32.totalorder %s39, 0
      %p288 = por %p286, %p287
      %p289 = scmp.ne.s32.totalorder %s277, %s278
      %p290 = scmp.eq.s32.totalorder %s40, 3
      %p291 = por %p289, %p290
      %p293 = scmp.ne.s32.totalorder %s278, %s292
      %p294 = scmp.eq.s32.totalorder %s40, 0
      %p295 = por %p293, %p294
      %s297 = sadd.s32 %s296, 1
      %p300 = scmp.eq.s32.totalorder %s34, 3
      %p301 = scmp.ne.s32.totalorder %s296, %s298
      %p302 = scmp.eq.s32.totalorder %s34, 0
      %p303 = por %p301, %p302
      %p304 = scmp.ne.s32.totalorder %s296, %s298
      %p305 = scmp.eq.s32.totalorder %s39, 3
      %p306 = por %p304, %p305
      %p307 = scmp.ne.s32.totalorder %s298, %s299
      %p308 = scmp.eq.s32.totalorder %s39, 0
      %p309 = por %p307, %p308
      %p310 = scmp.ne.s32.totalorder %s298, %s299
      %p311 = scmp.eq.s32.totalorder %s40, 3
      %p312 = por %p310, %p311
      %p314 = scmp.ne.s32.totalorder %s299, %s313
      %p315 = scmp.eq.s32.totalorder %s40, 0
      %p316 = por %p314, %p315
      %s318 = sadd.s32 %s317, 1
      %p321 = scmp.eq.s32.totalorder %s34, 3
      %p322 = scmp.ne.s32.totalorder %s317, %s319
      %p323 = scmp.eq.s32.totalorder %s34, 0
      %p324 = por %p322, %p323
      %p325 = scmp.ne.s32.totalorder %s317, %s319
      %p326 = scmp.eq.s32.totalorder %s39, 3
      %p327 = por %p325, %p326
      %p328 = scmp.ne.s32.totalorder %s319, %s320
      %p329 = scmp.eq.s32.totalorder %s39, 0
      %p330 = por %p328, %p329
      %p331 = scmp.ne.s32.totalorder %s319, %s320
      %p332 = scmp.eq.s32.totalorder %s40, 3
      %p333 = por %p331, %p332
      %p335 = scmp.ne.s32.totalorder %s320, %s334
      %p336 = scmp.eq.s32.totalorder %s40, 0
      %p337 = por %p335, %p336
      %s338 = ssub.s32 %s41, %s53
      %s339 = ssub.s32 %s42, %s49
      %s340 = sor.u32 %s338, %s339
      %p341 = scmp.eq.s32.totalorder %s340, 0
      %s343 = sadd.s32 %s342, 1
      %s344 = scalar_select %p341, %s342, %s343
      %p347 = pneg %p341
      %p348 = scmp.eq.s32.totalorder %s34, 3
      %p349 = por %p347, %p348
      %p350 = scmp.ne.s32.totalorder %s342, %s345
      %p351 = scmp.eq.s32.totalorder %s34, 0
      %p352 = por %p350, %p351
      %p353 = scmp.ne.s32.totalorder %s342, %s345
      %p354 = scmp.eq.s32.totalorder %s39, 3
      %p355 = por %p353, %p354
      %p356 = scmp.ne.s32.totalorder %s345, %s346
      %p357 = scmp.eq.s32.totalorder %s39, 0
      %p358 = por %p356, %p357
      %p359 = scmp.ne.s32.totalorder %s345, %s346
      %p360 = scmp.eq.s32.totalorder %s40, 3
      %p361 = por %p359, %p360
      %p363 = scmp.ne.s32.totalorder %s346, %s362
      %p364 = scmp.eq.s32.totalorder %s40, 0
      %p365 = por %p363, %p364
      %s366 = ssub.s32 %s41, %s53
      %s367 = ssub.s32 %s42, %s49
      %s368 = sor.u32 %s366, %s367
      %p369 = scmp.eq.s32.totalorder %s368, 0
      %s371 = sadd.s32 %s370, 1
      %s372 = scalar_select %p369, %s370, %s371
      %p375 = pneg %p369
      %p376 = scmp.eq.s32.totalorder %s34, 3
      %p377 = por %p375, %p376
      %p378 = scmp.ne.s32.totalorder %s370, %s373
      %p379 = scmp.eq.s32.totalorder %s34, 0
      %p380 = por %p378, %p379
      %p381 = scmp.ne.s32.totalorder %s370, %s373
      %p382 = scmp.eq.s32.totalorder %s39, 3
      %p383 = por %p381, %p382
      %p384 = scmp.ne.s32.totalorder %s373, %s374
      %p385 = scmp.eq.s32.totalorder %s39, 0
      %p386 = por %p384, %p385
      %p387 = scmp.ne.s32.totalorder %s373, %s374
      %p388 = scmp.eq.s32.totalorder %s40, 3
      %p389 = por %p387, %p388
      %p391 = scmp.ne.s32.totalorder %s374, %s390
      %p392 = scmp.eq.s32.totalorder %s40, 0
      %p393 = por %p391, %p392
      %s394 = ssub.s32 %s41, %s53
      %s395 = ssub.s32 %s42, %s49
      %s396 = sor.u32 %s394, %s395
      %p397 = scmp.eq.s32.totalorder %s396, 0
      %s399 = sadd.s32 %s398, 1
      %s400 = scalar_select %p397, %s398, %s399
      %p403 = pneg %p397
      %p404 = scmp.eq.s32.totalorder %s34, 3
      %p405 = por %p403, %p404
      %p406 = scmp.ne.s32.totalorder %s398, %s401
      %p407 = scmp.eq.s32.totalorder %s34, 0
      %p408 = por %p406, %p407
      %p409 = scmp.ne.s32.totalorder %s398, %s401
      %p410 = scmp.eq.s32.totalorder %s39, 3
      %p411 = por %p409, %p410
      %p412 = scmp.ne.s32.totalorder %s401, %s402
      %p413 = scmp.eq.s32.totalorder %s39, 0
      %p414 = por %p412, %p413
      %p415 = scmp.ne.s32.totalorder %s401, %s402
      %p416 = scmp.eq.s32.totalorder %s40, 3
      %p417 = por %p415, %p416
      %p419 = scmp.ne.s32.totalorder %s402, %s418
      %p420 = scmp.eq.s32.totalorder %s40, 0
      %p421 = por %p419, %p420
      %p422 = scmp.le.s32.totalorder 1, %s34
      %p423 = scmp.lt.s32.totalorder %s34, 5
      %p424 = pnand %p422, %p423
      %p425 = pneg %p424
      // Predicated region
      $region9: #{tpu_custom_call.1} parent=5 // pred_check
        _
      $region10: #{tpu_custom_call.1} parent=5 // pred_check_branch
        %427 = sbr.rel (%p424) target = $region12
      $region11: #{tpu_custom_call.1} parent=5 // pred_region
        %s428 = ssub.s32 %s34, 1
        // Predicated region
        $region13: #{tpu_custom_call.1} parent=11 // pred_check
          %p429 = pneg %p267
        $region14: #{tpu_custom_call.1} parent=11 // pred_check_branch
          %431 = sbr.rel (%p429) target = $region16
        $region15: #{tpu_custom_call.1} parent=11 // pred_region
          _
        $region16: #{tpu_custom_call.1} parent=11 // pred_fallthru
          _
        // Predicated region
        $region17: #{tpu_custom_call.1} parent=11 // pred_check
          %p432 = pneg %p288
        $region18: #{tpu_custom_call.1} parent=11 // pred_check_branch
          %434 = sbr.rel (%p432) target = $region20
        $region19: #{tpu_custom_call.1} parent=11 // pred_region
          _
        $region20: #{tpu_custom_call.1} parent=11 // pred_fallthru
          _
        // Predicated region
        $region21: #{tpu_custom_call.1} parent=11 // pred_check
          %p435 = pneg %p309
        $region22: #{tpu_custom_call.1} parent=11 // pred_check_branch
          %437 = sbr.rel (%p435) target = $region24
        $region23: #{tpu_custom_call.1} parent=11 // pred_region
          _
        $region24: #{tpu_custom_call.1} parent=11 // pred_fallthru
          _
        // Predicated region
        $region25: #{tpu_custom_call.1} parent=11 // pred_check
          %p438 = pneg %p330
        $region26: #{tpu_custom_call.1} parent=11 // pred_check_branch
          %440 = sbr.rel (%p438) target = $region28
        $region27: #{tpu_custom_call.1} parent=11 // pred_region
          _
        $region28: #{tpu_custom_call.1} parent=11 // pred_fallthru
          _
      $region12: #{tpu_custom_call.1} parent=5 // pred_fallthru
        _
      %p441 = scmp.lt.s32.totalorder %s34, 4
      // Predicated region
      $region29: #{tpu_custom_call.1} parent=5 // pred_check
        %p442 = pneg %p441
      $region30: #{tpu_custom_call.1} parent=5 // pred_check_branch
        %444 = sbr.rel (%p442) target = $region32
      $region31: #{tpu_custom_call.1} parent=5 // pred_region
        // Predicated region
        $region33: #{tpu_custom_call.1} parent=31 // pred_check
          %p445 = pneg %p68
        $region34: #{tpu_custom_call.1} parent=31 // pred_check_branch
          %447 = sbr.rel (%p445) target = $region36
        $region35: #{tpu_custom_call.1} parent=31 // pred_region
          %s448 = smul.u32 8, %s42
          %p449 = scmp.lt.s32.totalorder %s41, 1
          %s450 = scalar_select %p449, %s41, 1
          %p451 = scmp.lt.s32.totalorder %s448, 15
          %s452 = scalar_select %p451, %s448, 15
          %s453 = smul.addr %s452, 2
          %s454 = smul.addr %s450, 32
          %s455 = sadd.s32 %s453, %s454
          %s456 = smul.addr %s455, 4
          %s457 = scalar_lea.vmem %s0, %s456
          %s458 = smul.u32 8, %s42
        $region36: #{tpu_custom_call.1} parent=31 // pred_fallthru
          _
        // Predicated region
        $region37: #{tpu_custom_call.1} parent=31 // pred_check
          %p459 = pneg %p104
        $region38: #{tpu_custom_call.1} parent=31 // pred_check_branch
          %461 = sbr.rel (%p459) target = $region40
        $region39: #{tpu_custom_call.1} parent=31 // pred_region
          %s462 = smul.u32 %s42, 4
          %s463 = ssub.s32 %s462, 1
          %p464 = scmp.gt.s32.totalorder %s463, 0
          %s465 = scalar_select %p464, %s463, 0
          %s466 = smul.u32 2, %s465
          %p467 = scmp.lt.s32.totalorder %s41, 1
          %s468 = scalar_select %p467, %s41, 1
          %p469 = scmp.lt.s32.totalorder %s466, 15
          %s470 = scalar_select %p469, %s466, 15
          %s471 = smul.addr %s470, 2
          %s472 = smul.addr %s468, 32
          %s473 = sadd.s32 %s471, %s472
          %s474 = smul.addr %s473, 4
          %s475 = scalar_lea.vmem %s1, %s474
          %s476 = smul.u32 %s42, 4
          %s477 = ssub.s32 %s476, 1
          %p478 = scmp.gt.s32.totalorder %s477, 0
          %s479 = scalar_select %p478, %s477, 0
          %s480 = smul.u32 2, %s479
        $region40: #{tpu_custom_call.1} parent=31 // pred_fallthru
          _
        // Predicated region
        $region41: #{tpu_custom_call.1} parent=31 // pred_check
          %p481 = pneg %p140
        $region42: #{tpu_custom_call.1} parent=31 // pred_check_branch
          %483 = sbr.rel (%p481) target = $region44
        $region43: #{tpu_custom_call.1} parent=31 // pred_region
          %s484 = sand.u32 %s130, 1
          %s485 = scalar_lea.sflag [#allocation3], %s484
          %s486 = sand.u32 %s130, 1
          %s487 = smul.addr %s486, 16
          %s488 = scalar_lea.vmem [#allocation2], %s487
          %s489 = sadd.s32 %s42, 1
          %s490 = smul.u32 %s489, 4
          %p491 = scmp.lt.s32.totalorder %s490, 7
          %s492 = scalar_select %p491, %s490, 7
          %s493 = smul.u32 2, %s492
          %s495 = ssub.s32 256, 256
          %496 = vsyncadd %s485, %s495
          %s497 = smul.addr %s493, 2
          %s498 = smul.addr %s41, 32
          %s499 = sadd.s32 %s497, %s498
          %s500 = smul.addr %s499, 64
          %s501 = scalar_lea.hbm %s2, %s500
          %s502 = sshll.u32 %s488, 4
          %s503 = int_to_ptr.vmem [resolvable:$true] %s502
          %508 = dma.hbm_to_vmem [thread:$0]  %s501, 256, %s503, %s485, 64, 64, 4
        $region44: #{tpu_custom_call.1} parent=31 // pred_fallthru
          _
        // Predicated region
        $region45: #{tpu_custom_call.1} parent=31 // pred_check
          %p509 = pneg %p168
        $region46: #{tpu_custom_call.1} parent=31 // pred_check_branch
          %511 = sbr.rel (%p509) target = $region48
        $region47: #{tpu_custom_call.1} parent=31 // pred_region
          %s512 = sand.u32 %s34, 1
          %s513 = scalar_lea.sflag [#allocation6], %s512
          %s514 = sand.u32 %s158, 1
          %s515 = smul.addr %s514, 64
          %s516 = scalar_lea.vmem [#allocation5], %s515
          %s517 = smul.u32 8, %s42
          %s519 = ssub.s32 1024, 1024
          %520 = vsyncadd %s513, %s519
          %s521 = smul.addr %s517, 2
          %s522 = smul.addr %s41, 32
          %s523 = sadd.s32 %s521, %s522
          %s524 = smul.addr %s523, 64
          %s525 = scalar_lea.hbm %s3, %s524
          %s526 = sshll.u32 %s516, 4
          %s527 = int_to_ptr.vmem [resolvable:$true] %s526
          %532 = dma.hbm_to_vmem [thread:$0]  %s525, 1024, %s527, %s513, 64, 64, 4
        $region48: #{tpu_custom_call.1} parent=31 // pred_fallthru
          _
        // Predicated region
        $region49: #{tpu_custom_call.1} parent=31 // pred_check
          %p533 = pneg %p204
        $region50: #{tpu_custom_call.1} parent=31 // pred_check_branch
          %535 = sbr.rel (%p533) target = $region52
        $region51: #{tpu_custom_call.1} parent=31 // pred_region
          %s536 = sand.u32 %s34, 1
          %s537 = scalar_lea.sflag [#allocation6], %s536
          %s538 = sand.u32 %s194, 1
          %s539 = smul.addr %s538, 16
          %s540 = scalar_lea.vmem [#allocation7], %s539
          %s541 = smul.u32 %s42, 4
          %s542 = ssub.s32 %s541, 1
          %p543 = scmp.gt.s32.totalorder %s542, 0
          %s544 = scalar_select %p543, %s542, 0
          %s545 = smul.u32 2, %s544
          %s547 = ssub.s32 256, 256
          %548 = vsyncadd %s537, %s547
          %s549 = smul.addr %s545, 2
          %s550 = smul.addr %s41, 32
          %s551 = sadd.s32 %s549, %s550
          %s552 = smul.addr %s551, 64
          %s553 = scalar_lea.hbm %s4, %s552
          %s554 = sshll.u32 %s540, 4
          %s555 = int_to_ptr.vmem [resolvable:$true] %s554
          %560 = dma.hbm_to_vmem [thread:$0]  %s553, 256, %s555, %s537, 64, 64, 4
        $region52: #{tpu_custom_call.1} parent=31 // pred_fallthru
          _
        // Predicated region
        $region53: #{tpu_custom_call.1} parent=31 // pred_check
          %p561 = pneg %p240
        $region54: #{tpu_custom_call.1} parent=31 // pred_check_branch
          %563 = sbr.rel (%p561) target = $region56
        $region55: #{tpu_custom_call.1} parent=31 // pred_region
          %s564 = sand.u32 %s34, 1
          %s565 = scalar_lea.sflag [#allocation9], %s564
          %s566 = sand.u32 %s230, 1
          %s567 = smul.addr %s566, 16
          %s568 = scalar_lea.vmem [#allocation8], %s567
          %s569 = sadd.s32 %s42, 1
          %s570 = smul.u32 %s569, 4
          %p571 = scmp.lt.s32.totalorder %s570, 7
          %s572 = scalar_select %p571, %s570, 7
          %s573 = smul.u32 2, %s572
          %s575 = ssub.s32 256, 256
          %576 = vsyncadd %s565, %s575
          %s577 = smul.addr %s573, 2
          %s578 = smul.addr %s41, 32
          %s579 = sadd.s32 %s577, %s578
          %s580 = smul.addr %s579, 64
          %s581 = scalar_lea.hbm %s5, %s580
          %s582 = sshll.u32 %s568, 4
          %s583 = int_to_ptr.vmem [resolvable:$true] %s582
          %588 = dma.hbm_to_vmem [thread:$0]  %s581, 256, %s583, %s565, 64, 64, 4
        $region56: #{tpu_custom_call.1} parent=31 // pred_fallthru
          _
        // Predicated region
        $region57: #{tpu_custom_call.1} parent=31 // pred_check
          %p589 = pneg %p352
        $region58: #{tpu_custom_call.1} parent=31 // pred_check_branch
          %591 = sbr.rel (%p589) target = $region60
        $region59: #{tpu_custom_call.1} parent=31 // pred_region
          %s592 = sand.u32 %s34, 1
          %s593 = scalar_lea.sflag [#allocation9], %s592
          %s594 = sand.u32 %s342, 1
          %s595 = smul.addr %s594, 64
          %s596 = scalar_lea.vmem [#allocation10], %s595
          %s597 = smul.u32 8, %s42
          %s599 = ssub.s32 1024, 1024
          %600 = vsyncadd %s593, %s599
          %s601 = smul.addr %s597, 2
          %s602 = smul.addr %s41, 32
          %s603 = sadd.s32 %s601, %s602
          %s604 = smul.addr %s603, 64
          %s605 = scalar_lea.hbm %s10, %s604
          %s606 = sshll.u32 %s596, 4
          %s607 = int_to_ptr.vmem [resolvable:$true] %s606
          %612 = dma.hbm_to_vmem [thread:$0]  %s605, 1024, %s607, %s593, 64, 64, 4
        $region60: #{tpu_custom_call.1} parent=31 // pred_fallthru
          _
      $region32: #{tpu_custom_call.1} parent=5 // pred_fallthru
        _
      %p613 = scmp.le.s32.totalorder 1, %s34
      %p614 = scmp.lt.s32.totalorder %s34, 5
      %p615 = pnand %p613, %p614
      %p616 = pneg %p615
      // Predicated region
      $region61: #{tpu_custom_call.1} parent=5 // pred_check
        _
      $region62: #{tpu_custom_call.1} parent=5 // pred_check_branch
        %618 = sbr.rel (%p615) target = $region64
      $region63: #{tpu_custom_call.1} parent=5 // pred_region
        %s619 = ssub.s32 %s34, 1
        %s620 = sand.u32 %s133, 1
        %s621 = scalar_lea.sflag [#allocation3], %s620
        %s622 = sand.u32 %s133, 1
        %s623 = smul.addr %s622, 16
        %s624 = scalar_lea.vmem [#allocation2], %s623
        // Predicated region
        $region65: #{tpu_custom_call.1} parent=63 // pred_check
          %p625 = pneg %p146
        $region66: #{tpu_custom_call.1} parent=63 // pred_check_branch
          %627 = sbr.rel (%p625) target = $region68
        $region67: #{tpu_custom_call.1} parent=63 // pred_region
          %628 = dma.done %s621, 256
        $region68: #{tpu_custom_call.1} parent=63 // pred_fallthru
          _
        %s629 = sand.u32 %s39, 1
        %s630 = scalar_lea.sflag [#allocation6], %s629
        %s631 = sand.u32 %s161, 1
        %s632 = smul.addr %s631, 64
        %s633 = scalar_lea.vmem [#allocation5], %s632
        // Predicated region
        $region69: #{tpu_custom_call.1} parent=63 // pred_check
          %p634 = pneg %p174
        $region70: #{tpu_custom_call.1} parent=63 // pred_check_branch
          %636 = sbr.rel (%p634) target = $region72
        $region71: #{tpu_custom_call.1} parent=63 // pred_region
          %637 = dma.done %s630, 1024
        $region72: #{tpu_custom_call.1} parent=63 // pred_fallthru
          _
        %s638 = sand.u32 %s39, 1
        %s639 = scalar_lea.sflag [#allocation6], %s638
        %s640 = sand.u32 %s197, 1
        %s641 = smul.addr %s640, 16
        %s642 = scalar_lea.vmem [#allocation7], %s641
        // Predicated region
        $region73: #{tpu_custom_call.1} parent=63 // pred_check
          %p643 = pneg %p210
        $region74: #{tpu_custom_call.1} parent=63 // pred_check_branch
          %645 = sbr.rel (%p643) target = $region76
        $region75: #{tpu_custom_call.1} parent=63 // pred_region
          %646 = dma.done %s639, 256
        $region76: #{tpu_custom_call.1} parent=63 // pred_fallthru
          _
        %s647 = sand.u32 %s39, 1
        %s648 = scalar_lea.sflag [#allocation9], %s647
        %s649 = sand.u32 %s233, 1
        %s650 = smul.addr %s649, 16
        %s651 = scalar_lea.vmem [#allocation8], %s650
        // Predicated region
        $region77: #{tpu_custom_call.1} parent=63 // pred_check
          %p652 = pneg %p246
        $region78: #{tpu_custom_call.1} parent=63 // pred_check_branch
          %654 = sbr.rel (%p652) target = $region80
        $region79: #{tpu_custom_call.1} parent=63 // pred_region
          %655 = dma.done %s648, 256
        $region80: #{tpu_custom_call.1} parent=63 // pred_fallthru
          _
        %s656 = sand.u32 %s39, 1
        %s657 = scalar_lea.sflag [#allocation9], %s656
        %s658 = sand.u32 %s345, 1
        %s659 = smul.addr %s658, 64
        %s660 = scalar_lea.vmem [#allocation10], %s659
        // Predicated region
        $region81: #{tpu_custom_call.1} parent=63 // pred_check
          %p661 = pneg %p358
        $region82: #{tpu_custom_call.1} parent=63 // pred_check_branch
          %663 = sbr.rel (%p661) target = $region84
        $region83: #{tpu_custom_call.1} parent=63 // pred_region
          %664 = dma.done %s657, 1024
        $region84: #{tpu_custom_call.1} parent=63 // pred_fallthru
          _
        %s665 = smul.u32 8, %s44
        %p666 = scmp.lt.s32.totalorder %s43, 1
        %s667 = scalar_select %p666, %s43, 1
        %p668 = scmp.lt.s32.totalorder %s665, 15
        %s669 = scalar_select %p668, %s665, 15
        %s670 = smul.addr %s669, 2
        %s671 = smul.addr %s667, 32
        %s672 = sadd.s32 %s670, %s671
        %s673 = smul.addr %s672, 4
        %s674 = scalar_lea.vmem %s0, %s673
        %p675 = pneg %p74
        %p676 = pneg %p71
        %s677 = smul.u32 %s44, 4
        %s678 = ssub.s32 %s677, 1
        %p679 = scmp.gt.s32.totalorder %s678, 0
        %s680 = scalar_select %p679, %s678, 0
        %s681 = smul.u32 2, %s680
        %p682 = scmp.lt.s32.totalorder %s43, 1
        %s683 = scalar_select %p682, %s43, 1
        %p684 = scmp.lt.s32.totalorder %s681, 15
        %s685 = scalar_select %p684, %s681, 15
        %s686 = smul.addr %s685, 2
        %s687 = smul.addr %s683, 32
        %s688 = sadd.s32 %s686, %s687
        %s689 = smul.addr %s688, 4
        %s690 = scalar_lea.vmem %s1, %s689
        %p691 = pneg %p110
        %p692 = pneg %p107
        %s693 = sand.u32 %s133, 1
        %s694 = scalar_lea.sflag [#allocation3], %s693
        %s695 = sand.u32 %s133, 1
        %s696 = smul.addr %s695, 16
        %s697 = scalar_lea.vmem [#allocation2], %s696
        %p698 = pneg %p146
        %p699 = pneg %p143
        %s700 = sand.u32 %s39, 1
        %s701 = scalar_lea.sflag [#allocation6], %s700
        %s702 = sand.u32 %s161, 1
        %s703 = smul.addr %s702, 64
        %s704 = scalar_lea.vmem [#allocation5], %s703
        %p705 = pneg %p174
        %p706 = pneg %p171
        %s707 = sand.u32 %s39, 1
        %s708 = scalar_lea.sflag [#allocation6], %s707
        %s709 = sand.u32 %s197, 1
        %s710 = smul.addr %s709, 16
        %s711 = scalar_lea.vmem [#allocation7], %s710
        %p712 = pneg %p210
        %p713 = pneg %p207
        %s714 = sand.u32 %s39, 1
        %s715 = scalar_lea.sflag [#allocation9], %s714
        %s716 = sand.u32 %s233, 1
        %s717 = smul.addr %s716, 16
        %s718 = scalar_lea.vmem [#allocation8], %s717
        %p719 = pneg %p246
        %p720 = pneg %p243
        %p721 = pneg %p267
        %p722 = pneg %p264
        %p723 = pneg %p288
        %p724 = pneg %p285
        %p725 = pneg %p309
        %p726 = pneg %p306
        %p727 = pneg %p330
        %p728 = pneg %p327
        %s729 = sand.u32 %s39, 1
        %s730 = scalar_lea.sflag [#allocation9], %s729
        %s731 = sand.u32 %s345, 1
        %s732 = smul.addr %s731, 64
        %s733 = scalar_lea.vmem [#allocation10], %s732
        %p734 = pneg %p358
        %p735 = pneg %p355
        %p736 = pneg %p386
        %p737 = pneg %p383
        %s738 = sand.u32 %s373, 1
        %s739 = scalar_lea.sflag [#allocation4], %s738
        %s740 = sand.u32 %s373, 1
        %s741 = smul.addr %s740, 64
        %s742 = scalar_lea.vmem [#allocation11], %s741
        %p743 = pneg %p414
        %p744 = pneg %p411
        %s745 = sand.u32 %s401, 1
        %s746 = scalar_lea.sflag [#allocation13], %s745
        %s747 = sand.u32 %s401, 1
        %s748 = smul.addr %s747, 64
        %s749 = scalar_lea.vmem [#allocation12], %s748
        %s750 = smul.u32 8, %s44
        %p751 = scmp.lt.s32.totalorder %s43, 1
        %s752 = scalar_select %p751, %s43, 1
        %p753 = scmp.lt.s32.totalorder %s750, 15
        %s754 = scalar_select %p753, %s750, 15
        %s755 = smul.addr %s754, 2
        %s756 = smul.addr %s752, 32
        %s757 = sadd.s32 %s755, %s756
        %s758 = smul.addr %s757, 4
        %s759 = scalar_lea.vmem %s0, %s758
        %s760 = smul.u32 8, %s44
        %s761 = smul.u32 %s44, 4
        %s762 = ssub.s32 %s761, 1
        %p763 = scmp.gt.s32.totalorder %s762, 0
        %s764 = scalar_select %p763, %s762, 0
        %s765 = smul.u32 2, %s764
        %p766 = scmp.lt.s32.totalorder %s43, 1
        %s767 = scalar_select %p766, %s43, 1
        %p768 = scmp.lt.s32.totalorder %s765, 15
        %s769 = scalar_select %p768, %s765, 15
        %s770 = smul.addr %s769, 2
        %s771 = smul.addr %s767, 32
        %s772 = sadd.s32 %s770, %s771
        %s773 = smul.addr %s772, 4
        %s774 = scalar_lea.vmem %s1, %s773
        %s775 = smul.u32 %s44, 4
        %s776 = ssub.s32 %s775, 1
        %p777 = scmp.gt.s32.totalorder %s776, 0
        %s778 = scalar_select %p777, %s776, 0
        %s779 = smul.u32 2, %s778
        %s780 = sadd.s32 %s44, 1
        %s781 = smul.u32 %s780, 4
        %p782 = scmp.lt.s32.totalorder %s781, 7
        %s783 = scalar_select %p782, %s781, 7
        %s784 = smul.u32 2, %s783
        %s785 = smul.u32 8, %s44
        %s786 = smul.u32 %s44, 4
        %s787 = ssub.s32 %s786, 1
        %p788 = scmp.gt.s32.totalorder %s787, 0
        %s789 = scalar_select %p788, %s787, 0
        %s790 = smul.u32 2, %s789
        %s791 = sadd.s32 %s44, 1
        %s792 = smul.u32 %s791, 4
        %p793 = scmp.lt.s32.totalorder %s792, 7
        %s794 = scalar_select %p793, %s792, 7
        %s795 = smul.u32 2, %s794
        %s796 = smul.u32 8, %s44
        %s797 = smul.u32 8, %s44
        %s798 = smul.u32 8, %s44
        %v800 = vld [vmem:[%s759] sm:$0xf]
        %v801 = vld [vmem:[%s759 + $0x4] sm:$0xf]
        %v802 = vld [vmem:[%s759 + $0x8] sm:$0xf]
        %v803 = vld [vmem:[%s759 + $0xc] sm:$0xf]
        %v804 = vld [vmem:[%s759 + $0x10] sm:$0xf]
        %v805 = vld [vmem:[%s759 + $0x14] sm:$0xf]
        %v806 = vld [vmem:[%s759 + $0x18] sm:$0xf]
        %v807 = vld [vmem:[%s759 + $0x1c] sm:$0xf]
        %v808 = vld [vmem:[%s759 + $0x20] sm:$0xf]
        %v809 = vld [vmem:[%s759 + $0x24] sm:$0xf]
        %v810 = vld [vmem:[%s759 + $0x28] sm:$0xf]
        %v811 = vld [vmem:[%s759 + $0x2c] sm:$0xf]
        %v812 = vld [vmem:[%s759 + $0x30] sm:$0xf]
        %v813 = vld [vmem:[%s759 + $0x34] sm:$0xf]
        %v814 = vld [vmem:[%s759 + $0x38] sm:$0xf]
        %v815 = vld [vmem:[%s759 + $0x3c] sm:$0xf]
        %v816 = vld [vmem:[%s774] sm:$0xf]
        %v817 = vld [vmem:[%s774 + $0x4] sm:$0xf]
        %v818 = vld [vmem:[%s774 + $0x8] sm:$0xf]
        %v819 = vld [vmem:[%s774 + $0xc] sm:$0xf]
        %v820 = vld [vmem:[%s624] sm:$0xf]
        %v821 = vld [vmem:[%s624 + $0x4] sm:$0xf]
        %v822 = vld [vmem:[%s624 + $0x8] sm:$0xf]
        %v823 = vld [vmem:[%s624 + $0xc] sm:$0xf]
        %p824 = scmp.eq.s32.totalorder %s44, 0
        %s825 = scalar_select %p824, 0.0, 1.0
        %p827 = scmp.ne.f32.partialorder %s825, %s825
        %s828 = sshrl.u32 %s825, 16
        %s829 = sand.u32 %s828, 1
        %s830 = sadd.s32 32767, %s829
        %s831 = sadd.s32 %s825, %s830
        %s832 = sand.u32 %s831, 4294901760
        %s833 = scalar_select %p827, 2143289344, %s832
        %s835 = sshrl.u32 %s833, 16
        %p836 = scmp.eq.s32.totalorder %s44, 1
        %s837 = scalar_select %p836, 0.0, 1.0
        %p839 = scmp.ne.f32.partialorder %s837, %s837
        %s840 = sshrl.u32 %s837, 16
        %s841 = sand.u32 %s840, 1
        %s842 = sadd.s32 32767, %s841
        %s843 = sadd.s32 %s837, %s842
        %s844 = sand.u32 %s843, 4294901760
        %s845 = scalar_select %p839, 2143289344, %s844
        %s847 = sshrl.u32 %s845, 16
        %s848 = sshll.u32 %s835, 16
        %s849 = sor.u32 %s835, %s848
        %v850 = vstv %s849
        %v852 = vmul.bf16 %v816, %v850
        %v853 = vmul.bf16 %v817, %v850
        %v854 = vmul.bf16 %v818, %v850
        %v855 = vmul.bf16 %v819, %v850
        %s856 = sshll.u32 %s847, 16
        %s857 = sor.u32 %s847, %s856
        %v858 = vstv %s857
        %v860 = vmul.bf16 %v820, %v858
        %v861 = vmul.bf16 %v821, %v858
        %v862 = vmul.bf16 %v822, %v858
        %v863 = vmul.bf16 %v823, %v858
        %v888 = vunpack.c.l.b16 %v852
        %v889 = vunpack.c.l.b16 %v853
        %v890 = vunpack.c.l.b16 %v854
        %v891 = vunpack.c.l.b16 %v855
        %v892 = vunpack.c.l.b16 %v800
        %v893 = vunpack.c.l.b16 %v801
        %v894 = vunpack.c.l.b16 %v802
        %v895 = vunpack.c.l.b16 %v803
        %v896 = vunpack.c.l.b16 %v804
        %v897 = vunpack.c.l.b16 %v805
        %v898 = vunpack.c.l.b16 %v806
        %v899 = vunpack.c.l.b16 %v807
        %v900 = vunpack.c.l.b16 %v808
        %v901 = vunpack.c.l.b16 %v809
        %v902 = vunpack.c.l.b16 %v810
        %v903 = vunpack.c.l.b16 %v811
        %v904 = vunpack.c.l.b16 %v812
        %v905 = vunpack.c.l.b16 %v813
        %v906 = vunpack.c.l.b16 %v814
        %v907 = vunpack.c.l.b16 %v815
        %v908 = vunpack.c.l.b16 %v860
        %v909 = vunpack.c.l.b16 %v861
        %v910 = vunpack.c.l.b16 %v862
        %v911 = vunpack.c.l.b16 %v863
        %v912 = vpack.c.b16 %v889, %v888
        %v913 = vpack.c.b16 %v891, %v890
        %v914 = vpack.c.b16 %v893, %v892
        %v915 = vpack.c.b16 %v895, %v894
        %v916 = vpack.c.b16 %v897, %v896
        %v917 = vpack.c.b16 %v899, %v898
        %v918 = vpack.c.b16 %v901, %v900
        %v919 = vpack.c.b16 %v903, %v902
        %v920 = vpack.c.b16 %v905, %v904
        %v921 = vpack.c.b16 %v907, %v906
        %v922 = vpack.c.b16 %v909, %v908
        %v923 = vpack.c.b16 %v911, %v910
        %v924 = vrot.slane %v912, 7
        %v925 = vrot.slane %v913, 7
        %v926 = vrot.slane %v914, 7
        %v927 = vrot.slane %v915, 7
        %v928 = vrot.slane %v916, 7
        %v929 = vrot.slane %v917, 7
        %v930 = vrot.slane %v918, 7
        %v931 = vrot.slane %v919, 7
        %v932 = vrot.slane %v920, 7
        %v933 = vrot.slane %v921, 7
        %v934 = vrot.slane %v922, 7
        %v935 = vrot.slane %v923, 7
        %vm936 = vcmask 1040384
        %v939 = vsel %vm936, 0, %v924
        %v941 = vsel %vm936, 0, %v925
        %v943 = vsel %vm936, 0, %v926
        %v945 = vsel %vm936, 0, %v927
        %v947 = vsel %vm936, 0, %v928
        %v949 = vsel %vm936, 0, %v929
        %v951 = vsel %vm936, 0, %v930
        %v953 = vsel %vm936, 0, %v931
        %v955 = vsel %vm936, 0, %v932
        %v957 = vsel %vm936, 0, %v933
        %v959 = vsel %vm936, 0, %v934
        %v961 = vsel %vm936, 0, %v935
        %v962 = vsel %vm936, %v924, 0
        %v963 = vsel %vm936, %v925, 0
        %v964 = vsel %vm936, %v926, 0
        %v965 = vsel %vm936, %v927, 0
        %v966 = vsel %vm936, %v928, 0
        %v967 = vsel %vm936, %v929, 0
        %v968 = vsel %vm936, %v930, 0
        %v969 = vsel %vm936, %v931, 0
        %v970 = vsel %vm936, %v932, 0
        %v971 = vsel %vm936, %v933, 0
        %v972 = vsel %vm936, %v934, 0
        %v973 = vsel %vm936, %v935, 0
        %v974 = vld [vmem:[%s633] sm:$0xf]
        %v975 = vld [vmem:[%s633 + $0x4] sm:$0xf]
        %v976 = vld [vmem:[%s633 + $0x8] sm:$0xf]
        %v977 = vld [vmem:[%s633 + $0xc] sm:$0xf]
        %v978 = vld [vmem:[%s633 + $0x10] sm:$0xf]
        %v979 = vld [vmem:[%s633 + $0x14] sm:$0xf]
        %v980 = vld [vmem:[%s633 + $0x18] sm:$0xf]
        %v981 = vld [vmem:[%s633 + $0x1c] sm:$0xf]
        %v982 = vld [vmem:[%s633 + $0x20] sm:$0xf]
        %v983 = vld [vmem:[%s633 + $0x24] sm:$0xf]
        %v984 = vld [vmem:[%s633 + $0x28] sm:$0xf]
        %v985 = vld [vmem:[%s633 + $0x2c] sm:$0xf]
        %v986 = vld [vmem:[%s633 + $0x30] sm:$0xf]
        %v987 = vld [vmem:[%s633 + $0x34] sm:$0xf]
        %v988 = vld [vmem:[%s633 + $0x38] sm:$0xf]
        %v989 = vld [vmem:[%s633 + $0x3c] sm:$0xf]
        %v990 = vld [vmem:[%s642] sm:$0xf]
        %v991 = vld [vmem:[%s642 + $0x4] sm:$0xf]
        %v992 = vld [vmem:[%s642 + $0x8] sm:$0xf]
        %v993 = vld [vmem:[%s642 + $0xc] sm:$0xf]
        %v994 = vld [vmem:[%s651] sm:$0xf]
        %v995 = vld [vmem:[%s651 + $0x4] sm:$0xf]
        %v996 = vld [vmem:[%s651 + $0x8] sm:$0xf]
        %v997 = vld [vmem:[%s651 + $0xc] sm:$0xf]
        %v998 = vmul.bf16 %v990, %v850
        %v999 = vmul.bf16 %v991, %v850
        %v1000 = vmul.bf16 %v992, %v850
        %v1001 = vmul.bf16 %v993, %v850
        %v1002 = vmul.bf16 %v994, %v858
        %v1003 = vmul.bf16 %v995, %v858
        %v1004 = vmul.bf16 %v996, %v858
        %v1005 = vmul.bf16 %v997, %v858
        %v1030 = vunpack.c.l.b16 %v998
        %v1031 = vunpack.c.l.b16 %v999
        %v1032 = vunpack.c.l.b16 %v1000
        %v1033 = vunpack.c.l.b16 %v1001
        %v1034 = vunpack.c.l.b16 %v974
        %v1035 = vunpack.c.l.b16 %v975
        %v1036 = vunpack.c.l.b16 %v976
        %v1037 = vunpack.c.l.b16 %v977
        %v1038 = vunpack.c.l.b16 %v978
        %v1039 = vunpack.c.l.b16 %v979
        %v1040 = vunpack.c.l.b16 %v980
        %v1041 = vunpack.c.l.b16 %v981
        %v1042 = vunpack.c.l.b16 %v982
        %v1043 = vunpack.c.l.b16 %v983
        %v1044 = vunpack.c.l.b16 %v984
        %v1045 = vunpack.c.l.b16 %v985
        %v1046 = vunpack.c.l.b16 %v986
        %v1047 = vunpack.c.l.b16 %v987
        %v1048 = vunpack.c.l.b16 %v988
        %v1049 = vunpack.c.l.b16 %v989
        %v1050 = vunpack.c.l.b16 %v1002
        %v1051 = vunpack.c.l.b16 %v1003
        %v1052 = vunpack.c.l.b16 %v1004
        %v1053 = vunpack.c.l.b16 %v1005
        %v1054 = vpack.c.b16 %v1031, %v1030
        %v1055 = vpack.c.b16 %v1033, %v1032
        %v1056 = vpack.c.b16 %v1035, %v1034
        %v1057 = vpack.c.b16 %v1037, %v1036
        %v1058 = vpack.c.b16 %v1039, %v1038
        %v1059 = vpack.c.b16 %v1041, %v1040
        %v1060 = vpack.c.b16 %v1043, %v1042
        %v1061 = vpack.c.b16 %v1045, %v1044
        %v1062 = vpack.c.b16 %v1047, %v1046
        %v1063 = vpack.c.b16 %v1049, %v1048
        %v1064 = vpack.c.b16 %v1051, %v1050
        %v1065 = vpack.c.b16 %v1053, %v1052
        %v1066 = vrot.slane %v1054, 7
        %v1067 = vrot.slane %v1055, 7
        %v1068 = vrot.slane %v1056, 7
        %v1069 = vrot.slane %v1057, 7
        %v1070 = vrot.slane %v1058, 7
        %v1071 = vrot.slane %v1059, 7
        %v1072 = vrot.slane %v1060, 7
        %v1073 = vrot.slane %v1061, 7
        %v1074 = vrot.slane %v1062, 7
        %v1075 = vrot.slane %v1063, 7
        %v1076 = vrot.slane %v1064, 7
        %v1077 = vrot.slane %v1065, 7
        %v1079 = vsel %vm936, 0, %v1066
        %v1081 = vsel %vm936, 0, %v1067
        %v1083 = vsel %vm936, 0, %v1068
        %v1085 = vsel %vm936, 0, %v1069
        %v1087 = vsel %vm936, 0, %v1070
        %v1089 = vsel %vm936, 0, %v1071
        %v1091 = vsel %vm936, 0, %v1072
        %v1093 = vsel %vm936, 0, %v1073
        %v1095 = vsel %vm936, 0, %v1074
        %v1097 = vsel %vm936, 0, %v1075
        %v1099 = vsel %vm936, 0, %v1076
        %v1101 = vsel %vm936, 0, %v1077
        %v1102 = vsel %vm936, %v1066, 0
        %v1103 = vsel %vm936, %v1067, 0
        %v1104 = vsel %vm936, %v1068, 0
        %v1105 = vsel %vm936, %v1069, 0
        %v1106 = vsel %vm936, %v1070, 0
        %v1107 = vsel %vm936, %v1071, 0
        %v1108 = vsel %vm936, %v1072, 0
        %v1109 = vsel %vm936, %v1073, 0
        %v1110 = vsel %vm936, %v1074, 0
        %v1111 = vsel %vm936, %v1075, 0
        %v1112 = vsel %vm936, %v1076, 0
        %v1113 = vsel %vm936, %v1077, 0
        %vm1130 = vcmask 1046528
        %v1131 = vrot.slane %v939, 1
        %v1132 = vrot.slane %v962, 1
        %v1133 = vsel %vm1130, %v1131, %v1132
        %v1134 = vrot.slane %v941, 1
        %v1135 = vrot.slane %v963, 1
        %v1136 = vsel %vm1130, %v1134, %v1135
        %v1137 = vrot.slane %v943, 1
        %v1138 = vrot.slane %v964, 1
        %v1139 = vsel %vm1130, %v1137, %v1138
        %v1140 = vrot.slane %v945, 1
        %v1141 = vrot.slane %v965, 1
        %v1142 = vsel %vm1130, %v1140, %v1141
        %v1143 = vrot.slane %v947, 1
        %v1144 = vrot.slane %v966, 1
        %v1145 = vsel %vm1130, %v1143, %v1144
        %v1146 = vrot.slane %v949, 1
        %v1147 = vrot.slane %v967, 1
        %v1148 = vsel %vm1130, %v1146, %v1147
        %v1149 = vrot.slane %v951, 1
        %v1150 = vrot.slane %v968, 1
        %v1151 = vsel %vm1130, %v1149, %v1150
        %v1152 = vrot.slane %v953, 1
        %v1153 = vrot.slane %v969, 1
        %v1154 = vsel %vm1130, %v1152, %v1153
        %v1171 = vrot.slane %v1079, 1
        %v1172 = vrot.slane %v1102, 1
        %v1173 = vsel %vm1130, %v1171, %v1172
        %v1174 = vrot.slane %v1081, 1
        %v1175 = vrot.slane %v1103, 1
        %v1176 = vsel %vm1130, %v1174, %v1175
        %v1177 = vrot.slane %v1083, 1
        %v1178 = vrot.slane %v1104, 1
        %v1179 = vsel %vm1130, %v1177, %v1178
        %v1180 = vrot.slane %v1085, 1
        %v1181 = vrot.slane %v1105, 1
        %v1182 = vsel %vm1130, %v1180, %v1181
        %v1183 = vrot.slane %v1087, 1
        %v1184 = vrot.slane %v1106, 1
        %v1185 = vsel %vm1130, %v1183, %v1184
        %v1186 = vrot.slane %v1089, 1
        %v1187 = vrot.slane %v1107, 1
        %v1188 = vsel %vm1130, %v1186, %v1187
        %v1189 = vrot.slane %v1091, 1
        %v1190 = vrot.slane %v1108, 1
        %v1191 = vsel %vm1130, %v1189, %v1190
        %v1192 = vrot.slane %v1093, 1
        %v1193 = vrot.slane %v1109, 1
        %v1194 = vsel %vm1130, %v1192, %v1193
        %vm1195 = vcmask 1045504
        %v1196 = vrot.slane %v939, 2
        %v1197 = vrot.slane %v962, 2
        %v1198 = vsel %vm1195, %v1196, %v1197
        %v1199 = vrot.slane %v941, 2
        %v1200 = vrot.slane %v963, 2
        %v1201 = vsel %vm1195, %v1199, %v1200
        %v1202 = vrot.slane %v943, 2
        %v1203 = vrot.slane %v964, 2
        %v1204 = vsel %vm1195, %v1202, %v1203
        %v1205 = vrot.slane %v945, 2
        %v1206 = vrot.slane %v965, 2
        %v1207 = vsel %vm1195, %v1205, %v1206
        %v1208 = vrot.slane %v947, 2
        %v1209 = vrot.slane %v966, 2
        %v1210 = vsel %vm1195, %v1208, %v1209
        %v1211 = vrot.slane %v949, 2
        %v1212 = vrot.slane %v967, 2
        %v1213 = vsel %vm1195, %v1211, %v1212
        %v1214 = vrot.slane %v951, 2
        %v1215 = vrot.slane %v968, 2
        %v1216 = vsel %vm1195, %v1214, %v1215
        %v1217 = vrot.slane %v953, 2
        %v1218 = vrot.slane %v969, 2
        %v1219 = vsel %vm1195, %v1217, %v1218
        %v1220 = vrot.slane %v1079, 2
        %v1221 = vrot.slane %v1102, 2
        %v1222 = vsel %vm1195, %v1220, %v1221
        %v1223 = vrot.slane %v1081, 2
        %v1224 = vrot.slane %v1103, 2
        %v1225 = vsel %vm1195, %v1223, %v1224
        %v1226 = vrot.slane %v1083, 2
        %v1227 = vrot.slane %v1104, 2
        %v1228 = vsel %vm1195, %v1226, %v1227
        %v1229 = vrot.slane %v1085, 2
        %v1230 = vrot.slane %v1105, 2
        %v1231 = vsel %vm1195, %v1229, %v1230
        %v1232 = vrot.slane %v1087, 2
        %v1233 = vrot.slane %v1106, 2
        %v1234 = vsel %vm1195, %v1232, %v1233
        %v1235 = vrot.slane %v1089, 2
        %v1236 = vrot.slane %v1107, 2
        %v1237 = vsel %vm1195, %v1235, %v1236
        %v1238 = vrot.slane %v1091, 2
        %v1239 = vrot.slane %v1108, 2
        %v1240 = vsel %vm1195, %v1238, %v1239
        %v1241 = vrot.slane %v1093, 2
        %v1242 = vrot.slane %v1109, 2
        %v1243 = vsel %vm1195, %v1241, %v1242
        %v1248 = vrot.slane %v955, 1
        %v1249 = vrot.slane %v970, 1
        %v1250 = vsel %vm1130, %v1248, %v1249
        %v1251 = vrot.slane %v957, 1
        %v1252 = vrot.slane %v971, 1
        %v1253 = vsel %vm1130, %v1251, %v1252
        %v1258 = vrot.slane %v1095, 1
        %v1259 = vrot.slane %v1110, 1
        %v1260 = vsel %vm1130, %v1258, %v1259
        %v1261 = vrot.slane %v1097, 1
        %v1262 = vrot.slane %v1111, 1
        %v1263 = vsel %vm1130, %v1261, %v1262
        %v1264 = vrot.slane %v955, 2
        %v1265 = vrot.slane %v970, 2
        %v1266 = vsel %vm1195, %v1264, %v1265
        %v1267 = vrot.slane %v957, 2
        %v1268 = vrot.slane %v971, 2
        %v1269 = vsel %vm1195, %v1267, %v1268
        %v1270 = vrot.slane %v1095, 2
        %v1271 = vrot.slane %v1110, 2
        %v1272 = vsel %vm1195, %v1270, %v1271
        %v1273 = vrot.slane %v1097, 2
        %v1274 = vrot.slane %v1111, 2
        %v1275 = vsel %vm1195, %v1273, %v1274
        %v1280 = vrot.slane %v959, 1
        %v1281 = vrot.slane %v972, 1
        %v1282 = vsel %vm1130, %v1280, %v1281
        %v1283 = vrot.slane %v961, 1
        %v1284 = vrot.slane %v973, 1
        %v1285 = vsel %vm1130, %v1283, %v1284
        %v1290 = vrot.slane %v1099, 1
        %v1291 = vrot.slane %v1112, 1
        %v1292 = vsel %vm1130, %v1290, %v1291
        %v1293 = vrot.slane %v1101, 1
        %v1294 = vrot.slane %v1113, 1
        %v1295 = vsel %vm1130, %v1293, %v1294
        %v1296 = vrot.slane %v959, 2
        %v1297 = vrot.slane %v972, 2
        %v1298 = vsel %vm1195, %v1296, %v1297
        %v1299 = vrot.slane %v961, 2
        %v1300 = vrot.slane %v973, 2
        %v1301 = vsel %vm1195, %v1299, %v1300
        %v1302 = vrot.slane %v1099, 2
        %v1303 = vrot.slane %v1112, 2
        %v1304 = vsel %vm1195, %v1302, %v1303
        %v1305 = vrot.slane %v1101, 2
        %v1306 = vrot.slane %v1113, 2
        %v1307 = vsel %vm1195, %v1305, %v1306
        %1308 = vrot.lane.b32.xlu0 %v1079, 32
        %v1309 = vpop.permute.xlu0 %1308
        %1310 = vrot.lane.b32.xlu0 %v1081, 32
        %v1311 = vpop.permute.xlu0 %1310
        %1312 = vrot.lane.b32.xlu0 %v1083, 32
        %v1313 = vpop.permute.xlu0 %1312
        %1314 = vrot.lane.b32.xlu0 %v1085, 32
        %v1315 = vpop.permute.xlu0 %1314
        %1316 = vrot.lane.b32.xlu0 %v1087, 32
        %v1317 = vpop.permute.xlu0 %1316
        %1318 = vrot.lane.b32.xlu0 %v1089, 32
        %v1319 = vpop.permute.xlu0 %1318
        %1320 = vrot.lane.b32.xlu0 %v1091, 32
        %v1321 = vpop.permute.xlu0 %1320
        %1322 = vrot.lane.b32.xlu0 %v1093, 32
        %v1323 = vpop.permute.xlu0 %1322
        %1324 = vrot.lane.b32.xlu0 %v1133, 96
        %v1325 = vpop.permute.xlu0 %1324
        %1326 = vrot.lane.b32.xlu0 %v1136, 96
        %v1327 = vpop.permute.xlu0 %1326
        %1328 = vrot.lane.b32.xlu0 %v1139, 96
        %v1329 = vpop.permute.xlu0 %1328
        %1330 = vrot.lane.b32.xlu0 %v1142, 96
        %v1331 = vpop.permute.xlu0 %1330
        %1332 = vrot.lane.b32.xlu0 %v1145, 96
        %v1333 = vpop.permute.xlu0 %1332
        %1334 = vrot.lane.b32.xlu0 %v1148, 96
        %v1335 = vpop.permute.xlu0 %1334
        %1336 = vrot.lane.b32.xlu0 %v1151, 96
        %v1337 = vpop.permute.xlu0 %1336
        %1338 = vrot.lane.b32.xlu0 %v1154, 96
        %v1339 = vpop.permute.xlu0 %1338
        %1340 = vrot.lane.b32.xlu0 %v1198, 64
        %v1341 = vpop.permute.xlu0 %1340
        %1342 = vrot.lane.b32.xlu0 %v1201, 64
        %v1343 = vpop.permute.xlu0 %1342
        %1344 = vrot.lane.b32.xlu0 %v1204, 64
        %v1345 = vpop.permute.xlu0 %1344
        %1346 = vrot.lane.b32.xlu0 %v1207, 64
        %v1347 = vpop.permute.xlu0 %1346
        %1348 = vrot.lane.b32.xlu0 %v1210, 64
        %v1349 = vpop.permute.xlu0 %1348
        %1350 = vrot.lane.b32.xlu0 %v1213, 64
        %v1351 = vpop.permute.xlu0 %1350
        %1352 = vrot.lane.b32.xlu0 %v1216, 64
        %v1353 = vpop.permute.xlu0 %1352
        %1354 = vrot.lane.b32.xlu0 %v1219, 64
        %v1355 = vpop.permute.xlu0 %1354
        %1356 = vrot.lane.b32.xlu0 %v1222, 96
        %v1357 = vpop.permute.xlu0 %1356
        %1358 = vrot.lane.b32.xlu0 %v1225, 96
        %v1359 = vpop.permute.xlu0 %1358
        %1360 = vrot.lane.b32.xlu0 %v1228, 96
        %v1361 = vpop.permute.xlu0 %1360
        %1362 = vrot.lane.b32.xlu0 %v1231, 96
        %v1363 = vpop.permute.xlu0 %1362
        %1364 = vrot.lane.b32.xlu0 %v1234, 96
        %v1365 = vpop.permute.xlu0 %1364
        %1366 = vrot.lane.b32.xlu0 %v1237, 96
        %v1367 = vpop.permute.xlu0 %1366
        %1368 = vrot.lane.b32.xlu0 %v1240, 96
        %v1369 = vpop.permute.xlu0 %1368
        %1370 = vrot.lane.b32.xlu0 %v1243, 96
        %v1371 = vpop.permute.xlu0 %1370
        %1372 = vrot.lane.b32.xlu0 %v943, 32
        %v1373 = vpop.permute.xlu0 %1372
        %1374 = vrot.lane.b32.xlu0 %v945, 32
        %v1375 = vpop.permute.xlu0 %1374
        %1376 = vrot.lane.b32.xlu0 %v947, 32
        %v1377 = vpop.permute.xlu0 %1376
        %1378 = vrot.lane.b32.xlu0 %v949, 32
        %v1379 = vpop.permute.xlu0 %1378
        %1380 = vrot.lane.b32.xlu0 %v951, 32
        %v1381 = vpop.permute.xlu0 %1380
        %1382 = vrot.lane.b32.xlu0 %v953, 32
        %v1383 = vpop.permute.xlu0 %1382
        %1384 = vrot.lane.b32.xlu0 %v955, 32
        %v1385 = vpop.permute.xlu0 %1384
        %1386 = vrot.lane.b32.xlu0 %v957, 32
        %v1387 = vpop.permute.xlu0 %1386
        %1388 = vrot.lane.b32.xlu0 %v1083, 64
        %v1389 = vpop.permute.xlu0 %1388
        %1390 = vrot.lane.b32.xlu0 %v1085, 64
        %v1391 = vpop.permute.xlu0 %1390
        %1392 = vrot.lane.b32.xlu0 %v1087, 64
        %v1393 = vpop.permute.xlu0 %1392
        %1394 = vrot.lane.b32.xlu0 %v1089, 64
        %v1395 = vpop.permute.xlu0 %1394
        %1396 = vrot.lane.b32.xlu0 %v1091, 64
        %v1397 = vpop.permute.xlu0 %1396
        %1398 = vrot.lane.b32.xlu0 %v1093, 64
        %v1399 = vpop.permute.xlu0 %1398
        %1400 = vrot.lane.b32.xlu0 %v1095, 64
        %v1401 = vpop.permute.xlu0 %1400
        %1402 = vrot.lane.b32.xlu0 %v1097, 64
        %v1403 = vpop.permute.xlu0 %1402
        %1404 = vrot.lane.b32.xlu0 %v1179, 32
        %v1405 = vpop.permute.xlu0 %1404
        %1406 = vrot.lane.b32.xlu0 %v1182, 32
        %v1407 = vpop.permute.xlu0 %1406
        %1408 = vrot.lane.b32.xlu0 %v1185, 32
        %v1409 = vpop.permute.xlu0 %1408
        %1410 = vrot.lane.b32.xlu0 %v1188, 32
        %v1411 = vpop.permute.xlu0 %1410
        %1412 = vrot.lane.b32.xlu0 %v1191, 32
        %v1413 = vpop.permute.xlu0 %1412
        %1414 = vrot.lane.b32.xlu0 %v1194, 32
        %v1415 = vpop.permute.xlu0 %1414
        %1416 = vrot.lane.b32.xlu0 %v1260, 32
        %v1417 = vpop.permute.xlu0 %1416
        %1418 = vrot.lane.b32.xlu0 %v1263, 32
        %v1419 = vpop.permute.xlu0 %1418
        %1420 = vrot.lane.b32.xlu0 %v1204, 96
        %v1421 = vpop.permute.xlu0 %1420
        %1422 = vrot.lane.b32.xlu0 %v1207, 96
        %v1423 = vpop.permute.xlu0 %1422
        %1424 = vrot.lane.b32.xlu0 %v1210, 96
        %v1425 = vpop.permute.xlu0 %1424
        %1426 = vrot.lane.b32.xlu0 %v1213, 96
        %v1427 = vpop.permute.xlu0 %1426
        %1428 = vrot.lane.b32.xlu0 %v1216, 96
        %v1429 = vpop.permute.xlu0 %1428
        %1430 = vrot.lane.b32.xlu0 %v1219, 96
        %v1431 = vpop.permute.xlu0 %1430
        %1432 = vrot.lane.b32.xlu0 %v1266, 96
        %v1433 = vpop.permute.xlu0 %1432
        %1434 = vrot.lane.b32.xlu0 %v1269, 96
        %v1435 = vpop.permute.xlu0 %1434
        %1436 = vrot.lane.b32.xlu0 %v947, 64
        %v1437 = vpop.permute.xlu0 %1436
        %1438 = vrot.lane.b32.xlu0 %v949, 64
        %v1439 = vpop.permute.xlu0 %1438
        %1440 = vrot.lane.b32.xlu0 %v951, 64
        %v1441 = vpop.permute.xlu0 %1440
        %1442 = vrot.lane.b32.xlu0 %v953, 64
        %v1443 = vpop.permute.xlu0 %1442
        %1444 = vrot.lane.b32.xlu0 %v955, 64
        %v1445 = vpop.permute.xlu0 %1444
        %1446 = vrot.lane.b32.xlu0 %v957, 64
        %v1447 = vpop.permute.xlu0 %1446
        %1448 = vrot.lane.b32.xlu0 %v959, 64
        %v1449 = vpop.permute.xlu0 %1448
        %1450 = vrot.lane.b32.xlu0 %v961, 64
        %v1451 = vpop.permute.xlu0 %1450
        %1452 = vrot.lane.b32.xlu0 %v1087, 96
        %v1453 = vpop.permute.xlu0 %1452
        %1454 = vrot.lane.b32.xlu0 %v1089, 96
        %v1455 = vpop.permute.xlu0 %1454
        %1456 = vrot.lane.b32.xlu0 %v1091, 96
        %v1457 = vpop.permute.xlu0 %1456
        %1458 = vrot.lane.b32.xlu0 %v1093, 96
        %v1459 = vpop.permute.xlu0 %1458
        %1460 = vrot.lane.b32.xlu0 %v1095, 96
        %v1461 = vpop.permute.xlu0 %1460
        %1462 = vrot.lane.b32.xlu0 %v1097, 96
        %v1463 = vpop.permute.xlu0 %1462
        %1464 = vrot.lane.b32.xlu0 %v1099, 96
        %v1465 = vpop.permute.xlu0 %1464
        %1466 = vrot.lane.b32.xlu0 %v1101, 96
        %v1467 = vpop.permute.xlu0 %1466
        %1468 = vrot.lane.b32.xlu0 %v1145, 32
        %v1469 = vpop.permute.xlu0 %1468
        %1470 = vrot.lane.b32.xlu0 %v1148, 32
        %v1471 = vpop.permute.xlu0 %1470
        %1472 = vrot.lane.b32.xlu0 %v1151, 32
        %v1473 = vpop.permute.xlu0 %1472
        %1474 = vrot.lane.b32.xlu0 %v1154, 32
        %v1475 = vpop.permute.xlu0 %1474
        %1476 = vrot.lane.b32.xlu0 %v1250, 32
        %v1477 = vpop.permute.xlu0 %1476
        %1478 = vrot.lane.b32.xlu0 %v1253, 32
        %v1479 = vpop.permute.xlu0 %1478
        %1480 = vrot.lane.b32.xlu0 %v1282, 32
        %v1481 = vpop.permute.xlu0 %1480
        %1482 = vrot.lane.b32.xlu0 %v1285, 32
        %v1483 = vpop.permute.xlu0 %1482
        %1484 = vrot.lane.b32.xlu0 %v1185, 64
        %v1485 = vpop.permute.xlu0 %1484
        %1486 = vrot.lane.b32.xlu0 %v1188, 64
        %v1487 = vpop.permute.xlu0 %1486
        %1488 = vrot.lane.b32.xlu0 %v1191, 64
        %v1489 = vpop.permute.xlu0 %1488
        %1490 = vrot.lane.b32.xlu0 %v1194, 64
        %v1491 = vpop.permute.xlu0 %1490
        %1492 = vrot.lane.b32.xlu0 %v1260, 64
        %v1493 = vpop.permute.xlu0 %1492
        %1494 = vrot.lane.b32.xlu0 %v1263, 64
        %v1495 = vpop.permute.xlu0 %1494
        %1496 = vrot.lane.b32.xlu0 %v1292, 64
        %v1497 = vpop.permute.xlu0 %1496
        %1498 = vrot.lane.b32.xlu0 %v1295, 64
        %v1499 = vpop.permute.xlu0 %1498
        %vm1500 = vcmask 261120
        %v1502 = vsel %vm1500, %v939, %v1309
        %v1504 = vsel %vm1500, %v941, %v1311
        %v1506 = vsel %vm1500, %v943, %v1313
        %v1508 = vsel %vm1500, %v945, %v1315
        %v1510 = vsel %vm1500, %v947, %v1317
        %v1512 = vsel %vm1500, %v949, %v1319
        %v1514 = vsel %vm1500, %v951, %v1321
        %v1516 = vsel %vm1500, %v953, %v1323
        %vm1517 = vcmask 785408
        %v1519 = vsel %vm1517, %v1502, %v1325
        %v1522 = vsel %vm1517, %v1504, %v1327
        %v1525 = vsel %vm1517, %v1506, %v1329
        %v1528 = vsel %vm1517, %v1508, %v1331
        %v1531 = vsel %vm1517, %v1510, %v1333
        %v1534 = vsel %vm1517, %v1512, %v1335
        %v1537 = vsel %vm1517, %v1514, %v1337
        %v1540 = vsel %vm1517, %v1516, %v1339
        %vm1542 = vcmask 523264
        %v1545 = vsel %vm1542, %v1173, %v1341
        %v1548 = vsel %vm1542, %v1176, %v1343
        %v1551 = vsel %vm1542, %v1179, %v1345
        %v1554 = vsel %vm1542, %v1182, %v1347
        %v1557 = vsel %vm1542, %v1185, %v1349
        %v1560 = vsel %vm1542, %v1188, %v1351
        %v1563 = vsel %vm1542, %v1191, %v1353
        %v1566 = vsel %vm1542, %v1194, %v1355
        %v1568 = vsel %vm1517, %v1545, %v1357
        %v1571 = vsel %vm1517, %v1548, %v1359
        %v1574 = vsel %vm1517, %v1551, %v1361
        %v1577 = vsel %vm1517, %v1554, %v1363
        %v1580 = vsel %vm1517, %v1557, %v1365
        %v1583 = vsel %vm1517, %v1560, %v1367
        %v1586 = vsel %vm1517, %v1563, %v1369
        %v1589 = vsel %vm1517, %v1566, %v1371
        %v1592 = vsel %vm1500, %v1357, %v1373
        %v1594 = vsel %vm1500, %v1359, %v1375
        %v1596 = vsel %vm1500, %v1361, %v1377
        %v1598 = vsel %vm1500, %v1363, %v1379
        %v1600 = vsel %vm1500, %v1365, %v1381
        %v1602 = vsel %vm1500, %v1367, %v1383
        %v1604 = vsel %vm1500, %v1369, %v1385
        %v1606 = vsel %vm1500, %v1371, %v1387
        %v1608 = vsel %vm1542, %v1592, %v1389
        %v1611 = vsel %vm1542, %v1594, %v1391
        %v1614 = vsel %vm1542, %v1596, %v1393
        %v1617 = vsel %vm1542, %v1598, %v1395
        %v1620 = vsel %vm1542, %v1600, %v1397
        %v1623 = vsel %vm1542, %v1602, %v1399
        %v1626 = vsel %vm1542, %v1604, %v1401
        %v1629 = vsel %vm1542, %v1606, %v1403
        %v1633 = vsel %vm1500, %v1139, %v1405
        %v1636 = vsel %vm1500, %v1142, %v1407
        %v1639 = vsel %vm1500, %v1145, %v1409
        %v1642 = vsel %vm1500, %v1148, %v1411
        %v1645 = vsel %vm1500, %v1151, %v1413
        %v1648 = vsel %vm1500, %v1154, %v1415
        %v1651 = vsel %vm1500, %v1250, %v1417
        %v1654 = vsel %vm1500, %v1253, %v1419
        %v1656 = vsel %vm1517, %v1633, %v1421
        %v1659 = vsel %vm1517, %v1636, %v1423
        %v1662 = vsel %vm1517, %v1639, %v1425
        %v1665 = vsel %vm1517, %v1642, %v1427
        %v1668 = vsel %vm1517, %v1645, %v1429
        %v1671 = vsel %vm1517, %v1648, %v1431
        %v1674 = vsel %vm1517, %v1651, %v1433
        %v1677 = vsel %vm1517, %v1654, %v1435
        %v1681 = vsel %vm1542, %v1228, %v1437
        %v1684 = vsel %vm1542, %v1231, %v1439
        %v1687 = vsel %vm1542, %v1234, %v1441
        %v1690 = vsel %vm1542, %v1237, %v1443
        %v1693 = vsel %vm1542, %v1240, %v1445
        %v1696 = vsel %vm1542, %v1243, %v1447
        %v1699 = vsel %vm1542, %v1272, %v1449
        %v1702 = vsel %vm1542, %v1275, %v1451
        %v1704 = vsel %vm1517, %v1681, %v1453
        %v1707 = vsel %vm1517, %v1684, %v1455
        %v1710 = vsel %vm1517, %v1687, %v1457
        %v1713 = vsel %vm1517, %v1690, %v1459
        %v1716 = vsel %vm1517, %v1693, %v1461
        %v1719 = vsel %vm1517, %v1696, %v1463
        %v1722 = vsel %vm1517, %v1699, %v1465
        %v1725 = vsel %vm1517, %v1702, %v1467
        %v1728 = vsel %vm1500, %v1453, %v1469
        %v1730 = vsel %vm1500, %v1455, %v1471
        %v1732 = vsel %vm1500, %v1457, %v1473
        %v1734 = vsel %vm1500, %v1459, %v1475
        %v1736 = vsel %vm1500, %v1461, %v1477
        %v1738 = vsel %vm1500, %v1463, %v1479
        %v1740 = vsel %vm1500, %v1465, %v1481
        %v1742 = vsel %vm1500, %v1467, %v1483
        %v1744 = vsel %vm1542, %v1728, %v1485
        %v1747 = vsel %vm1542, %v1730, %v1487
        %v1750 = vsel %vm1542, %v1732, %v1489
        %v1753 = vsel %vm1542, %v1734, %v1491
        %v1756 = vsel %vm1542, %v1736, %v1493
        %v1759 = vsel %vm1542, %v1738, %v1495
        %v1762 = vsel %vm1542, %v1740, %v1497
        %v1765 = vsel %vm1542, %v1742, %v1499
        %1767 = vrot.lane.b32.xlu0 %v1234, 32
        %v1768 = vpop.permute.xlu0 %1767
        %1769 = vrot.lane.b32.xlu0 %v1237, 32
        %v1770 = vpop.permute.xlu0 %1769
        %1771 = vrot.lane.b32.xlu0 %v1240, 32
        %v1772 = vpop.permute.xlu0 %1771
        %1773 = vrot.lane.b32.xlu0 %v1243, 32
        %v1774 = vpop.permute.xlu0 %1773
        %1775 = vrot.lane.b32.xlu0 %v1272, 32
        %v1776 = vpop.permute.xlu0 %1775
        %1777 = vrot.lane.b32.xlu0 %v1275, 32
        %v1778 = vpop.permute.xlu0 %1777
        %1779 = vrot.lane.b32.xlu0 %v1304, 32
        %v1780 = vpop.permute.xlu0 %1779
        %1781 = vrot.lane.b32.xlu0 %v1307, 32
        %v1782 = vpop.permute.xlu0 %1781
        %v1785 = vsel %vm1500, %v1210, %v1768
        %v1788 = vsel %vm1500, %v1213, %v1770
        %v1791 = vsel %vm1500, %v1216, %v1772
        %v1794 = vsel %vm1500, %v1219, %v1774
        %v1797 = vsel %vm1500, %v1266, %v1776
        %v1800 = vsel %vm1500, %v1269, %v1778
        %v1803 = vsel %vm1500, %v1298, %v1780
        %v1806 = vsel %vm1500, %v1301, %v1782
        %v1807 = vld [vmem:[%s6] sm:$0xf]
        %v1808 = vld [vmem:[%s6 + $0x4] sm:$0xf]
        %v1809 = vld [vmem:[%s6 + $0x8] sm:$0xf]
        %v1810 = vld [vmem:[%s6 + $0xc] sm:$0xf]
        %v1811 = vld [vmem:[%s6 + $0x10] sm:$0xf]
        %v1812 = vld [vmem:[%s6 + $0x14] sm:$0xf]
        %v1813 = vld [vmem:[%s6 + $0x18] sm:$0xf]
        %v1814 = vld [vmem:[%s6 + $0x1c] sm:$0xf]
        %v1815 = vld [vmem:[%s6 + $0x20] sm:$0xf]
        %v1816 = vld [vmem:[%s6 + $0x24] sm:$0xf]
        %v1817 = vld [vmem:[%s6 + $0x28] sm:$0xf]
        %v1818 = vld [vmem:[%s6 + $0x2c] sm:$0xf]
        %v1819 = vld [vmem:[%s6 + $0x30] sm:$0xf]
        %v1820 = vld [vmem:[%s6 + $0x34] sm:$0xf]
        %v1821 = vld [vmem:[%s6 + $0x38] sm:$0xf]
        %v1822 = vld [vmem:[%s6 + $0x3c] sm:$0xf]
        %v1823 = vld [vmem:[%s6 + $0x40] sm:$0xf]
        %v1824 = vld [vmem:[%s6 + $0x44] sm:$0xf]
        %v1825 = vld [vmem:[%s6 + $0x48] sm:$0xf]
        %v1826 = vld [vmem:[%s6 + $0x4c] sm:$0xf]
        %v1827 = vld [vmem:[%s6 + $0x50] sm:$0xf]
        %v1828 = vld [vmem:[%s6 + $0x54] sm:$0xf]
        %v1829 = vld [vmem:[%s6 + $0x58] sm:$0xf]
        %v1830 = vld [vmem:[%s6 + $0x5c] sm:$0xf]
        %v1831 = vld [vmem:[%s6 + $0x60] sm:$0xf]
        %v1832 = vld [vmem:[%s6 + $0x64] sm:$0xf]
        %v1833 = vld [vmem:[%s6 + $0x68] sm:$0xf]
        %v1834 = vld [vmem:[%s6 + $0x6c] sm:$0xf]
        %v1835 = vld [vmem:[%s6 + $0x70] sm:$0xf]
        %v1836 = vld [vmem:[%s6 + $0x74] sm:$0xf]
        %v1837 = vld [vmem:[%s6 + $0x78] sm:$0xf]
        %v1838 = vld [vmem:[%s6 + $0x7c] sm:$0xf]
        %v1839 = vld [vmem:[%s6 + $0x80] sm:$0xf]
        %v1840 = vld [vmem:[%s6 + $0x84] sm:$0xf]
        %v1841 = vld [vmem:[%s6 + $0x88] sm:$0xf]
        %v1842 = vld [vmem:[%s6 + $0x8c] sm:$0xf]
        %v1843 = vld [vmem:[%s6 + $0x90] sm:$0xf]
        %v1844 = vld [vmem:[%s6 + $0x94] sm:$0xf]
        %v1845 = vld [vmem:[%s6 + $0x98] sm:$0xf]
        %v1846 = vld [vmem:[%s6 + $0x9c] sm:$0xf]
        %v1847 = vld [vmem:[%s6 + $0xa0] sm:$0xf]
        %v1848 = vld [vmem:[%s6 + $0xa4] sm:$0xf]
        %v1849 = vld [vmem:[%s6 + $0xa8] sm:$0xf]
        %v1850 = vld [vmem:[%s6 + $0xac] sm:$0xf]
        %v1851 = vld [vmem:[%s6 + $0xb0] sm:$0xf]
        %v1852 = vld [vmem:[%s6 + $0xb4] sm:$0xf]
        %v1853 = vld [vmem:[%s6 + $0xb8] sm:$0xf]
        %v1854 = vld [vmem:[%s6 + $0xbc] sm:$0xf]
        %v1855 = vld [vmem:[%s6 + $0xc0] sm:$0xf]
        %v1856 = vld [vmem:[%s6 + $0xc4] sm:$0xf]
        %v1857 = vld [vmem:[%s6 + $0xc8] sm:$0xf]
        %v1858 = vld [vmem:[%s6 + $0xcc] sm:$0xf]
        %v1859 = vld [vmem:[%s6 + $0xd0] sm:$0xf]
        %v1860 = vld [vmem:[%s6 + $0xd4] sm:$0xf]
        %v1861 = vld [vmem:[%s6 + $0xd8] sm:$0xf]
        %v1862 = vld [vmem:[%s6 + $0xdc] sm:$0xf]
        %v1863 = vld [vmem:[%s6 + $0xe0] sm:$0xf]
        %v1864 = vld [vmem:[%s6 + $0xe4] sm:$0xf]
        %v1865 = vld [vmem:[%s6 + $0xe8] sm:$0xf]
        %v1866 = vld [vmem:[%s6 + $0xec] sm:$0xf]
        %v1867 = vld [vmem:[%s6 + $0xf0] sm:$0xf]
        %v1868 = vld [vmem:[%s6 + $0xf4] sm:$0xf]
        %v1869 = vld [vmem:[%s6 + $0xf8] sm:$0xf]
        %v1870 = vld [vmem:[%s6 + $0xfc] sm:$0xf]
        %v1871 = vld [vmem:[%s6 + $0x100] sm:$0xf]
        %v1872 = vld [vmem:[%s6 + $0x104] sm:$0xf]
        %v1873 = vld [vmem:[%s6 + $0x108] sm:$0xf]
        %v1874 = vld [vmem:[%s6 + $0x10c] sm:$0xf]
        %v1875 = vld [vmem:[%s6 + $0x110] sm:$0xf]
        %v1876 = vld [vmem:[%s6 + $0x114] sm:$0xf]
        %v1877 = vld [vmem:[%s6 + $0x118] sm:$0xf]
        %v1878 = vld [vmem:[%s6 + $0x11c] sm:$0xf]
        %v1879 = vld [vmem:[%s6 + $0x120] sm:$0xf]
        %v1880 = vld [vmem:[%s6 + $0x124] sm:$0xf]
        %v1881 = vld [vmem:[%s6 + $0x128] sm:$0xf]
        %v1882 = vld [vmem:[%s6 + $0x12c] sm:$0xf]
        %v1883 = vld [vmem:[%s6 + $0x130] sm:$0xf]
        %v1884 = vld [vmem:[%s6 + $0x134] sm:$0xf]
        %v1885 = vld [vmem:[%s6 + $0x138] sm:$0xf]
        %v1886 = vld [vmem:[%s6 + $0x13c] sm:$0xf]
        %v1887 = vld [vmem:[%s6 + $0x140] sm:$0xf]
        %v1888 = vld [vmem:[%s6 + $0x144] sm:$0xf]
        %v1889 = vld [vmem:[%s6 + $0x148] sm:$0xf]
        %v1890 = vld [vmem:[%s6 + $0x14c] sm:$0xf]
        %v1891 = vld [vmem:[%s6 + $0x150] sm:$0xf]
        %v1892 = vld [vmem:[%s6 + $0x154] sm:$0xf]
        %v1893 = vld [vmem:[%s6 + $0x158] sm:$0xf]
        %v1894 = vld [vmem:[%s6 + $0x15c] sm:$0xf]
        %v1895 = vld [vmem:[%s6 + $0x160] sm:$0xf]
        %v1896 = vld [vmem:[%s6 + $0x164] sm:$0xf]
        %v1897 = vld [vmem:[%s6 + $0x168] sm:$0xf]
        %v1898 = vld [vmem:[%s6 + $0x16c] sm:$0xf]
        %v1899 = vld [vmem:[%s6 + $0x170] sm:$0xf]
        %v1900 = vld [vmem:[%s6 + $0x174] sm:$0xf]
        %v1901 = vld [vmem:[%s6 + $0x178] sm:$0xf]
        %v1902 = vld [vmem:[%s6 + $0x17c] sm:$0xf]
        %v1903 = vld [vmem:[%s6 + $0x180] sm:$0xf]
        %v1904 = vld [vmem:[%s6 + $0x184] sm:$0xf]
        %v1905 = vld [vmem:[%s6 + $0x188] sm:$0xf]
        %v1906 = vld [vmem:[%s6 + $0x18c] sm:$0xf]
        %v1907 = vld [vmem:[%s6 + $0x190] sm:$0xf]
        %v1908 = vld [vmem:[%s6 + $0x194] sm:$0xf]
        %v1909 = vld [vmem:[%s6 + $0x198] sm:$0xf]
        %v1910 = vld [vmem:[%s6 + $0x19c] sm:$0xf]
        %v1911 = vld [vmem:[%s6 + $0x1a0] sm:$0xf]
        %v1912 = vld [vmem:[%s6 + $0x1a4] sm:$0xf]
        %v1913 = vld [vmem:[%s6 + $0x1a8] sm:$0xf]
        %v1914 = vld [vmem:[%s6 + $0x1ac] sm:$0xf]
        %v1915 = vld [vmem:[%s7] sm:$0x7]
        %v1916 = vlaneseq
        %v1917 = vshrl.u32 %v1916, 7
        %v1918 = vsub.s32 0, %v1917
        %v1919 = vrot.slane %v1915, %v1918
        %v2028 = vunpack.c.l.b16 %v1807
        %v2029 = vunpack.c.l.b16 %v1808
        %v2030 = vunpack.c.l.b16 %v1809
        %v2031 = vunpack.c.l.b16 %v1810
        %v2032 = vunpack.c.l.b16 %v1811
        %v2033 = vunpack.c.l.b16 %v1812
        %v2034 = vunpack.c.l.b16 %v1813
        %v2035 = vunpack.c.l.b16 %v1814
        %v2036 = vunpack.c.l.b16 %v1815
        %v2037 = vunpack.c.l.b16 %v1816
        %v2038 = vunpack.c.l.b16 %v1817
        %v2039 = vunpack.c.l.b16 %v1818
        %v2040 = vunpack.c.l.b16 %v1819
        %v2041 = vunpack.c.l.b16 %v1820
        %v2042 = vunpack.c.l.b16 %v1821
        %v2043 = vunpack.c.l.b16 %v1822
        %v2044 = vunpack.c.l.b16 %v1823
        %v2045 = vunpack.c.l.b16 %v1824
        %v2046 = vunpack.c.l.b16 %v1825
        %v2047 = vunpack.c.l.b16 %v1826
        %v2048 = vunpack.c.l.b16 %v1827
        %v2049 = vunpack.c.l.b16 %v1828
        %v2050 = vunpack.c.l.b16 %v1829
        %v2051 = vunpack.c.l.b16 %v1830
        %v2052 = vunpack.c.l.b16 %v1831
        %v2053 = vunpack.c.l.b16 %v1832
        %v2054 = vunpack.c.l.b16 %v1833
        %v2055 = vunpack.c.l.b16 %v1834
        %v2056 = vunpack.c.l.b16 %v1835
        %v2057 = vunpack.c.l.b16 %v1836
        %v2058 = vunpack.c.l.b16 %v1837
        %v2059 = vunpack.c.l.b16 %v1838
        %v2060 = vunpack.c.l.b16 %v1839
        %v2061 = vunpack.c.l.b16 %v1840
        %v2062 = vunpack.c.l.b16 %v1841
        %v2063 = vunpack.c.l.b16 %v1842
        %v2064 = vunpack.c.l.b16 %v1843
        %v2065 = vunpack.c.l.b16 %v1844
        %v2066 = vunpack.c.l.b16 %v1845
        %v2067 = vunpack.c.l.b16 %v1846
        %v2068 = vunpack.c.l.b16 %v1847
        %v2069 = vunpack.c.l.b16 %v1848
        %v2070 = vunpack.c.l.b16 %v1849
        %v2071 = vunpack.c.l.b16 %v1850
        %v2072 = vunpack.c.l.b16 %v1851
        %v2073 = vunpack.c.l.b16 %v1852
        %v2074 = vunpack.c.l.b16 %v1853
        %v2075 = vunpack.c.l.b16 %v1854
        %v2076 = vunpack.c.l.b16 %v1855
        %v2077 = vunpack.c.l.b16 %v1856
        %v2078 = vunpack.c.l.b16 %v1857
        %v2079 = vunpack.c.l.b16 %v1858
        %v2080 = vunpack.c.l.b16 %v1859
        %v2081 = vunpack.c.l.b16 %v1860
        %v2082 = vunpack.c.l.b16 %v1861
        %v2083 = vunpack.c.l.b16 %v1862
        %v2084 = vunpack.c.l.b16 %v1863
        %v2085 = vunpack.c.l.b16 %v1864
        %v2086 = vunpack.c.l.b16 %v1865
        %v2087 = vunpack.c.l.b16 %v1866
        %v2088 = vunpack.c.l.b16 %v1867
        %v2089 = vunpack.c.l.b16 %v1868
        %v2090 = vunpack.c.l.b16 %v1869
        %v2091 = vunpack.c.l.b16 %v1870
        %v2092 = vunpack.c.l.b16 %v1871
        %v2093 = vunpack.c.l.b16 %v1872
        %v2094 = vunpack.c.l.b16 %v1873
        %v2095 = vunpack.c.l.b16 %v1874
        %v2096 = vunpack.c.l.b16 %v1875
        %v2097 = vunpack.c.l.b16 %v1876
        %v2098 = vunpack.c.l.b16 %v1877
        %v2099 = vunpack.c.l.b16 %v1878
        %v2100 = vunpack.c.l.b16 %v1879
        %v2101 = vunpack.c.l.b16 %v1880
        %v2102 = vunpack.c.l.b16 %v1881
        %v2103 = vunpack.c.l.b16 %v1882
        %v2104 = vunpack.c.l.b16 %v1883
        %v2105 = vunpack.c.l.b16 %v1884
        %v2106 = vunpack.c.l.b16 %v1885
        %v2107 = vunpack.c.l.b16 %v1886
        %v2108 = vunpack.c.l.b16 %v1887
        %v2109 = vunpack.c.l.b16 %v1888
        %v2110 = vunpack.c.l.b16 %v1889
        %v2111 = vunpack.c.l.b16 %v1890
        %v2112 = vunpack.c.l.b16 %v1891
        %v2113 = vunpack.c.l.b16 %v1892
        %v2114 = vunpack.c.l.b16 %v1893
        %v2115 = vunpack.c.l.b16 %v1894
        %v2116 = vunpack.c.l.b16 %v1895
        %v2117 = vunpack.c.l.b16 %v1896
        %v2118 = vunpack.c.l.b16 %v1897
        %v2119 = vunpack.c.l.b16 %v1898
        %v2120 = vunpack.c.l.b16 %v1899
        %v2121 = vunpack.c.l.b16 %v1900
        %v2122 = vunpack.c.l.b16 %v1901
        %v2123 = vunpack.c.l.b16 %v1902
        %v2124 = vunpack.c.l.b16 %v1903
        %v2125 = vunpack.c.l.b16 %v1904
        %v2126 = vunpack.c.l.b16 %v1905
        %v2127 = vunpack.c.l.b16 %v1906
        %v2128 = vunpack.c.l.b16 %v1907
        %v2129 = vunpack.c.l.b16 %v1908
        %v2130 = vunpack.c.l.b16 %v1909
        %v2131 = vunpack.c.l.b16 %v1910
        %v2132 = vunpack.c.l.b16 %v1911
        %v2133 = vunpack.c.l.b16 %v1912
        %v2134 = vunpack.c.l.b16 %v1913
        %v2135 = vunpack.c.l.b16 %v1914
        %v2136 = vpack.c.b16 %v2029, %v2028
        %v2137 = vpack.c.b16 %v2031, %v2030
        %v2138 = vpack.c.b16 %v2033, %v2032
        %v2139 = vpack.c.b16 %v2035, %v2034
        %v2140 = vpack.c.b16 %v2037, %v2036
        %v2141 = vpack.c.b16 %v2039, %v2038
        %v2142 = vpack.c.b16 %v2041, %v2040
        %v2143 = vpack.c.b16 %v2043, %v2042
        %v2144 = vpack.c.b16 %v2045, %v2044
        %v2145 = vpack.c.b16 %v2047, %v2046
        %v2146 = vpack.c.b16 %v2049, %v2048
        %v2147 = vpack.c.b16 %v2051, %v2050
        %v2148 = vpack.c.b16 %v2053, %v2052
        %v2149 = vpack.c.b16 %v2055, %v2054
        %v2150 = vpack.c.b16 %v2057, %v2056
        %v2151 = vpack.c.b16 %v2059, %v2058
        %v2152 = vpack.c.b16 %v2061, %v2060
        %v2153 = vpack.c.b16 %v2063, %v2062
        %v2154 = vpack.c.b16 %v2065, %v2064
        %v2155 = vpack.c.b16 %v2067, %v2066
        %v2156 = vpack.c.b16 %v2069, %v2068
        %v2157 = vpack.c.b16 %v2071, %v2070
        %v2158 = vpack.c.b16 %v2073, %v2072
        %v2159 = vpack.c.b16 %v2075, %v2074
        %v2160 = vpack.c.b16 %v2077, %v2076
        %v2161 = vpack.c.b16 %v2079, %v2078
        %v2162 = vpack.c.b16 %v2081, %v2080
        %v2163 = vpack.c.b16 %v2083, %v2082
        %v2164 = vpack.c.b16 %v2085, %v2084
        %v2165 = vpack.c.b16 %v2087, %v2086
        %v2166 = vpack.c.b16 %v2089, %v2088
        %v2167 = vpack.c.b16 %v2091, %v2090
        %v2168 = vpack.c.b16 %v2093, %v2092
        %v2169 = vpack.c.b16 %v2095, %v2094
        %v2170 = vpack.c.b16 %v2097, %v2096
        %v2171 = vpack.c.b16 %v2099, %v2098
        %v2172 = vpack.c.b16 %v2101, %v2100
        %v2173 = vpack.c.b16 %v2103, %v2102
        %v2174 = vpack.c.b16 %v2105, %v2104
        %v2175 = vpack.c.b16 %v2107, %v2106
        %v2176 = vpack.c.b16 %v2109, %v2108
        %v2177 = vpack.c.b16 %v2111, %v2110
        %v2178 = vpack.c.b16 %v2113, %v2112
        %v2179 = vpack.c.b16 %v2115, %v2114
        %v2180 = vpack.c.b16 %v2117, %v2116
        %v2181 = vpack.c.b16 %v2119, %v2118
        %v2182 = vpack.c.b16 %v2121, %v2120
        %v2183 = vpack.c.b16 %v2123, %v2122
        %v2184 = vpack.c.b16 %v2125, %v2124
        %v2185 = vpack.c.b16 %v2127, %v2126
        %v2186 = vpack.c.b16 %v2129, %v2128
        %v2187 = vpack.c.b16 %v2131, %v2130
        %v2188 = vpack.c.b16 %v2133, %v2132
        %v2189 = vpack.c.b16 %v2135, %v2134
        %v2244 = vsel %vm1517, %v1785, 0
        %v2246 = vsel %vm1517, %v1788, 0
        %v2248 = vsel %vm1517, %v1791, 0
        %v2250 = vsel %vm1517, %v1794, 0
        %v2252 = vsel %vm1517, %v1797, 0
        %v2254 = vsel %vm1517, %v1800, 0
        %v2256 = vsel %vm1517, %v1803, 0
        %v2258 = vsel %vm1517, %v1806, 0
        %2260 = vmatprep.subr.bf16.mxu0 0
        %2261 = vmatpush1.bf16.msra.mxu0 %v2136
        %2262 = vmatprep.subr.bf16.mxu0 0
        %2263 = vmatpush1.bf16.msra.mxu0 %v2137
        %2264 = vmatprep.subr.bf16.mxu0 0
        %2265 = vmatpush1.bf16.msra.mxu0 %v2138
        %2266 = vmatprep.subr.bf16.mxu0 0
        %2267 = vmatpush1.bf16.msra.mxu0 %v2139
        %2268 = vmatprep.subr.bf16.mxu0 0
        %2269 = vmatpush1.bf16.msra.mxu0 %v2140
        %2270 = vmatprep.subr.bf16.mxu0 0
        %2271 = vmatpush1.bf16.msra.mxu0 %v2141
        %2272 = vmatprep.subr.bf16.mxu0 0
        %2273 = vmatpush1.bf16.msra.mxu0 %v2142
        %2274 = vmatprep.subr.bf16.mxu0 0
        %2275 = vmatpush1.bf16.msra.mxu0 %v2143
        %2276 = vmatprep.subr.bf16.mxu0 0
        %2277 = vmatpush1.bf16.msra.mxu0 %v2144
        %2278 = vmatprep.subr.bf16.mxu0 0
        %2279 = vmatpush1.bf16.msra.mxu0 %v2145
        %2280 = vmatprep.subr.bf16.mxu0 0
        %2281 = vmatpush1.bf16.msra.mxu0 %v2146
        %2282 = vmatprep.subr.bf16.mxu0 0
        %2283 = vmatpush1.bf16.msra.mxu0 %v2147
        %2284 = vmatprep.subr.bf16.mxu0 0
        %2285 = vmatpush1.bf16.msra.mxu0 %v2148
        %2286 = vmatprep.subr.bf16.mxu0 0
        %2287 = vmatpush1.bf16.msra.mxu0 %v2149
        %2288 = vmatprep.subr.bf16.mxu0 0
        %2289 = vmatpush1.bf16.msra.mxu0 %v2150
        %2290 = vmatprep.subr.bf16.mxu0 0
        %2291 = vmatpush1.bf16.msra.mxu0 %v2151
        %2292 = vmatprep.mubr.bf16.mxu0 %v1568
        %2293 = vmatmul.mubr.bf16.gmra.mrb[0].mxu0 %v1519
        %v2294 = vpop.f32.mrb[0].mxu0
        %v2295 = vadd.f32 %v1919, %v2294
        %v2296 = vpop.f32.mrb[0].mxu0
        %v2297 = vpop.f32.mrb[0].mxu0
        %v2298 = vadd.f32 %v1919, %v2297
        %v2299 = vpop.f32.mrb[0].mxu0
        %2300 = vmatprep.mubr.bf16.mxu0 %v1571
        %2301 = vmatmul.mubr.bf16.gmra.mrb[0].mxu0 %v1522
        %v2302 = vpop.f32.mrb[0].mxu0
        %v2303 = vadd.f32 %v1919, %v2302
        %v2304 = vpop.f32.mrb[0].mxu0
        %v2305 = vpop.f32.mrb[0].mxu0
        %v2306 = vadd.f32 %v1919, %v2305
        %v2307 = vpop.f32.mrb[0].mxu0
        %2308 = vmatprep.mubr.bf16.mxu0 %v1574
        %2309 = vmatmul.mubr.bf16.gmra.mrb[0].mxu0 %v1525
        %v2310 = vpop.f32.mrb[0].mxu0
        %v2311 = vadd.f32 %v1919, %v2310
        %v2312 = vpop.f32.mrb[0].mxu0
        %v2313 = vpop.f32.mrb[0].mxu0
        %v2314 = vadd.f32 %v1919, %v2313
        %v2315 = vpop.f32.mrb[0].mxu0
        %2316 = vmatprep.mubr.bf16.mxu0 %v1577
        %2317 = vmatmul.mubr.bf16.gmra.mrb[0].mxu0 %v1528
        %v2318 = vpop.f32.mrb[0].mxu0
        %v2319 = vadd.f32 %v1919, %v2318
        %v2320 = vpop.f32.mrb[0].mxu0
        %v2321 = vpop.f32.mrb[0].mxu0
        %v2322 = vadd.f32 %v1919, %v2321
        %v2323 = vpop.f32.mrb[0].mxu0
        %2324 = vmatprep.mubr.bf16.mxu0 %v1580
        %2325 = vmatmul.mubr.bf16.gmra.mrb[0].mxu0 %v1531
        %v2326 = vpop.f32.mrb[0].mxu0
        %v2327 = vadd.f32 %v1919, %v2326
        %v2328 = vpop.f32.mrb[0].mxu0
        %v2329 = vpop.f32.mrb[0].mxu0
        %v2330 = vadd.f32 %v1919, %v2329
        %v2331 = vpop.f32.mrb[0].mxu0
        %2332 = vmatprep.mubr.bf16.mxu0 %v1583
        %2333 = vmatmul.mubr.bf16.gmra.mrb[0].mxu0 %v1534
        %v2334 = vpop.f32.mrb[0].mxu0
        %v2335 = vadd.f32 %v1919, %v2334
        %v2336 = vpop.f32.mrb[0].mxu0
        %v2337 = vpop.f32.mrb[0].mxu0
        %v2338 = vadd.f32 %v1919, %v2337
        %v2339 = vpop.f32.mrb[0].mxu0
        %2340 = vmatprep.mubr.bf16.mxu0 %v1586
        %2341 = vmatmul.mubr.bf16.gmra.mrb[0].mxu0 %v1537
        %v2342 = vpop.f32.mrb[0].mxu0
        %v2343 = vadd.f32 %v1919, %v2342
        %v2344 = vpop.f32.mrb[0].mxu0
        %v2345 = vpop.f32.mrb[0].mxu0
        %v2346 = vadd.f32 %v1919, %v2345
        %v2347 = vpop.f32.mrb[0].mxu0
        %2348 = vmatprep.mubr.bf16.mxu0 %v1589
        %2349 = vmatmul.mubr.bf16.gmra.mrb[0].mxu0 %v1540
        %v2350 = vpop.f32.mrb[0].mxu0
        %v2351 = vadd.f32 %v1919, %v2350
        %v2352 = vpop.f32.mrb[0].mxu0
        %v2353 = vpop.f32.mrb[0].mxu0
        %v2354 = vadd.f32 %v1919, %v2353
        %v2355 = vpop.f32.mrb[0].mxu0
        %2356 = vdwg.mxu0
        %2357 = vmatprep.subr.bf16.mxu0 0
        %2358 = vmatpush1.bf16.msra.mxu0 %v2152
        %2359 = vmatprep.subr.bf16.mxu0 0
        %2360 = vmatpush1.bf16.msra.mxu0 %v2153
        %2361 = vmatprep.subr.bf16.mxu0 0
        %2362 = vmatpush1.bf16.msra.mxu0 %v2154
        %2363 = vmatprep.subr.bf16.mxu0 0
        %2364 = vmatpush1.bf16.msra.mxu0 %v2155
        %2365 = vmatprep.subr.bf16.mxu0 0
        %2366 = vmatpush1.bf16.msra.mxu0 %v2156
        %2367 = vmatprep.subr.bf16.mxu0 0
        %2368 = vmatpush1.bf16.msra.mxu0 %v2157
        %2369 = vmatprep.subr.bf16.mxu0 0
        %2370 = vmatpush1.bf16.msra.mxu0 %v2158
        %2371 = vmatprep.subr.bf16.mxu0 0
        %2372 = vmatpush1.bf16.msra.mxu0 %v2159
        %2373 = vmatprep.subr.bf16.mxu0 0
        %2374 = vmatpush1.bf16.msra.mxu0 %v2160
        %2375 = vmatprep.subr.bf16.mxu0 0
        %2376 = vmatpush1.bf16.msra.mxu0 %v2161
        %2377 = vmatprep.subr.bf16.mxu0 0
        %2378 = vmatpush1.bf16.msra.mxu0 %v2162
        %2379 = vmatprep.subr.bf16.mxu0 0
        %2380 = vmatpush1.bf16.msra.mxu0 %v2163
        %2381 = vmatprep.subr.bf16.mxu0 0
        %2382 = vmatpush1.bf16.msra.mxu0 %v2164
        %2383 = vmatprep.subr.bf16.mxu0 0
        %2384 = vmatpush1.bf16.msra.mxu0 %v2165
        %2385 = vmatprep.subr.bf16.mxu0 0
        %2386 = vmatpush1.bf16.msra.mxu0 %v2166
        %2387 = vmatprep.subr.bf16.mxu0 0
        %2388 = vmatpush1.bf16.msra.mxu0 %v2167
        %2389 = vmatprep.mubr.bf16.mxu0 %v1656
        %2390 = vmatmul.mubr.bf16.gmra.mrb[0].mxu0 %v1608
        %v2391 = vpop.f32.mrb[0].mxu0
        %v2392 = vadd.f32 %v2295, %v2391
        %v2393 = vpop.f32.mrb[0].mxu0
        %v2394 = vpop.f32.mrb[0].mxu0
        %v2395 = vadd.f32 %v2298, %v2394
        %v2396 = vpop.f32.mrb[0].mxu0
        %2397 = vmatprep.mubr.bf16.mxu0 %v1659
        %2398 = vmatmul.mubr.bf16.gmra.mrb[0].mxu0 %v1611
        %v2399 = vpop.f32.mrb[0].mxu0
        %v2400 = vadd.f32 %v2303, %v2399
        %v2401 = vpop.f32.mrb[0].mxu0
        %v2402 = vpop.f32.mrb[0].mxu0
        %v2403 = vadd.f32 %v2306, %v2402
        %v2404 = vpop.f32.mrb[0].mxu0
        %2405 = vmatprep.mubr.bf16.mxu0 %v1662
        %2406 = vmatmul.mubr.bf16.gmra.mrb[0].mxu0 %v1614
        %v2407 = vpop.f32.mrb[0].mxu0
        %v2408 = vadd.f32 %v2311, %v2407
        %v2409 = vpop.f32.mrb[0].mxu0
        %v2410 = vpop.f32.mrb[0].mxu0
        %v2411 = vadd.f32 %v2314, %v2410
        %v2412 = vpop.f32.mrb[0].mxu0
        %2413 = vmatprep.mubr.bf16.mxu0 %v1665
        %2414 = vmatmul.mubr.bf16.gmra.mrb[0].mxu0 %v1617
        %v2415 = vpop.f32.mrb[0].mxu0
        %v2416 = vadd.f32 %v2319, %v2415
        %v2417 = vpop.f32.mrb[0].mxu0
        %v2418 = vpop.f32.mrb[0].mxu0
        %v2419 = vadd.f32 %v2322, %v2418
        %v2420 = vpop.f32.mrb[0].mxu0
        %2421 = vmatprep.mubr.bf16.mxu0 %v1668
        %2422 = vmatmul.mubr.bf16.gmra.mrb[0].mxu0 %v1620
        %v2423 = vpop.f32.mrb[0].mxu0
        %v2424 = vadd.f32 %v2327, %v2423
        %v2425 = vpop.f32.mrb[0].mxu0
        %v2426 = vpop.f32.mrb[0].mxu0
        %v2427 = vadd.f32 %v2330, %v2426
        %v2428 = vpop.f32.mrb[0].mxu0
        %2429 = vmatprep.mubr.bf16.mxu0 %v1671
        %2430 = vmatmul.mubr.bf16.gmra.mrb[0].mxu0 %v1623
        %v2431 = vpop.f32.mrb[0].mxu0
        %v2432 = vadd.f32 %v2335, %v2431
        %v2433 = vpop.f32.mrb[0].mxu0
        %v2434 = vpop.f32.mrb[0].mxu0
        %v2435 = vadd.f32 %v2338, %v2434
        %v2436 = vpop.f32.mrb[0].mxu0
        %2437 = vmatprep.mubr.bf16.mxu0 %v1674
        %2438 = vmatmul.mubr.bf16.gmra.mrb[0].mxu0 %v1626
        %v2439 = vpop.f32.mrb[0].mxu0
        %v2440 = vadd.f32 %v2343, %v2439
        %v2441 = vpop.f32.mrb[0].mxu0
        %v2442 = vpop.f32.mrb[0].mxu0
        %v2443 = vadd.f32 %v2346, %v2442
        %v2444 = vpop.f32.mrb[0].mxu0
        %2445 = vmatprep.mubr.bf16.mxu0 %v1677
        %2446 = vmatmul.mubr.bf16.gmra.mrb[0].mxu0 %v1629
        %v2447 = vpop.f32.mrb[0].mxu0
        %v2448 = vadd.f32 %v2351, %v2447
        %v2449 = vpop.f32.mrb[0].mxu0
        %v2450 = vpop.f32.mrb[0].mxu0
        %v2451 = vadd.f32 %v2354, %v2450
        %v2452 = vpop.f32.mrb[0].mxu0
        %2453 = vdwg.mxu0
        %2454 = vmatprep.subr.bf16.mxu0 0
        %2455 = vmatpush1.bf16.msra.mxu0 %v2168
        %2456 = vmatprep.subr.bf16.mxu0 0
        %2457 = vmatpush1.bf16.msra.mxu0 %v2169
        %2458 = vmatprep.subr.bf16.mxu0 0
        %2459 = vmatpush1.bf16.msra.mxu0 %v2170
        %2460 = vmatprep.subr.bf16.mxu0 0
        %2461 = vmatpush1.bf16.msra.mxu0 %v2171
        %2462 = vmatprep.subr.bf16.mxu0 0
        %2463 = vmatpush1.bf16.msra.mxu0 %v2172
        %2464 = vmatprep.subr.bf16.mxu0 0
        %2465 = vmatpush1.bf16.msra.mxu0 %v2173
        %2466 = vmatprep.subr.bf16.mxu0 0
        %2467 = vmatpush1.bf16.msra.mxu0 %v2174
        %2468 = vmatprep.subr.bf16.mxu0 0
        %2469 = vmatpush1.bf16.msra.mxu0 %v2175
        %2470 = vmatprep.subr.bf16.mxu0 0
        %2471 = vmatpush1.bf16.msra.mxu0 %v2176
        %2472 = vmatprep.subr.bf16.mxu0 0
        %2473 = vmatpush1.bf16.msra.mxu0 %v2177
        %2474 = vmatprep.subr.bf16.mxu0 0
        %2475 = vmatpush1.bf16.msra.mxu0 %v2178
        %2476 = vmatprep.subr.bf16.mxu0 0
        %2477 = vmatpush1.bf16.msra.mxu0 %v2179
        %2478 = vmatprep.subr.bf16.mxu0 0
        %2479 = vmatpush1.bf16.msra.mxu0 %v2180
        %2480 = vmatprep.subr.bf16.mxu0 0
        %2481 = vmatpush1.bf16.msra.mxu0 %v2181
        %2482 = vmatprep.subr.bf16.mxu0 0
        %2483 = vmatpush1.bf16.msra.mxu0 %v2182
        %2484 = vmatprep.subr.bf16.mxu0 0
        %2485 = vmatpush1.bf16.msra.mxu0 %v2183
        %2486 = vmatprep.mubr.bf16.mxu0 %v1744
        %2487 = vmatmul.mubr.bf16.gmra.mrb[0].mxu0 %v1704
        %v2488 = vpop.f32.mrb[0].mxu0
        %v2489 = vadd.f32 %v2392, %v2488
        %v2490 = vpop.f32.mrb[0].mxu0
        %v2491 = vpop.f32.mrb[0].mxu0
        %v2492 = vadd.f32 %v2395, %v2491
        %v2493 = vpop.f32.mrb[0].mxu0
        %2494 = vmatprep.mubr.bf16.mxu0 %v1747
        %2495 = vmatmul.mubr.bf16.gmra.mrb[0].mxu0 %v1707
        %v2496 = vpop.f32.mrb[0].mxu0
        %v2497 = vadd.f32 %v2400, %v2496
        %v2498 = vpop.f32.mrb[0].mxu0
        %v2499 = vpop.f32.mrb[0].mxu0
        %v2500 = vadd.f32 %v2403, %v2499
        %v2501 = vpop.f32.mrb[0].mxu0
        %2502 = vmatprep.mubr.bf16.mxu0 %v1750
        %2503 = vmatmul.mubr.bf16.gmra.mrb[0].mxu0 %v1710
        %v2504 = vpop.f32.mrb[0].mxu0
        %v2505 = vadd.f32 %v2408, %v2504
        %v2506 = vpop.f32.mrb[0].mxu0
        %v2507 = vpop.f32.mrb[0].mxu0
        %v2508 = vadd.f32 %v2411, %v2507
        %v2509 = vpop.f32.mrb[0].mxu0
        %2510 = vmatprep.mubr.bf16.mxu0 %v1753
        %2511 = vmatmul.mubr.bf16.gmra.mrb[0].mxu0 %v1713
        %v2512 = vpop.f32.mrb[0].mxu0
        %v2513 = vadd.f32 %v2416, %v2512
        %v2514 = vpop.f32.mrb[0].mxu0
        %v2515 = vpop.f32.mrb[0].mxu0
        %v2516 = vadd.f32 %v2419, %v2515
        %v2517 = vpop.f32.mrb[0].mxu0
        %2518 = vmatprep.mubr.bf16.mxu0 %v1756
        %2519 = vmatmul.mubr.bf16.gmra.mrb[0].mxu0 %v1716
        %v2520 = vpop.f32.mrb[0].mxu0
        %v2521 = vadd.f32 %v2424, %v2520
        %v2522 = vpop.f32.mrb[0].mxu0
        %v2523 = vpop.f32.mrb[0].mxu0
        %v2524 = vadd.f32 %v2427, %v2523
        %v2525 = vpop.f32.mrb[0].mxu0
        %2526 = vmatprep.mubr.bf16.mxu0 %v1759
        %2527 = vmatmul.mubr.bf16.gmra.mrb[0].mxu0 %v1719
        %v2528 = vpop.f32.mrb[0].mxu0
        %v2529 = vadd.f32 %v2432, %v2528
        %v2530 = vpop.f32.mrb[0].mxu0
        %v2531 = vpop.f32.mrb[0].mxu0
        %v2532 = vadd.f32 %v2435, %v2531
        %v2533 = vpop.f32.mrb[0].mxu0
        %2534 = vmatprep.mubr.bf16.mxu0 %v1762
        %2535 = vmatmul.mubr.bf16.gmra.mrb[0].mxu0 %v1722
        %v2536 = vpop.f32.mrb[0].mxu0
        %v2537 = vadd.f32 %v2440, %v2536
        %v2538 = vpop.f32.mrb[0].mxu0
        %v2539 = vpop.f32.mrb[0].mxu0
        %v2540 = vadd.f32 %v2443, %v2539
        %v2541 = vpop.f32.mrb[0].mxu0
        %2542 = vmatprep.mubr.bf16.mxu0 %v1765
        %2543 = vmatmul.mubr.bf16.gmra.mrb[0].mxu0 %v1725
        %v2544 = vpop.f32.mrb[0].mxu0
        %v2545 = vadd.f32 %v2448, %v2544
        %v2546 = vpop.f32.mrb[0].mxu0
        %v2547 = vpop.f32.mrb[0].mxu0
        %v2548 = vadd.f32 %v2451, %v2547
        %v2549 = vpop.f32.mrb[0].mxu0
        %2550 = vdwg.mxu0
        %2551 = vmatprep.subr.bf16.mxu0 0
        %2552 = vmatpush1.bf16.msra.mxu0 %v2184
        %2553 = vmatprep.subr.bf16.mxu0 0
        %2554 = vmatpush1.bf16.msra.mxu0 %v2185
        %2555 = vmatprep.subr.bf16.mxu0 0
        %2556 = vmatpush1.bf16.msra.mxu0 %v2186
        %2557 = vmatprep.subr.bf16.mxu0 0
        %2558 = vmatpush1.bf16.msra.mxu0 %v2187
        %2559 = vmatprep.subr.bf16.mxu0 0
        %2560 = vmatpush1.bf16.msra.mxu0 %v2188
        %2561 = vmatprep.subr.bf16.mxu0 0
        %2562 = vmatpush1.bf16.msra.mxu0 %v2189
        %2563 = vmatprep.subr.bf16.mxu0 0
        %2564 = vmatpush1.bf16.msra.mxu0 0
        %2565 = vmatprep.subr.bf16.mxu0 0
        %2566 = vmatpush1.bf16.msra.mxu0 0
        %2567 = vmatprep.subr.bf16.mxu0 0
        %2568 = vmatpush1.bf16.msra.mxu0 0
        %2569 = vmatprep.subr.bf16.mxu0 0
        %2570 = vmatpush1.bf16.msra.mxu0 0
        %2571 = vmatprep.subr.bf16.mxu0 0
        %2572 = vmatpush1.bf16.msra.mxu0 0
        %2573 = vmatprep.subr.bf16.mxu0 0
        %2574 = vmatpush1.bf16.msra.mxu0 0
        %2575 = vmatprep.subr.bf16.mxu0 0
        %2576 = vmatpush1.bf16.msra.mxu0 0
        %2577 = vmatprep.subr.bf16.mxu0 0
        %2578 = vmatpush1.bf16.msra.mxu0 0
        %2579 = vmatprep.subr.bf16.mxu0 0
        %2580 = vmatpush1.bf16.msra.mxu0 0
        %2581 = vmatprep.subr.bf16.mxu0 0
        %2582 = vmatpush1.bf16.msra.mxu0 0
        %2583 = vmatprep.mubr.bf16.mxu0 0
        %2584 = vmatmul.mubr.bf16.gmra.mrb[0].mxu0 %v2244
        %v2585 = vpop.f32.mrb[0].mxu0
        %v2586 = vadd.f32 %v2489, %v2585
        %v2587 = vpop.f32.mrb[0].mxu0
        %v2588 = vpop.f32.mrb[0].mxu0
        %v2589 = vadd.f32 %v2492, %v2588
        %v2590 = vpop.f32.mrb[0].mxu0
        %2591 = vmatprep.mubr.bf16.mxu0 0
        %2592 = vmatmul.mubr.bf16.gmra.mrb[0].mxu0 %v2246
        %v2593 = vpop.f32.mrb[0].mxu0
        %v2594 = vadd.f32 %v2497, %v2593
        %v2595 = vpop.f32.mrb[0].mxu0
        %v2596 = vpop.f32.mrb[0].mxu0
        %v2597 = vadd.f32 %v2500, %v2596
        %v2598 = vpop.f32.mrb[0].mxu0
        %2599 = vmatprep.mubr.bf16.mxu0 0
        %2600 = vmatmul.mubr.bf16.gmra.mrb[0].mxu0 %v2248
        %v2601 = vpop.f32.mrb[0].mxu0
        %v2602 = vadd.f32 %v2505, %v2601
        %v2603 = vpop.f32.mrb[0].mxu0
        %v2604 = vpop.f32.mrb[0].mxu0
        %v2605 = vadd.f32 %v2508, %v2604
        %v2606 = vpop.f32.mrb[0].mxu0
        %2607 = vmatprep.mubr.bf16.mxu0 0
        %2608 = vmatmul.mubr.bf16.gmra.mrb[0].mxu0 %v2250
        %v2609 = vpop.f32.mrb[0].mxu0
        %v2610 = vadd.f32 %v2513, %v2609
        %v2611 = vpop.f32.mrb[0].mxu0
        %v2612 = vpop.f32.mrb[0].mxu0
        %v2613 = vadd.f32 %v2516, %v2612
        %v2614 = vpop.f32.mrb[0].mxu0
        %2615 = vmatprep.mubr.bf16.mxu0 0
        %2616 = vmatmul.mubr.bf16.gmra.mrb[0].mxu0 %v2252
        %v2617 = vpop.f32.mrb[0].mxu0
        %v2618 = vadd.f32 %v2521, %v2617
        %v2619 = vpop.f32.mrb[0].mxu0
        %v2620 = vpop.f32.mrb[0].mxu0
        %v2621 = vadd.f32 %v2524, %v2620
        %v2622 = vpop.f32.mrb[0].mxu0
        %2623 = vmatprep.mubr.bf16.mxu0 0
        %2624 = vmatmul.mubr.bf16.gmra.mrb[0].mxu0 %v2254
        %v2625 = vpop.f32.mrb[0].mxu0
        %v2626 = vadd.f32 %v2529, %v2625
        %v2627 = vpop.f32.mrb[0].mxu0
        %v2628 = vpop.f32.mrb[0].mxu0
        %v2629 = vadd.f32 %v2532, %v2628
        %v2630 = vpop.f32.mrb[0].mxu0
        %2631 = vmatprep.mubr.bf16.mxu0 0
        %2632 = vmatmul.mubr.bf16.gmra.mrb[0].mxu0 %v2256
        %v2633 = vpop.f32.mrb[0].mxu0
        %v2634 = vadd.f32 %v2537, %v2633
        %v2635 = vpop.f32.mrb[0].mxu0
        %v2636 = vpop.f32.mrb[0].mxu0
        %v2637 = vadd.f32 %v2540, %v2636
        %v2638 = vpop.f32.mrb[0].mxu0
        %2639 = vmatprep.mubr.bf16.mxu0 0
        %2640 = vmatmul.mubr.bf16.gmra.mrb[0].mxu0 %v2258
        %v2641 = vpop.f32.mrb[0].mxu0
        %v2642 = vadd.f32 %v2545, %v2641
        %v2643 = vpop.f32.mrb[0].mxu0
        %v2644 = vpop.f32.mrb[0].mxu0
        %v2645 = vadd.f32 %v2548, %v2644
        %v2646 = vpop.f32.mrb[0].mxu0
        %2647 = vdwg.mxu0
        %v2648 = vmul.f32 %v2586, 0.01
        %v2649 = vmul.f32 %v2589, 0.01
        %v2650 = vmul.f32 %v2594, 0.01
        %v2651 = vmul.f32 %v2597, 0.01
        %v2652 = vmul.f32 %v2602, 0.01
        %v2653 = vmul.f32 %v2605, 0.01
        %v2654 = vmul.f32 %v2610, 0.01
        %v2655 = vmul.f32 %v2613, 0.01
        %v2656 = vmul.f32 %v2618, 0.01
        %v2657 = vmul.f32 %v2621, 0.01
        %v2658 = vmul.f32 %v2626, 0.01
        %v2659 = vmul.f32 %v2629, 0.01
        %v2660 = vmul.f32 %v2634, 0.01
        %v2661 = vmul.f32 %v2637, 0.01
        %v2662 = vmul.f32 %v2642, 0.01
        %v2663 = vmul.f32 %v2645, 0.01
        %v2664 = vmax.f32 %v2586, %v2648
        %v2665 = vmax.f32 %v2589, %v2649
        %v2666 = vmax.f32 %v2594, %v2650
        %v2667 = vmax.f32 %v2597, %v2651
        %v2668 = vmax.f32 %v2602, %v2652
        %v2669 = vmax.f32 %v2605, %v2653
        %v2670 = vmax.f32 %v2610, %v2654
        %v2671 = vmax.f32 %v2613, %v2655
        %v2672 = vmax.f32 %v2618, %v2656
        %v2673 = vmax.f32 %v2621, %v2657
        %v2674 = vmax.f32 %v2626, %v2658
        %v2675 = vmax.f32 %v2629, %v2659
        %v2676 = vmax.f32 %v2634, %v2660
        %v2677 = vmax.f32 %v2637, %v2661
        %v2678 = vmax.f32 %v2642, %v2662
        %v2679 = vmax.f32 %v2645, %v2663
        %v2680 = vlaneseq
        %v2681 = vshrl.u32 %v2680, 7
        %v2682 = vsub.s32 1, %v2681
        %v2683 = vrot.slane %v1915, %v2682
        %v2684 = vmul.f32 %v2664, %v2683
        %v2685 = vmul.f32 %v2665, %v2683
        %v2686 = vmul.f32 %v2666, %v2683
        %v2687 = vmul.f32 %v2667, %v2683
        %v2688 = vmul.f32 %v2668, %v2683
        %v2689 = vmul.f32 %v2669, %v2683
        %v2690 = vmul.f32 %v2670, %v2683
        %v2691 = vmul.f32 %v2671, %v2683
        %v2692 = vmul.f32 %v2672, %v2683
        %v2693 = vmul.f32 %v2673, %v2683
        %v2694 = vmul.f32 %v2674, %v2683
        %v2695 = vmul.f32 %v2675, %v2683
        %v2696 = vmul.f32 %v2676, %v2683
        %v2697 = vmul.f32 %v2677, %v2683
        %v2698 = vmul.f32 %v2678, %v2683
        %v2699 = vmul.f32 %v2679, %v2683
        %v2700 = vlaneseq
        %v2701 = vshrl.u32 %v2700, 7
        %v2702 = vsub.s32 2, %v2701
        %v2703 = vrot.slane %v1915, %v2702
        %v2704 = vadd.f32 %v2684, %v2703
        %v2705 = vadd.f32 %v2685, %v2703
        %v2706 = vadd.f32 %v2686, %v2703
        %v2707 = vadd.f32 %v2687, %v2703
        %v2708 = vadd.f32 %v2688, %v2703
        %v2709 = vadd.f32 %v2689, %v2703
        %v2710 = vadd.f32 %v2690, %v2703
        %v2711 = vadd.f32 %v2691, %v2703
        %v2712 = vadd.f32 %v2692, %v2703
        %v2713 = vadd.f32 %v2693, %v2703
        %v2714 = vadd.f32 %v2694, %v2703
        %v2715 = vadd.f32 %v2695, %v2703
        %v2716 = vadd.f32 %v2696, %v2703
        %v2717 = vadd.f32 %v2697, %v2703
        %v2718 = vadd.f32 %v2698, %v2703
        %v2719 = vadd.f32 %v2699, %v2703
        %v2720 = vld [vmem:[%s660] sm:$0xf]
        %v2721 = vld [vmem:[%s660 + $0x4] sm:$0xf]
        %v2722 = vld [vmem:[%s660 + $0x8] sm:$0xf]
        %v2723 = vld [vmem:[%s660 + $0xc] sm:$0xf]
        %v2724 = vld [vmem:[%s660 + $0x10] sm:$0xf]
        %v2725 = vld [vmem:[%s660 + $0x14] sm:$0xf]
        %v2726 = vld [vmem:[%s660 + $0x18] sm:$0xf]
        %v2727 = vld [vmem:[%s660 + $0x1c] sm:$0xf]
        %v2728 = vld [vmem:[%s660 + $0x20] sm:$0xf]
        %v2729 = vld [vmem:[%s660 + $0x24] sm:$0xf]
        %v2730 = vld [vmem:[%s660 + $0x28] sm:$0xf]
        %v2731 = vld [vmem:[%s660 + $0x2c] sm:$0xf]
        %v2732 = vld [vmem:[%s660 + $0x30] sm:$0xf]
        %v2733 = vld [vmem:[%s660 + $0x34] sm:$0xf]
        %v2734 = vld [vmem:[%s660 + $0x38] sm:$0xf]
        %v2735 = vld [vmem:[%s660 + $0x3c] sm:$0xf]
        %v2736 = vunpack.c.l.bf16 %v2720
        %v2737 = vunpack.c.l.bf16 %v2721
        %v2738 = vunpack.c.l.bf16 %v2722
        %v2739 = vunpack.c.l.bf16 %v2723
        %v2740 = vunpack.c.l.bf16 %v2724
        %v2741 = vunpack.c.l.bf16 %v2725
        %v2742 = vunpack.c.l.bf16 %v2726
        %v2743 = vunpack.c.l.bf16 %v2727
        %v2744 = vunpack.c.l.bf16 %v2728
        %v2745 = vunpack.c.l.bf16 %v2729
        %v2746 = vunpack.c.l.bf16 %v2730
        %v2747 = vunpack.c.l.bf16 %v2731
        %v2748 = vunpack.c.l.bf16 %v2732
        %v2749 = vunpack.c.l.bf16 %v2733
        %v2750 = vunpack.c.l.bf16 %v2734
        %v2751 = vunpack.c.l.bf16 %v2735
        %v2752 = vadd.f32 %v2704, %v2736
        %v2753 = vadd.f32 %v2705, %v2737
        %v2754 = vadd.f32 %v2706, %v2738
        %v2755 = vadd.f32 %v2707, %v2739
        %v2756 = vadd.f32 %v2708, %v2740
        %v2757 = vadd.f32 %v2709, %v2741
        %v2758 = vadd.f32 %v2710, %v2742
        %v2759 = vadd.f32 %v2711, %v2743
        %v2760 = vadd.f32 %v2712, %v2744
        %v2761 = vadd.f32 %v2713, %v2745
        %v2762 = vadd.f32 %v2714, %v2746
        %v2763 = vadd.f32 %v2715, %v2747
        %v2764 = vadd.f32 %v2716, %v2748
        %v2765 = vadd.f32 %v2717, %v2749
        %v2766 = vadd.f32 %v2718, %v2750
        %v2767 = vadd.f32 %v2719, %v2751
        %v2768 = vpack.c.bf16 %v2753, %v2752
        %v2769 = vpack.c.bf16 %v2755, %v2754
        %v2770 = vpack.c.bf16 %v2757, %v2756
        %v2771 = vpack.c.bf16 %v2759, %v2758
        %v2772 = vpack.c.bf16 %v2761, %v2760
        %v2773 = vpack.c.bf16 %v2763, %v2762
        %v2774 = vpack.c.bf16 %v2765, %v2764
        %v2775 = vpack.c.bf16 %v2767, %v2766
        %v2784 = vunpack.c.l.b16 %v2768
        %v2785 = vunpack.c.h.b16 %v2768
        %v2786 = vunpack.c.l.b16 %v2769
        %v2787 = vunpack.c.h.b16 %v2769
        %v2788 = vunpack.c.l.b16 %v2770
        %v2789 = vunpack.c.h.b16 %v2770
        %v2790 = vunpack.c.l.b16 %v2771
        %v2791 = vunpack.c.h.b16 %v2771
        %v2792 = vunpack.c.l.b16 %v2772
        %v2793 = vunpack.c.h.b16 %v2772
        %v2794 = vunpack.c.l.b16 %v2773
        %v2795 = vunpack.c.h.b16 %v2773
        %v2796 = vunpack.c.l.b16 %v2774
        %v2797 = vunpack.c.h.b16 %v2774
        %v2798 = vunpack.c.l.b16 %v2775
        %v2799 = vunpack.c.h.b16 %v2775
        %v2800 = vpack.c.b16 %v2784, %v2784
        %v2801 = vpack.c.b16 %v2785, %v2785
        %v2802 = vpack.c.b16 %v2786, %v2786
        %v2803 = vpack.c.b16 %v2787, %v2787
        %v2804 = vpack.c.b16 %v2788, %v2788
        %v2805 = vpack.c.b16 %v2789, %v2789
        %v2806 = vpack.c.b16 %v2790, %v2790
        %v2807 = vpack.c.b16 %v2791, %v2791
        %v2808 = vpack.c.b16 %v2792, %v2792
        %v2809 = vpack.c.b16 %v2793, %v2793
        %v2810 = vpack.c.b16 %v2794, %v2794
        %v2811 = vpack.c.b16 %v2795, %v2795
        %v2812 = vpack.c.b16 %v2796, %v2796
        %v2813 = vpack.c.b16 %v2797, %v2797
        %v2814 = vpack.c.b16 %v2798, %v2798
        %v2815 = vpack.c.b16 %v2799, %v2799
        %vm2832 = vcmask 519168
        %2833 = vst.msk [vmem:[%s742] sm:$0xf] %vm2832, %v2800
        %2834 = vst.msk [vmem:[%s742 + $0x4] sm:$0xf] %vm2832, %v2801
        %2835 = vst.msk [vmem:[%s742 + $0x8] sm:$0xf] %vm2832, %v2802
        %2836 = vst.msk [vmem:[%s742 + $0xc] sm:$0xf] %vm2832, %v2803
        %2837 = vst.msk [vmem:[%s742 + $0x10] sm:$0xf] %vm2832, %v2804
        %2838 = vst.msk [vmem:[%s742 + $0x14] sm:$0xf] %vm2832, %v2805
        %2839 = vst.msk [vmem:[%s742 + $0x18] sm:$0xf] %vm2832, %v2806
        %2840 = vst.msk [vmem:[%s742 + $0x1c] sm:$0xf] %vm2832, %v2807
        %2841 = vst.msk [vmem:[%s742 + $0x20] sm:$0xf] %vm2832, %v2808
        %2842 = vst.msk [vmem:[%s742 + $0x24] sm:$0xf] %vm2832, %v2809
        %2843 = vst.msk [vmem:[%s742 + $0x28] sm:$0xf] %vm2832, %v2810
        %2844 = vst.msk [vmem:[%s742 + $0x2c] sm:$0xf] %vm2832, %v2811
        %2845 = vst.msk [vmem:[%s742 + $0x30] sm:$0xf] %vm2832, %v2812
        %2846 = vst.msk [vmem:[%s742 + $0x34] sm:$0xf] %vm2832, %v2813
        %2847 = vst.msk [vmem:[%s742 + $0x38] sm:$0xf] %vm2832, %v2814
        %2848 = vst.msk [vmem:[%s742 + $0x3c] sm:$0xf] %vm2832, %v2815
        %v2849 = vld [vmem:[%s8] sm:$0xf]
        %v2850 = vld [vmem:[%s8 + $0x4] sm:$0xf]
        %v2851 = vld [vmem:[%s8 + $0x8] sm:$0xf]
        %v2852 = vld [vmem:[%s8 + $0xc] sm:$0xf]
        %v2853 = vld [vmem:[%s8 + $0x10] sm:$0xf]
        %v2854 = vld [vmem:[%s8 + $0x14] sm:$0xf]
        %v2855 = vld [vmem:[%s8 + $0x18] sm:$0xf]
        %v2856 = vld [vmem:[%s8 + $0x1c] sm:$0xf]
        %v2857 = vld [vmem:[%s8 + $0x20] sm:$0xf]
        %v2858 = vld [vmem:[%s8 + $0x24] sm:$0xf]
        %v2859 = vld [vmem:[%s8 + $0x28] sm:$0xf]
        %v2860 = vld [vmem:[%s8 + $0x2c] sm:$0xf]
        %v2869 = vunpack.c.l.b16 %v2853
        %v2870 = vunpack.c.l.b16 %v2854
        %v2871 = vunpack.c.l.b16 %v2855
        %v2872 = vunpack.c.l.b16 %v2856
        %v2873 = vunpack.c.l.b16 %v2857
        %v2874 = vunpack.c.l.b16 %v2858
        %v2875 = vunpack.c.l.b16 %v2859
        %v2876 = vunpack.c.l.b16 %v2860
        %v2877 = vpack.c.b16 %v2870, %v2869
        %v2878 = vpack.c.b16 %v2872, %v2871
        %v2879 = vpack.c.b16 %v2874, %v2873
        %v2880 = vpack.c.b16 %v2876, %v2875
        %v2886 = vsel %vm1542, %v1056, 0
        %v2889 = vsel %vm1542, %v1057, 0
        %v2892 = vsel %vm1542, %v1058, 0
        %v2895 = vsel %vm1542, %v1059, 0
        %v2898 = vsel %vm1542, %v1060, 0
        %v2901 = vsel %vm1542, %v1061, 0
        %v2904 = vsel %vm1542, %v1062, 0
        %v2907 = vsel %vm1542, %v1063, 0
        %2909 = vmatprep.subr.bf16.mxu0 0
        %2910 = vmatpush1.bf16.msra.mxu0 %v2877
        %2911 = vmatprep.subr.bf16.mxu0 0
        %2912 = vmatpush1.bf16.msra.mxu0 %v2878
        %2913 = vmatprep.subr.bf16.mxu0 0
        %2914 = vmatpush1.bf16.msra.mxu0 %v2879
        %2915 = vmatprep.subr.bf16.mxu0 0
        %2916 = vmatpush1.bf16.msra.mxu0 %v2880
        %2917 = vmatprep.subr.bf16.mxu0 0
        %2918 = vmatpush1.bf16.msra.mxu0 0
        %2919 = vmatprep.subr.bf16.mxu0 0
        %2920 = vmatpush1.bf16.msra.mxu0 0
        %2921 = vmatprep.subr.bf16.mxu0 0
        %2922 = vmatpush1.bf16.msra.mxu0 0
        %2923 = vmatprep.subr.bf16.mxu0 0
        %2924 = vmatpush1.bf16.msra.mxu0 0
        %2925 = vmatprep.subr.bf16.mxu0 0
        %2926 = vmatpush1.bf16.msra.mxu0 0
        %2927 = vmatprep.subr.bf16.mxu0 0
        %2928 = vmatpush1.bf16.msra.mxu0 0
        %2929 = vmatprep.subr.bf16.mxu0 0
        %2930 = vmatpush1.bf16.msra.mxu0 0
        %2931 = vmatprep.subr.bf16.mxu0 0
        %2932 = vmatpush1.bf16.msra.mxu0 0
        %2933 = vmatprep.subr.bf16.mxu0 0
        %2934 = vmatpush1.bf16.msra.mxu0 0
        %2935 = vmatprep.subr.bf16.mxu0 0
        %2936 = vmatpush1.bf16.msra.mxu0 0
        %2937 = vmatprep.subr.bf16.mxu0 0
        %2938 = vmatpush1.bf16.msra.mxu0 0
        %2939 = vmatprep.subr.bf16.mxu0 0
        %2940 = vmatpush1.bf16.msra.mxu0 0
        %2941 = vmatprep.mubr.bf16.mxu0 0
        %2942 = vmatmul.mubr.bf16.gmra.mrb[0].mxu0 %v2886
        %v2943 = vpop.f32.mrb[0].mxu0
        %v2944 = vadd.f32 0.0, %v2943
        %v2945 = vpop.f32.mrb[0].mxu0
        %v2946 = vpop.f32.mrb[0].mxu0
        %v2947 = vadd.f32 0.0, %v2946
        %v2948 = vpop.f32.mrb[0].mxu0
        %2949 = vmatprep.mubr.bf16.mxu0 0
        %2950 = vmatmul.mubr.bf16.gmra.mrb[0].mxu0 %v2889
        %v2951 = vpop.f32.mrb[0].mxu0
        %v2952 = vadd.f32 0.0, %v2951
        %v2953 = vpop.f32.mrb[0].mxu0
        %v2954 = vpop.f32.mrb[0].mxu0
        %v2955 = vadd.f32 0.0, %v2954
        %v2956 = vpop.f32.mrb[0].mxu0
        %2957 = vmatprep.mubr.bf16.mxu0 0
        %2958 = vmatmul.mubr.bf16.gmra.mrb[0].mxu0 %v2892
        %v2959 = vpop.f32.mrb[0].mxu0
        %v2960 = vadd.f32 0.0, %v2959
        %v2961 = vpop.f32.mrb[0].mxu0
        %v2962 = vpop.f32.mrb[0].mxu0
        %v2963 = vadd.f32 0.0, %v2962
        %v2964 = vpop.f32.mrb[0].mxu0
        %2965 = vmatprep.mubr.bf16.mxu0 0
        %2966 = vmatmul.mubr.bf16.gmra.mrb[0].mxu0 %v2895
        %v2967 = vpop.f32.mrb[0].mxu0
        %v2968 = vadd.f32 0.0, %v2967
        %v2969 = vpop.f32.mrb[0].mxu0
        %v2970 = vpop.f32.mrb[0].mxu0
        %v2971 = vadd.f32 0.0, %v2970
        %v2972 = vpop.f32.mrb[0].mxu0
        %2973 = vmatprep.mubr.bf16.mxu0 0
        %2974 = vmatmul.mubr.bf16.gmra.mrb[0].mxu0 %v2898
        %v2975 = vpop.f32.mrb[0].mxu0
        %v2976 = vadd.f32 0.0, %v2975
        %v2977 = vpop.f32.mrb[0].mxu0
        %v2978 = vpop.f32.mrb[0].mxu0
        %v2979 = vadd.f32 0.0, %v2978
        %v2980 = vpop.f32.mrb[0].mxu0
        %2981 = vmatprep.mubr.bf16.mxu0 0
        %2982 = vmatmul.mubr.bf16.gmra.mrb[0].mxu0 %v2901
        %v2983 = vpop.f32.mrb[0].mxu0
        %v2984 = vadd.f32 0.0, %v2983
        %v2985 = vpop.f32.mrb[0].mxu0
        %v2986 = vpop.f32.mrb[0].mxu0
        %v2987 = vadd.f32 0.0, %v2986
        %v2988 = vpop.f32.mrb[0].mxu0
        %2989 = vmatprep.mubr.bf16.mxu0 0
        %2990 = vmatmul.mubr.bf16.gmra.mrb[0].mxu0 %v2904
        %v2991 = vpop.f32.mrb[0].mxu0
        %v2992 = vadd.f32 0.0, %v2991
        %v2993 = vpop.f32.mrb[0].mxu0
        %v2994 = vpop.f32.mrb[0].mxu0
        %v2995 = vadd.f32 0.0, %v2994
        %v2996 = vpop.f32.mrb[0].mxu0
        %2997 = vmatprep.mubr.bf16.mxu0 0
        %2998 = vmatmul.mubr.bf16.gmra.mrb[0].mxu0 %v2907
        %v2999 = vpop.f32.mrb[0].mxu0
        %v3000 = vadd.f32 0.0, %v2999
        %v3001 = vpop.f32.mrb[0].mxu0
        %v3002 = vpop.f32.mrb[0].mxu0
        %v3003 = vadd.f32 0.0, %v3002
        %v3004 = vpop.f32.mrb[0].mxu0
        %3005 = vdwg.mxu0
        %v3010 = vunpack.c.l.b16 %v2849
        %v3011 = vunpack.c.l.b16 %v2850
        %v3012 = vunpack.c.l.b16 %v2851
        %v3013 = vunpack.c.l.b16 %v2852
        %v3014 = vpack.c.b16 %v3011, %v3010
        %v3015 = vpack.c.b16 %v3013, %v3012
        %v3019 = vsel %vm1500, %v914, 0
        %v3022 = vsel %vm1500, %v915, 0
        %v3025 = vsel %vm1500, %v916, 0
        %v3028 = vsel %vm1500, %v917, 0
        %v3031 = vsel %vm1500, %v918, 0
        %v3034 = vsel %vm1500, %v919, 0
        %v3037 = vsel %vm1500, %v920, 0
        %v3040 = vsel %vm1500, %v921, 0
        %3042 = vmatprep.subr.bf16.mxu0 0
        %3043 = vmatpush1.bf16.msra.mxu0 %v3014
        %3044 = vmatprep.subr.bf16.mxu0 0
        %3045 = vmatpush1.bf16.msra.mxu0 %v3015
        %3046 = vmatprep.subr.bf16.mxu0 0
        %3047 = vmatpush1.bf16.msra.mxu0 0
        %3048 = vmatprep.subr.bf16.mxu0 0
        %3049 = vmatpush1.bf16.msra.mxu0 0
        %3050 = vmatprep.subr.bf16.mxu0 0
        %3051 = vmatpush1.bf16.msra.mxu0 0
        %3052 = vmatprep.subr.bf16.mxu0 0
        %3053 = vmatpush1.bf16.msra.mxu0 0
        %3054 = vmatprep.subr.bf16.mxu0 0
        %3055 = vmatpush1.bf16.msra.mxu0 0
        %3056 = vmatprep.subr.bf16.mxu0 0
        %3057 = vmatpush1.bf16.msra.mxu0 0
        %3058 = vmatprep.subr.bf16.mxu0 0
        %3059 = vmatpush1.bf16.msra.mxu0 0
        %3060 = vmatprep.subr.bf16.mxu0 0
        %3061 = vmatpush1.bf16.msra.mxu0 0
        %3062 = vmatprep.subr.bf16.mxu0 0
        %3063 = vmatpush1.bf16.msra.mxu0 0
        %3064 = vmatprep.subr.bf16.mxu0 0
        %3065 = vmatpush1.bf16.msra.mxu0 0
        %3066 = vmatprep.subr.bf16.mxu0 0
        %3067 = vmatpush1.bf16.msra.mxu0 0
        %3068 = vmatprep.subr.bf16.mxu0 0
        %3069 = vmatpush1.bf16.msra.mxu0 0
        %3070 = vmatprep.subr.bf16.mxu0 0
        %3071 = vmatpush1.bf16.msra.mxu0 0
        %3072 = vmatprep.subr.bf16.mxu0 0
        %3073 = vmatpush1.bf16.msra.mxu0 0
        %3074 = vmatprep.mubr.bf16.mxu0 0
        %3075 = vmatmul.mubr.bf16.gmra.mrb[0].mxu0 %v3019
        %v3076 = vpop.f32.mrb[0].mxu0
        %v3077 = vadd.f32 %v2944, %v3076
        %v3078 = vpop.f32.mrb[0].mxu0
        %v3079 = vpop.f32.mrb[0].mxu0
        %v3080 = vadd.f32 %v2947, %v3079
        %v3081 = vpop.f32.mrb[0].mxu0
        %3082 = vmatprep.mubr.bf16.mxu0 0
        %3083 = vmatmul.mubr.bf16.gmra.mrb[0].mxu0 %v3022
        %v3084 = vpop.f32.mrb[0].mxu0
        %v3085 = vadd.f32 %v2952, %v3084
        %v3086 = vpop.f32.mrb[0].mxu0
        %v3087 = vpop.f32.mrb[0].mxu0
        %v3088 = vadd.f32 %v2955, %v3087
        %v3089 = vpop.f32.mrb[0].mxu0
        %3090 = vmatprep.mubr.bf16.mxu0 0
        %3091 = vmatmul.mubr.bf16.gmra.mrb[0].mxu0 %v3025
        %v3092 = vpop.f32.mrb[0].mxu0
        %v3093 = vadd.f32 %v2960, %v3092
        %v3094 = vpop.f32.mrb[0].mxu0
        %v3095 = vpop.f32.mrb[0].mxu0
        %v3096 = vadd.f32 %v2963, %v3095
        %v3097 = vpop.f32.mrb[0].mxu0
        %3098 = vmatprep.mubr.bf16.mxu0 0
        %3099 = vmatmul.mubr.bf16.gmra.mrb[0].mxu0 %v3028
        %v3100 = vpop.f32.mrb[0].mxu0
        %v3101 = vadd.f32 %v2968, %v3100
        %v3102 = vpop.f32.mrb[0].mxu0
        %v3103 = vpop.f32.mrb[0].mxu0
        %v3104 = vadd.f32 %v2971, %v3103
        %v3105 = vpop.f32.mrb[0].mxu0
        %3106 = vmatprep.mubr.bf16.mxu0 0
        %3107 = vmatmul.mubr.bf16.gmra.mrb[0].mxu0 %v3031
        %v3108 = vpop.f32.mrb[0].mxu0
        %v3109 = vadd.f32 %v2976, %v3108
        %v3110 = vpop.f32.mrb[0].mxu0
        %v3111 = vpop.f32.mrb[0].mxu0
        %v3112 = vadd.f32 %v2979, %v3111
        %v3113 = vpop.f32.mrb[0].mxu0
        %3114 = vmatprep.mubr.bf16.mxu0 0
        %3115 = vmatmul.mubr.bf16.gmra.mrb[0].mxu0 %v3034
        %v3116 = vpop.f32.mrb[0].mxu0
        %v3117 = vadd.f32 %v2984, %v3116
        %v3118 = vpop.f32.mrb[0].mxu0
        %v3119 = vpop.f32.mrb[0].mxu0
        %v3120 = vadd.f32 %v2987, %v3119
        %v3121 = vpop.f32.mrb[0].mxu0
        %3122 = vmatprep.mubr.bf16.mxu0 0
        %3123 = vmatmul.mubr.bf16.gmra.mrb[0].mxu0 %v3037
        %v3124 = vpop.f32.mrb[0].mxu0
        %v3125 = vadd.f32 %v2992, %v3124
        %v3126 = vpop.f32.mrb[0].mxu0
        %v3127 = vpop.f32.mrb[0].mxu0
        %v3128 = vadd.f32 %v2995, %v3127
        %v3129 = vpop.f32.mrb[0].mxu0
        %3130 = vmatprep.mubr.bf16.mxu0 0
        %3131 = vmatmul.mubr.bf16.gmra.mrb[0].mxu0 %v3040
        %v3132 = vpop.f32.mrb[0].mxu0
        %v3133 = vadd.f32 %v3000, %v3132
        %v3134 = vpop.f32.mrb[0].mxu0
        %v3135 = vpop.f32.mrb[0].mxu0
        %v3136 = vadd.f32 %v3003, %v3135
        %v3137 = vpop.f32.mrb[0].mxu0
        %3138 = vdwg.mxu0
        %v3139 = vld [vmem:[%s9] sm:$0x7]
        %v3140 = vlaneseq
        %v3141 = vshrl.u32 %v3140, 7
        %v3142 = vsub.s32 0, %v3141
        %v3143 = vrot.slane %v3139, %v3142
        %v3144 = vadd.f32 %v3077, %v3143
        %v3145 = vadd.f32 %v3080, %v3143
        %v3146 = vadd.f32 %v3085, %v3143
        %v3147 = vadd.f32 %v3088, %v3143
        %v3148 = vadd.f32 %v3093, %v3143
        %v3149 = vadd.f32 %v3096, %v3143
        %v3150 = vadd.f32 %v3101, %v3143
        %v3151 = vadd.f32 %v3104, %v3143
        %v3152 = vadd.f32 %v3109, %v3143
        %v3153 = vadd.f32 %v3112, %v3143
        %v3154 = vadd.f32 %v3117, %v3143
        %v3155 = vadd.f32 %v3120, %v3143
        %v3156 = vadd.f32 %v3125, %v3143
        %v3157 = vadd.f32 %v3128, %v3143
        %v3158 = vadd.f32 %v3133, %v3143
        %v3159 = vadd.f32 %v3136, %v3143
        %v3160 = vmul.f32 %v3144, 0.01
        %v3161 = vmul.f32 %v3145, 0.01
        %v3162 = vmul.f32 %v3146, 0.01
        %v3163 = vmul.f32 %v3147, 0.01
        %v3164 = vmul.f32 %v3148, 0.01
        %v3165 = vmul.f32 %v3149, 0.01
        %v3166 = vmul.f32 %v3150, 0.01
        %v3167 = vmul.f32 %v3151, 0.01
        %v3168 = vmul.f32 %v3152, 0.01
        %v3169 = vmul.f32 %v3153, 0.01
        %v3170 = vmul.f32 %v3154, 0.01
        %v3171 = vmul.f32 %v3155, 0.01
        %v3172 = vmul.f32 %v3156, 0.01
        %v3173 = vmul.f32 %v3157, 0.01
        %v3174 = vmul.f32 %v3158, 0.01
        %v3175 = vmul.f32 %v3159, 0.01
        %v3176 = vmax.f32 %v3144, %v3160
        %v3177 = vmax.f32 %v3145, %v3161
        %v3178 = vmax.f32 %v3146, %v3162
        %v3179 = vmax.f32 %v3147, %v3163
        %v3180 = vmax.f32 %v3148, %v3164
        %v3181 = vmax.f32 %v3149, %v3165
        %v3182 = vmax.f32 %v3150, %v3166
        %v3183 = vmax.f32 %v3151, %v3167
        %v3184 = vmax.f32 %v3152, %v3168
        %v3185 = vmax.f32 %v3153, %v3169
        %v3186 = vmax.f32 %v3154, %v3170
        %v3187 = vmax.f32 %v3155, %v3171
        %v3188 = vmax.f32 %v3156, %v3172
        %v3189 = vmax.f32 %v3157, %v3173
        %v3190 = vmax.f32 %v3158, %v3174
        %v3191 = vmax.f32 %v3159, %v3175
        %v3192 = vlaneseq
        %v3193 = vshrl.u32 %v3192, 7
        %v3194 = vsub.s32 1, %v3193
        %v3195 = vrot.slane %v3139, %v3194
        %v3196 = vmul.f32 %v3176, %v3195
        %v3197 = vmul.f32 %v3177, %v3195
        %v3198 = vmul.f32 %v3178, %v3195
        %v3199 = vmul.f32 %v3179, %v3195
        %v3200 = vmul.f32 %v3180, %v3195
        %v3201 = vmul.f32 %v3181, %v3195
        %v3202 = vmul.f32 %v3182, %v3195
        %v3203 = vmul.f32 %v3183, %v3195
        %v3204 = vmul.f32 %v3184, %v3195
        %v3205 = vmul.f32 %v3185, %v3195
        %v3206 = vmul.f32 %v3186, %v3195
        %v3207 = vmul.f32 %v3187, %v3195
        %v3208 = vmul.f32 %v3188, %v3195
        %v3209 = vmul.f32 %v3189, %v3195
        %v3210 = vmul.f32 %v3190, %v3195
        %v3211 = vmul.f32 %v3191, %v3195
        %v3212 = vlaneseq
        %v3213 = vshrl.u32 %v3212, 7
        %v3214 = vsub.s32 2, %v3213
        %v3215 = vrot.slane %v3139, %v3214
        %v3216 = vadd.f32 %v3196, %v3215
        %v3217 = vadd.f32 %v3197, %v3215
        %v3218 = vadd.f32 %v3198, %v3215
        %v3219 = vadd.f32 %v3199, %v3215
        %v3220 = vadd.f32 %v3200, %v3215
        %v3221 = vadd.f32 %v3201, %v3215
        %v3222 = vadd.f32 %v3202, %v3215
        %v3223 = vadd.f32 %v3203, %v3215
        %v3224 = vadd.f32 %v3204, %v3215
        %v3225 = vadd.f32 %v3205, %v3215
        %v3226 = vadd.f32 %v3206, %v3215
        %v3227 = vadd.f32 %v3207, %v3215
        %v3228 = vadd.f32 %v3208, %v3215
        %v3229 = vadd.f32 %v3209, %v3215
        %v3230 = vadd.f32 %v3210, %v3215
        %v3231 = vadd.f32 %v3211, %v3215
        %v3232 = vpack.c.bf16 %v3217, %v3216
        %v3233 = vpack.c.bf16 %v3219, %v3218
        %v3234 = vpack.c.bf16 %v3221, %v3220
        %v3235 = vpack.c.bf16 %v3223, %v3222
        %v3236 = vpack.c.bf16 %v3225, %v3224
        %v3237 = vpack.c.bf16 %v3227, %v3226
        %v3238 = vpack.c.bf16 %v3229, %v3228
        %v3239 = vpack.c.bf16 %v3231, %v3230
        %v3248 = vunpack.c.l.b16 %v3232
        %v3249 = vunpack.c.h.b16 %v3232
        %v3250 = vunpack.c.l.b16 %v3233
        %v3251 = vunpack.c.h.b16 %v3233
        %v3252 = vunpack.c.l.b16 %v3234
        %v3253 = vunpack.c.h.b16 %v3234
        %v3254 = vunpack.c.l.b16 %v3235
        %v3255 = vunpack.c.h.b16 %v3235
        %v3256 = vunpack.c.l.b16 %v3236
        %v3257 = vunpack.c.h.b16 %v3236
        %v3258 = vunpack.c.l.b16 %v3237
        %v3259 = vunpack.c.h.b16 %v3237
        %v3260 = vunpack.c.l.b16 %v3238
        %v3261 = vunpack.c.h.b16 %v3238
        %v3262 = vunpack.c.l.b16 %v3239
        %v3263 = vunpack.c.h.b16 %v3239
        %v3264 = vpack.c.b16 %v3248, %v3248
        %v3265 = vpack.c.b16 %v3249, %v3249
        %v3266 = vpack.c.b16 %v3250, %v3250
        %v3267 = vpack.c.b16 %v3251, %v3251
        %v3268 = vpack.c.b16 %v3252, %v3252
        %v3269 = vpack.c.b16 %v3253, %v3253
        %v3270 = vpack.c.b16 %v3254, %v3254
        %v3271 = vpack.c.b16 %v3255, %v3255
        %v3272 = vpack.c.b16 %v3256, %v3256
        %v3273 = vpack.c.b16 %v3257, %v3257
        %v3274 = vpack.c.b16 %v3258, %v3258
        %v3275 = vpack.c.b16 %v3259, %v3259
        %v3276 = vpack.c.b16 %v3260, %v3260
        %v3277 = vpack.c.b16 %v3261, %v3261
        %v3278 = vpack.c.b16 %v3262, %v3262
        %v3279 = vpack.c.b16 %v3263, %v3263
        %vm3296 = vcmask 388096
        %3297 = vst.msk [vmem:[%s749] sm:$0xf] %vm3296, %v3264
        %3298 = vst.msk [vmem:[%s749 + $0x4] sm:$0xf] %vm3296, %v3265
        %3299 = vst.msk [vmem:[%s749 + $0x8] sm:$0xf] %vm3296, %v3266
        %3300 = vst.msk [vmem:[%s749 + $0xc] sm:$0xf] %vm3296, %v3267
        %3301 = vst.msk [vmem:[%s749 + $0x10] sm:$0xf] %vm3296, %v3268
        %3302 = vst.msk [vmem:[%s749 + $0x14] sm:$0xf] %vm3296, %v3269
        %3303 = vst.msk [vmem:[%s749 + $0x18] sm:$0xf] %vm3296, %v3270
        %3304 = vst.msk [vmem:[%s749 + $0x1c] sm:$0xf] %vm3296, %v3271
        %3305 = vst.msk [vmem:[%s749 + $0x20] sm:$0xf] %vm3296, %v3272
        %3306 = vst.msk [vmem:[%s749 + $0x24] sm:$0xf] %vm3296, %v3273
        %3307 = vst.msk [vmem:[%s749 + $0x28] sm:$0xf] %vm3296, %v3274
        %3308 = vst.msk [vmem:[%s749 + $0x2c] sm:$0xf] %vm3296, %v3275
        %3309 = vst.msk [vmem:[%s749 + $0x30] sm:$0xf] %vm3296, %v3276
        %3310 = vst.msk [vmem:[%s749 + $0x34] sm:$0xf] %vm3296, %v3277
        %3311 = vst.msk [vmem:[%s749 + $0x38] sm:$0xf] %vm3296, %v3278
        %3312 = vst.msk [vmem:[%s749 + $0x3c] sm:$0xf] %vm3296, %v3279
        %s3313 = sand.u32 %s373, 1
        %s3314 = scalar_lea.sflag [#allocation4], %s3313
        %s3315 = sand.u32 %s373, 1
        %s3316 = smul.addr %s3315, 64
        %s3317 = scalar_lea.vmem [#allocation11], %s3316
        %s3318 = sand.u32 %s401, 1
        %s3319 = scalar_lea.sflag [#allocation13], %s3318
        %s3320 = sand.u32 %s401, 1
        %s3321 = smul.addr %s3320, 64
        %s3322 = scalar_lea.vmem [#allocation12], %s3321
        // Predicated region
        $region85: #{tpu_custom_call.1} parent=63 // pred_check
          %p3323 = pneg %p383
        $region86: #{tpu_custom_call.1} parent=63 // pred_check_branch
          %3325 = sbr.rel (%p3323) target = $region88
        $region87: #{tpu_custom_call.1} parent=63 // pred_region
          %s3326 = smul.u32 8, %s44
          %s3328 = ssub.s32 1024, 1024
          %3329 = vsyncadd %s3314, %s3328
          %s3330 = smul.addr %s3326, 2
          %s3331 = smul.addr %s43, 32
          %s3332 = sadd.s32 %s3330, %s3331
          %s3333 = smul.addr %s3332, 64
          %s3334 = scalar_lea.hbm %s11, %s3333
          %s3335 = sshll.u32 %s3317, 4
          %s3336 = int_to_ptr.vmem [resolvable:$true] %s3335
          %3341 = dma.vmem_to_hbm [thread:$0]  %s3336, 1024, %s3334, %s3314, 64, 64, 4
        $region88: #{tpu_custom_call.1} parent=63 // pred_fallthru
          _
        // Predicated region
        $region89: #{tpu_custom_call.1} parent=63 // pred_check
          %p3342 = pneg %p411
        $region90: #{tpu_custom_call.1} parent=63 // pred_check_branch
          %3344 = sbr.rel (%p3342) target = $region92
        $region91: #{tpu_custom_call.1} parent=63 // pred_region
          %s3345 = smul.u32 8, %s44
          %s3347 = ssub.s32 1024, 1024
          %3348 = vsyncadd %s3319, %s3347
          %s3349 = smul.addr %s3345, 2
          %s3350 = smul.addr %s43, 32
          %s3351 = sadd.s32 %s3349, %s3350
          %s3352 = smul.addr %s3351, 64
          %s3353 = scalar_lea.hbm %s12, %s3352
          %s3354 = sshll.u32 %s3322, 4
          %s3355 = int_to_ptr.vmem [resolvable:$true] %s3354
          %3360 = dma.vmem_to_hbm [thread:$0]  %s3355, 1024, %s3353, %s3319, 64, 64, 4
        $region92: #{tpu_custom_call.1} parent=63 // pred_fallthru
          _
      $region64: #{tpu_custom_call.1} parent=5 // pred_fallthru
        _
      %p3361 = scmp.le.s32.totalorder 2, %s34
      // Predicated region
      $region93: #{tpu_custom_call.1} parent=5 // pred_check
        %p3362 = pneg %p3361
      $region94: #{tpu_custom_call.1} parent=5 // pred_check_branch
        %3364 = sbr.rel (%p3362) target = $region96
      $region95: #{tpu_custom_call.1} parent=5 // pred_region
        %s3365 = ssub.s32 %s34, 2
        // Predicated region
        $region97: #{tpu_custom_call.1} parent=95 // pred_check
          %p3366 = pneg %p389
        $region98: #{tpu_custom_call.1} parent=95 // pred_check_branch
          %3368 = sbr.rel (%p3366) target = $region100
        $region99: #{tpu_custom_call.1} parent=95 // pred_region
          %s3369 = sand.u32 %s374, 1
          %s3370 = scalar_lea.sflag [#allocation4], %s3369
          %s3371 = sand.u32 %s374, 1
          %s3372 = smul.addr %s3371, 64
          %s3373 = scalar_lea.vmem [#allocation11], %s3372
          %3374 = dma.done %s3370, 1024
        $region100: #{tpu_custom_call.1} parent=95 // pred_fallthru
          _
        // Predicated region
        $region101: #{tpu_custom_call.1} parent=95 // pred_check
          %p3375 = pneg %p417
        $region102: #{tpu_custom_call.1} parent=95 // pred_check_branch
          %3377 = sbr.rel (%p3375) target = $region104
        $region103: #{tpu_custom_call.1} parent=95 // pred_region
          %s3378 = sand.u32 %s402, 1
          %s3379 = scalar_lea.sflag [#allocation13], %s3378
          %s3380 = sand.u32 %s402, 1
          %s3381 = smul.addr %s3380, 64
          %s3382 = scalar_lea.vmem [#allocation12], %s3381
          %3383 = dma.done %s3379, 1024
        $region104: #{tpu_custom_call.1} parent=95 // pred_fallthru
          _
      $region96: #{tpu_custom_call.1} parent=5 // pred_fallthru
        _
    $region6: #{tpu_custom_call.1} parent=1 // loop_footer
      %s38 = sadd.s32 1, %s34
    $region7: #{tpu_custom_call.1} parent=1 // loop_footer_branch
      %33 = sbr.rel target = $region3
    $region8: #{tpu_custom_call.1} parent=1 // loop_exit
      _
    %3384 = vsyncpa [#allocation3], 1
    %s3385 = scalar_lea.sflag [#allocation3], 1
    %3386 = vsyncpa %s3385, 1
    %3387 = vsyncpa [#allocation6], 1
    %s3388 = scalar_lea.sflag [#allocation6], 1
    %3389 = vsyncpa %s3388, 1
    %3390 = vsyncpa [#allocation9], 1
    %s3391 = scalar_lea.sflag [#allocation9], 1
    %3392 = vsyncpa %s3391, 1
    %3393 = vsyncpa [#allocation4], 1
    %s3394 = scalar_lea.sflag [#allocation4], 1
    %3395 = vsyncpa %s3394, 1
    %3396 = vsyncpa [#allocation13], 1
    %s3397 = scalar_lea.sflag [#allocation13], 1
    %3398 = vsyncpa %s3397, 1

</llo_original>
